<compile_context>
chip_gen: v7x
topology: tpu7x:2x2x1
jax: 0.10.0
libtpu: 0.0.40
codegen_flags: <defaults>
</compile_context>

<pallas_src>
import functools
import math

import jax
import jax.numpy as jnp
from jax.experimental import pallas as pl

# ----------------------------- model config (small, synthetic) -----------------
BATCH = 2
SEQ = 8
HIDDEN = 32
N_HEADS = 2
HEAD_DIM = HIDDEN // N_HEADS
INTERMEDIATE = 64
N_LAYERS = 2
VOCAB = 128
MAX_POS = 16
TYPE_VOCAB = 2
LN_EPS = 1e-12
N_CLASSES = 2


def _round8(n):
    return ((n + 7) // 8) * 8


# Row-slab layout constants (shared by the packer and the kernel).
QKV_LAYER_ROWS = _round8(HIDDEN + 1)                      # wqkv (H rows) + bqkv (1 row)
I_LAYER_ROWS = _round8(HIDDEN + 1)                        # w1   (H rows) + b1   (1 row)
H_HEADER_ROWS = 8                                         # emb_ln_g, emb_ln_b
H_LAYER_ROWS = _round8(HIDDEN + INTERMEDIATE + 6)         # wo, w2, bo, ln1_g, ln1_b, b2, ln2_g, ln2_b


# ----------------------------- fused Pallas kernel ------------------------------
def fused_biencoder_kernel(x_ref, bias_ref, wq_ref, wh_ref, wi_ref, cls_ref, out_ref, *,
                           n_layers, batch, seq, n_heads, head_dim, intermediate,
                           n_classes, eps):
    """Whole AutoBiEncoderSum forward (minus embedding gathers) in one invocation.

    x_ref:    [2*B*S, H]   embedded tokens for (query, context), pre-LayerNorm
    bias_ref: [2*B, S]     additive attention mask bias ((1-mask)*-1e4)
    wq_ref:   [2*L*40, 3H] fused QKV weight + bias rows, per encoder / layer
    wh_ref:   [2*(8+L*104), H]  emb-LN + wo + w2 + per-layer vectors
    wi_ref:   [2*L*40, I]  FFN-up weight + bias rows
    cls_ref:  [8, H]       rows 0..1 = classifier W^T, row 2 = classifier bias (lane-padded)
    out_ref:  [B, 2]       logits
    """
    hidden = n_heads * head_dim
    scale = 1.0 / math.sqrt(head_dim)
    n_tok = batch * seq

    q_enc_rows = n_layers * QKV_LAYER_ROWS
    i_enc_rows = n_layers * I_LAYER_ROWS
    h_enc_rows = H_HEADER_ROWS + n_layers * H_LAYER_ROWS

    def layernorm(v, g, b):
        mu = jnp.mean(v, axis=-1, keepdims=True)
        vc = v - mu
        var = jnp.mean(vc * vc, axis=-1, keepdims=True)
        return vc * jax.lax.rsqrt(var + eps) * g + b

    cls_sum = jnp.zeros((batch, hidden), jnp.float32)

    for e in range(2):                                   # query encoder, context encoder
        x_off = e * n_tok
        b_off = e * batch
        q_off = e * q_enc_rows
        i_off = e * i_enc_rows
        h_off = e * h_enc_rows

        bias = bias_ref[b_off:b_off + batch, :]                           # [B, S]
        x = layernorm(x_ref[x_off:x_off + n_tok, :],
                      wh_ref[h_off:h_off + 1, :],
                      wh_ref[h_off + 1:h_off + 2, :])                     # [B*S, H]

        for l in range(n_layers):
            qb = q_off + l * QKV_LAYER_ROWS
            ib = i_off + l * I_LAYER_ROWS
            hb = h_off + H_HEADER_ROWS + l * H_LAYER_ROWS
            vb = hb + hidden + intermediate                               # vector rows

            # ---- self-attention: one fused QKV matmul, per-(b,h) vreg-resident ----
            qkv = jnp.dot(x, wq_ref[qb:qb + hidden, :],
                          preferred_element_type=jnp.float32) \
                  + wq_ref[qb + hidden:qb + hidden + 1, :]                # [B*S, 3H]

            ctx_rows = []
            for b in range(batch):
                r0 = b * seq
                bias_row = bias[b:b + 1, :]                               # [1, S]
                head_outs = []
                for h in range(n_heads):
                    c0 = h * head_dim
                    qh = qkv[r0:r0 + seq, c0:c0 + head_dim]
                    kh = qkv[r0:r0 + seq, hidden + c0:hidden + c0 + head_dim]
                    vh = qkv[r0:r0 + seq, 2 * hidden + c0:2 * hidden + c0 + head_dim]
                    s = jax.lax.dot_general(
                        qh, kh, (((1,), (1,)), ((), ())),
                        preferred_element_type=jnp.float32) * scale       # [S, S]
                    s = s + bias_row
                    p = jnp.exp(s - jnp.max(s, axis=-1, keepdims=True))
                    p = p / jnp.sum(p, axis=-1, keepdims=True)            # exact softmax
                    head_outs.append(jnp.dot(p, vh,
                                             preferred_element_type=jnp.float32))
                ctx_rows.append(jnp.concatenate(head_outs, axis=1))       # [S, H]
            ctx = jnp.concatenate(ctx_rows, axis=0)                       # [B*S, H]

            attn_out = jnp.dot(ctx, wh_ref[hb:hb + hidden, :],
                               preferred_element_type=jnp.float32) \
                       + wh_ref[vb + 0:vb + 1, :]
            x = layernorm(attn_out + x,
                          wh_ref[vb + 1:vb + 2, :], wh_ref[vb + 2:vb + 3, :])

            # ---- feed-forward --------------------------------------------------
            ffn = jnp.dot(x, wi_ref[ib:ib + hidden, :],
                          preferred_element_type=jnp.float32) \
                  + wi_ref[ib + hidden:ib + hidden + 1, :]
            # TODO(synk): HF BERT uses erf-GELU; tanh approximation kept for robust EUP lowering.
            ffn = jax.nn.gelu(ffn, approximate=True)
            ffn = jnp.dot(ffn, wh_ref[hb + hidden:hb + hidden + intermediate, :],
                          preferred_element_type=jnp.float32) \
                  + wh_ref[vb + 3:vb + 4, :]
            x = layernorm(ffn + x,
                          wh_ref[vb + 4:vb + 5, :], wh_ref[vb + 5:vb + 6, :])

        # CLS pooling: last_hidden_state[:, 0, :] — rows b*S of the [B*S, H] slab.
        cls = jnp.concatenate([x[b * seq:b * seq + 1, :] for b in range(batch)], axis=0)
        cls_sum = cls_sum + cls

    # Classifier fused in-kernel: (query_CLS + context_CLS) @ W + b.
    w_cls_t = cls_ref[0:n_classes, :]                                     # [2, H]
    b_cls_row = cls_ref[n_classes:n_classes + 1, :]                       # [1, H] (first 2 valid)
    logits = jax.lax.dot_general(cls_sum, w_cls_t, (((1,), (1,)), ((), ())),
                                 preferred_element_type=jnp.float32)
    out_ref[...] = logits + b_cls_row[:, 0:n_classes]


# ----------------------------- kernel wrapper -----------------------------------
def fused_biencoder_logits(params, x_all, bias_all):
    B = bias_all.shape[0] // 2
    S = bias_all.shape[1]
    return pl.pallas_call(
        functools.partial(fused_biencoder_kernel,
                          n_layers=N_LAYERS, batch=B, seq=S, n_heads=N_HEADS,
                          head_dim=HEAD_DIM, intermediate=INTERMEDIATE,
                          n_classes=N_CLASSES, eps=LN_EPS),
        out_shape=jax.ShapeDtypeStruct((B, N_CLASSES), jnp.float32),
    )(x_all, bias_all, params["wq_slab"], params["wh_slab"], params["wi_slab"],
      params["cls_slab"])


# ----------------------------- forward pass --------------------------------------
def _embed(emb_params, ids, segments):
    """Embedding-table gather (data-dependent) — plain JAX glue."""
    B, S = ids.shape
    e = (jnp.take(emb_params["word_emb"], ids, axis=0)
         + emb_params["pos_emb"][None, :S, :]
         + jnp.take(emb_params["type_emb"], segments, axis=0))
    return e.reshape(B * S, HIDDEN).astype(jnp.float32)


def auto_biencoder_sum_forward(params, query_ids, query_segments, query_attention_mask,
                               context_ids, context_segments, context_attention_mask):
    q_emb = _embed(params["query_emb"], query_ids, query_segments)        # [B*S, H]
    c_emb = _embed(params["context_emb"], context_ids, context_segments)  # [B*S, H]
    x_all = jnp.concatenate([q_emb, c_emb], axis=0)                       # [2*B*S, H]

    q_bias = (1.0 - query_attention_mask.astype(jnp.float32)) * (-10000.0)
    c_bias = (1.0 - context_attention_mask.astype(jnp.float32)) * (-10000.0)
    bias_all = jnp.concatenate([q_bias, c_bias], axis=0)                  # [2*B, S]

    return fused_biencoder_logits(params, x_all, bias_all)                # [B, 2]


# ----------------------------- deterministic param init -------------------------
def _normal(key, shape, std=0.02):
    return (std * jax.random.normal(key, shape)).astype(jnp.float32)


def init_encoder_params(key):
    keys = jax.random.split(key, 3 + N_LAYERS)
    p = {
        "word_emb": _normal(keys[0], (VOCAB, HIDDEN)),
        "pos_emb": _normal(keys[1], (MAX_POS, HIDDEN)),
        "type_emb": _normal(keys[2], (TYPE_VOCAB, HIDDEN)),
        "emb_ln_g": jnp.ones((1, HIDDEN), jnp.float32),
        "emb_ln_b": jnp.zeros((1, HIDDEN), jnp.float32),
    }
    wqkv, wo, w1, w2 = [], [], [], []
    for l in range(N_LAYERS):
        lk = jax.random.split(keys[3 + l], 6)
        wqkv.append(jnp.concatenate([_normal(lk[0], (HIDDEN, HIDDEN)),
                                     _normal(lk[1], (HIDDEN, HIDDEN)),
                                     _normal(lk[2], (HIDDEN, HIDDEN))], axis=1))
        wo.append(_normal(lk[3], (HIDDEN, HIDDEN)))
        w1.append(_normal(lk[4], (HIDDEN, INTERMEDIATE)))
        w2.append(_normal(lk[5], (INTERMEDIATE, HIDDEN)))
    p.update({
        "wqkv": jnp.stack(wqkv),
        "bqkv": jnp.zeros((N_LAYERS, 1, 3 * HIDDEN), jnp.float32),
        "wo": jnp.stack(wo),
        "bo": jnp.zeros((N_LAYERS, 1, HIDDEN), jnp.float32),
        "ln1_g": jnp.ones((N_LAYERS, 1, HIDDEN), jnp.float32),
        "ln1_b": jnp.zeros((N_LAYERS, 1, HIDDEN), jnp.float32),
        "w1": jnp.stack(w1),
        "b1": jnp.zeros((N_LAYERS, 1, INTERMEDIATE), jnp.float32),
        "w2": jnp.stack(w2),
        "b2": jnp.zeros((N_LAYERS, 1, HIDDEN), jnp.float32),
        "ln2_g": jnp.ones((N_LAYERS, 1, HIDDEN), jnp.float32),
        "ln2_b": jnp.zeros((N_LAYERS, 1, HIDDEN), jnp.float32),
    })
    return p


def _pad_rows(mat, rows):
    return jnp.pad(mat, ((0, rows - mat.shape[0]), (0, 0)))


def pack_encoder_slabs(p):
    """Pack one encoder's transformer weights into three flat row-slabs grouped by
    column width (3H / I / H), with 8-row-aligned blocks, so the kernel gets a
    handful of large DMAs and only full-width row slices."""
    q_blocks, i_blocks, h_blocks = [], [], []
    h_blocks.append(_pad_rows(jnp.concatenate([p["emb_ln_g"], p["emb_ln_b"]], axis=0),
                              H_HEADER_ROWS))
    for l in range(N_LAYERS):
        q_blocks.append(_pad_rows(jnp.concatenate([p["wqkv"][l], p["bqkv"][l]], axis=0),
                                  QKV_LAYER_ROWS))
        i_blocks.append(_pad_rows(jnp.concatenate([p["w1"][l], p["b1"][l]], axis=0),
                                  I_LAYER_ROWS))
        h_blocks.append(_pad_rows(jnp.concatenate(
            [p["wo"][l], p["w2"][l], p["bo"][l], p["ln1_g"][l], p["ln1_b"][l],
             p["b2"][l], p["ln2_g"][l], p["ln2_b"][l]], axis=0),
            H_LAYER_ROWS))
    return (jnp.concatenate(q_blocks, axis=0),
            jnp.concatenate(i_blocks, axis=0),
            jnp.concatenate(h_blocks, axis=0))


def init_params(key):
    k_q, k_c, k_cls = jax.random.split(key, 3)
    qp = init_encoder_params(k_q)
    cp = init_encoder_params(k_c)
    q_slabs = pack_encoder_slabs(qp)
    c_slabs = pack_encoder_slabs(cp)

    cls_w = _normal(k_cls, (HIDDEN, N_CLASSES))
    cls_b = jnp.zeros((1, N_CLASSES), jnp.float32)
    cls_slab = jnp.zeros((8, HIDDEN), jnp.float32)
    cls_slab = cls_slab.at[0:N_CLASSES, :].set(cls_w.T)
    cls_slab = cls_slab.at[N_CLASSES, 0:N_CLASSES].set(cls_b[0])

    return {
        "query_emb": {k: qp[k] for k in ("word_emb", "pos_emb", "type_emb")},
        "context_emb": {k: cp[k] for k in ("word_emb", "pos_emb", "type_emb")},
        # query/context encoder weights stacked along the row axis of each slab.
        "wq_slab": jnp.concatenate([q_slabs[0], c_slabs[0]], axis=0),  # [2*L*40, 3H]
        "wi_slab": jnp.concatenate([q_slabs[1], c_slabs[1]], axis=0),  # [2*L*40, I]
        "wh_slab": jnp.concatenate([q_slabs[2], c_slabs[2]], axis=0),  # [2*(8+L*104), H]
        "cls_slab": cls_slab,                                          # [8, H]
    }


# ----------------------------- main ---------------------------------------------
if __name__ == "__main__":
    root = jax.random.PRNGKey(0)
    k_params, k_qids, k_cids = jax.random.split(root, 3)

    params = init_params(k_params)

    query_ids = jax.random.randint(k_qids, (BATCH, SEQ), 0, VOCAB, dtype=jnp.int32)
    context_ids = jax.random.randint(k_cids, (BATCH, SEQ), 0, VOCAB, dtype=jnp.int32)
    query_segments = jnp.zeros((BATCH, SEQ), jnp.int32)
    context_segments = jnp.zeros((BATCH, SEQ), jnp.int32)
    query_attention_mask = jnp.ones((BATCH, SEQ), jnp.int32)
    context_attention_mask = jnp.ones((BATCH, SEQ), jnp.int32)

    fwd = jax.jit(auto_biencoder_sum_forward)
    logits = fwd(params, query_ids, query_segments, query_attention_mask,
                 context_ids, context_segments, context_attention_mask)
    jax.block_until_ready(logits)

    assert logits.shape == (BATCH, N_CLASSES) and logits.dtype == jnp.float32
    print("KERNEL_OK")
</pallas_src>

<mosaic_0001>
module attributes {stable_mosaic.version = 11 : i64} {
  func.func @fused_biencoder_kernel(%arg0: memref<32x32xf32, #tpu.memory_space<vmem>>, %arg1: memref<4x8xf32, #tpu.memory_space<vmem>>, %arg2: memref<160x96xf32, #tpu.memory_space<vmem>>, %arg3: memref<432x32xf32, #tpu.memory_space<vmem>>, %arg4: memref<160x64xf32, #tpu.memory_space<vmem>>, %arg5: memref<8x32xf32, #tpu.memory_space<vmem>>, %arg6: memref<2x2xf32, #tpu.memory_space<vmem>>) attributes {dimension_semantics = [], scalar_prefetch = 0 : i64, scratch_operands = 0 : i64, tpu.core_type = #tpu.core_type<tc>} {
    %cst = arith.constant 0.000000e+00 : f32
    %0 = vector.broadcast %cst : f32 to vector<2x32xf32>
    %c0 = arith.constant 0 : index
    %c0_0 = arith.constant 0 : index
    %1 = vector.load %arg1[%c0, %c0_0] : memref<4x8xf32, #tpu.memory_space<vmem>>, vector<2x8xf32>
    %c0_1 = arith.constant 0 : index
    %c0_2 = arith.constant 0 : index
    %2 = vector.load %arg0[%c0_1, %c0_2] : memref<32x32xf32, #tpu.memory_space<vmem>>, vector<16x32xf32>
    %c0_3 = arith.constant 0 : index
    %c0_4 = arith.constant 0 : index
    %3 = vector.load %arg3[%c0_3, %c0_4] : memref<432x32xf32, #tpu.memory_space<vmem>>, vector<1x32xf32>
    %c1 = arith.constant 1 : index
    %c0_5 = arith.constant 0 : index
    %4 = vector.load %arg3[%c1, %c0_5] : memref<432x32xf32, #tpu.memory_space<vmem>>, vector<1x32xf32>
    %cst_6 = arith.constant dense<0.000000e+00> : vector<16xf32>
    %5 = vector.multi_reduction <add>, %2, %cst_6 [1] : vector<16x32xf32> to vector<16xf32>
    %6 = vector.shape_cast %5 : vector<16xf32> to vector<16x1xf32>
    %cst_7 = arith.constant 3.200000e+01 : f32
    %7 = vector.broadcast %cst_7 : f32 to vector<16x1xf32>
    %8 = arith.divf %6, %7 : vector<16x1xf32>
    %9 = vector.broadcast %8 : vector<16x1xf32> to vector<16x32xf32>
    %10 = arith.subf %2, %9 : vector<16x32xf32>
    %11 = arith.mulf %10, %10 : vector<16x32xf32>
    %cst_8 = arith.constant dense<0.000000e+00> : vector<16xf32>
    %12 = vector.multi_reduction <add>, %11, %cst_8 [1] : vector<16x32xf32> to vector<16xf32>
    %13 = vector.shape_cast %12 : vector<16xf32> to vector<16x1xf32>
    %cst_9 = arith.constant 3.200000e+01 : f32
    %14 = vector.broadcast %cst_9 : f32 to vector<16x1xf32>
    %15 = arith.divf %13, %14 : vector<16x1xf32>
    %cst_10 = arith.constant 9.99999996E-13 : f32
    %16 = vector.broadcast %cst_10 : f32 to vector<16x1xf32>
    %17 = arith.addf %15, %16 : vector<16x1xf32>
    %18 = math.rsqrt %17 : vector<16x1xf32>
    %19 = vector.broadcast %18 : vector<16x1xf32> to vector<16x32xf32>
    %20 = arith.mulf %10, %19 : vector<16x32xf32>
    %21 = vector.broadcast %3 : vector<1x32xf32> to vector<16x32xf32>
    %22 = arith.mulf %20, %21 : vector<16x32xf32>
    %23 = vector.broadcast %4 : vector<1x32xf32> to vector<16x32xf32>
    %24 = arith.addf %22, %23 : vector<16x32xf32>
    %c0_11 = arith.constant 0 : index
    %c0_12 = arith.constant 0 : index
    %25 = vector.load %arg2[%c0_11, %c0_12] : memref<160x96xf32, #tpu.memory_space<vmem>>, vector<32x96xf32>
    %cst_13 = arith.constant dense<0.000000e+00> : vector<16x96xf32>
    %26 = tpu.matmul %24, %25, %cst_13 {dimension_numbers = #tpu.dot_dimension_numbers<[1], [0], [0], [1], [0, 0, 1, 1], [], []>} : vector<16x32xf32>, vector<32x96xf32>, vector<16x96xf32> -> vector<16x96xf32>
    %c32 = arith.constant 32 : index
    %c0_14 = arith.constant 0 : index
    %27 = vector.load %arg2[%c32, %c0_14] : memref<160x96xf32, #tpu.memory_space<vmem>>, vector<1x96xf32>
    %28 = vector.broadcast %27 : vector<1x96xf32> to vector<16x96xf32>
    %29 = arith.addf %26, %28 : vector<16x96xf32>
    %30 = vector.extract_strided_slice %1 {offsets = [0, 0], sizes = [1, 8], strides = [1, 1]} : vector<2x8xf32> to vector<1x8xf32>
    %31 = vector.extract_strided_slice %29 {offsets = [0, 0], sizes = [8, 16], strides = [1, 1]} : vector<16x96xf32> to vector<8x16xf32>
    %32 = vector.extract_strided_slice %29 {offsets = [0, 32], sizes = [8, 16], strides = [1, 1]} : vector<16x96xf32> to vector<8x16xf32>
    %33 = vector.extract_strided_slice %29 {offsets = [0, 64], sizes = [8, 16], strides = [1, 1]} : vector<16x96xf32> to vector<8x16xf32>
    %cst_15 = arith.constant dense<0.000000e+00> : vector<8x8xf32>
    %34 = tpu.matmul %31, %32, %cst_15 {dimension_numbers = #tpu.dot_dimension_numbers<[1], [1], [0], [0], [0, 0, 1, 0], [], []>} : vector<8x16xf32>, vector<8x16xf32>, vector<8x8xf32> -> vector<8x8xf32>
    %cst_16 = arith.constant 2.500000e-01 : f32
    %35 = vector.broadcast %cst_16 : f32 to vector<8x8xf32>
    %36 = arith.mulf %34, %35 : vector<8x8xf32>
    %37 = vector.broadcast %30 : vector<1x8xf32> to vector<8x8xf32>
    %38 = arith.addf %36, %37 : vector<8x8xf32>
    %cst_17 = arith.constant dense<0xFF800000> : vector<8xf32>
    %39 = vector.multi_reduction <maximumf>, %38, %cst_17 [1] : vector<8x8xf32> to vector<8xf32>
    %40 = vector.shape_cast %39 : vector<8xf32> to vector<8x1xf32>
    %41 = vector.broadcast %40 : vector<8x1xf32> to vector<8x8xf32>
    %42 = arith.subf %38, %41 : vector<8x8xf32>
    %43 = math.exp %42 : vector<8x8xf32>
    %cst_18 = arith.constant dense<0.000000e+00> : vector<8xf32>
    %44 = vector.multi_reduction <add>, %43, %cst_18 [1] : vector<8x8xf32> to vector<8xf32>
    %45 = vector.shape_cast %44 : vector<8xf32> to vector<8x1xf32>
    %46 = vector.broadcast %45 : vector<8x1xf32> to vector<8x8xf32>
    %47 = arith.divf %43, %46 : vector<8x8xf32>
    %cst_19 = arith.constant dense<0.000000e+00> : vector<8x16xf32>
    %48 = tpu.matmul %47, %33, %cst_19 {dimension_numbers = #tpu.dot_dimension_numbers<[1], [0], [0], [1], [0, 0, 1, 1], [], []>} : vector<8x8xf32>, vector<8x16xf32>, vector<8x16xf32> -> vector<8x16xf32>
    %49 = vector.extract_strided_slice %29 {offsets = [0, 16], sizes = [8, 16], strides = [1, 1]} : vector<16x96xf32> to vector<8x16xf32>
    %50 = vector.extract_strided_slice %29 {offsets = [0, 48], sizes = [8, 16], strides = [1, 1]} : vector<16x96xf32> to vector<8x16xf32>
    %51 = vector.extract_strided_slice %29 {offsets = [0, 80], sizes = [8, 16], strides = [1, 1]} : vector<16x96xf32> to vector<8x16xf32>
    %cst_20 = arith.constant dense<0.000000e+00> : vector<8x8xf32>
    %52 = tpu.matmul %49, %50, %cst_20 {dimension_numbers = #tpu.dot_dimension_numbers<[1], [1], [0], [0], [0, 0, 1, 0], [], []>} : vector<8x16xf32>, vector<8x16xf32>, vector<8x8xf32> -> vector<8x8xf32>
    %cst_21 = arith.constant 2.500000e-01 : f32
    %53 = vector.broadcast %cst_21 : f32 to vector<8x8xf32>
    %54 = arith.mulf %52, %53 : vector<8x8xf32>
    %55 = vector.broadcast %30 : vector<1x8xf32> to vector<8x8xf32>
    %56 = arith.addf %54, %55 : vector<8x8xf32>
    %cst_22 = arith.constant dense<0xFF800000> : vector<8xf32>
    %57 = vector.multi_reduction <maximumf>, %56, %cst_22 [1] : vector<8x8xf32> to vector<8xf32>
    %58 = vector.shape_cast %57 : vector<8xf32> to vector<8x1xf32>
    %59 = vector.broadcast %58 : vector<8x1xf32> to vector<8x8xf32>
    %60 = arith.subf %56, %59 : vector<8x8xf32>
    %61 = math.exp %60 : vector<8x8xf32>
    %cst_23 = arith.constant dense<0.000000e+00> : vector<8xf32>
    %62 = vector.multi_reduction <add>, %61, %cst_23 [1] : vector<8x8xf32> to vector<8xf32>
    %63 = vector.shape_cast %62 : vector<8xf32> to vector<8x1xf32>
    %64 = vector.broadcast %63 : vector<8x1xf32> to vector<8x8xf32>
    %65 = arith.divf %61, %64 : vector<8x8xf32>
    %cst_24 = arith.constant dense<0.000000e+00> : vector<8x16xf32>
    %66 = tpu.matmul %65, %51, %cst_24 {dimension_numbers = #tpu.dot_dimension_numbers<[1], [0], [0], [1], [0, 0, 1, 1], [], []>} : vector<8x8xf32>, vector<8x16xf32>, vector<8x16xf32> -> vector<8x16xf32>
    %67 = tpu.concatenate %48, %66 in 1 : vector<8x16xf32>, vector<8x16xf32> -> vector<8x32xf32>
    %68 = vector.extract_strided_slice %1 {offsets = [1, 0], sizes = [1, 8], strides = [1, 1]} : vector<2x8xf32> to vector<1x8xf32>
    %69 = vector.extract_strided_slice %29 {offsets = [8, 0], sizes = [8, 16], strides = [1, 1]} : vector<16x96xf32> to vector<8x16xf32>
    %70 = vector.extract_strided_slice %29 {offsets = [8, 32], sizes = [8, 16], strides = [1, 1]} : vector<16x96xf32> to vector<8x16xf32>
    %71 = vector.extract_strided_slice %29 {offsets = [8, 64], sizes = [8, 16], strides = [1, 1]} : vector<16x96xf32> to vector<8x16xf32>
    %cst_25 = arith.constant dense<0.000000e+00> : vector<8x8xf32>
    %72 = tpu.matmul %69, %70, %cst_25 {dimension_numbers = #tpu.dot_dimension_numbers<[1], [1], [0], [0], [0, 0, 1, 0], [], []>} : vector<8x16xf32>, vector<8x16xf32>, vector<8x8xf32> -> vector<8x8xf32>
    %cst_26 = arith.constant 2.500000e-01 : f32
    %73 = vector.broadcast %cst_26 : f32 to vector<8x8xf32>
    %74 = arith.mulf %72, %73 : vector<8x8xf32>
    %75 = vector.broadcast %68 : vector<1x8xf32> to vector<8x8xf32>
    %76 = arith.addf %74, %75 : vector<8x8xf32>
    %cst_27 = arith.constant dense<0xFF800000> : vector<8xf32>
    %77 = vector.multi_reduction <maximumf>, %76, %cst_27 [1] : vector<8x8xf32> to vector<8xf32>
    %78 = vector.shape_cast %77 : vector<8xf32> to vector<8x1xf32>
    %79 = vector.broadcast %78 : vector<8x1xf32> to vector<8x8xf32>
    %80 = arith.subf %76, %79 : vector<8x8xf32>
    %81 = math.exp %80 : vector<8x8xf32>
    %cst_28 = arith.constant dense<0.000000e+00> : vector<8xf32>
    %82 = vector.multi_reduction <add>, %81, %cst_28 [1] : vector<8x8xf32> to vector<8xf32>
    %83 = vector.shape_cast %82 : vector<8xf32> to vector<8x1xf32>
    %84 = vector.broadcast %83 : vector<8x1xf32> to vector<8x8xf32>
    %85 = arith.divf %81, %84 : vector<8x8xf32>
    %cst_29 = arith.constant dense<0.000000e+00> : vector<8x16xf32>
    %86 = tpu.matmul %85, %71, %cst_29 {dimension_numbers = #tpu.dot_dimension_numbers<[1], [0], [0], [1], [0, 0, 1, 1], [], []>} : vector<8x8xf32>, vector<8x16xf32>, vector<8x16xf32> -> vector<8x16xf32>
    %87 = vector.extract_strided_slice %29 {offsets = [8, 16], sizes = [8, 16], strides = [1, 1]} : vector<16x96xf32> to vector<8x16xf32>
    %88 = vector.extract_strided_slice %29 {offsets = [8, 48], sizes = [8, 16], strides = [1, 1]} : vector<16x96xf32> to vector<8x16xf32>
    %89 = vector.extract_strided_slice %29 {offsets = [8, 80], sizes = [8, 16], strides = [1, 1]} : vector<16x96xf32> to vector<8x16xf32>
    %cst_30 = arith.constant dense<0.000000e+00> : vector<8x8xf32>
    %90 = tpu.matmul %87, %88, %cst_30 {dimension_numbers = #tpu.dot_dimension_numbers<[1], [1], [0], [0], [0, 0, 1, 0], [], []>} : vector<8x16xf32>, vector<8x16xf32>, vector<8x8xf32> -> vector<8x8xf32>
    %cst_31 = arith.constant 2.500000e-01 : f32
    %91 = vector.broadcast %cst_31 : f32 to vector<8x8xf32>
    %92 = arith.mulf %90, %91 : vector<8x8xf32>
    %93 = vector.broadcast %68 : vector<1x8xf32> to vector<8x8xf32>
    %94 = arith.addf %92, %93 : vector<8x8xf32>
    %cst_32 = arith.constant dense<0xFF800000> : vector<8xf32>
    %95 = vector.multi_reduction <maximumf>, %94, %cst_32 [1] : vector<8x8xf32> to vector<8xf32>
    %96 = vector.shape_cast %95 : vector<8xf32> to vector<8x1xf32>
    %97 = vector.broadcast %96 : vector<8x1xf32> to vector<8x8xf32>
    %98 = arith.subf %94, %97 : vector<8x8xf32>
    %99 = math.exp %98 : vector<8x8xf32>
    %cst_33 = arith.constant dense<0.000000e+00> : vector<8xf32>
    %100 = vector.multi_reduction <add>, %99, %cst_33 [1] : vector<8x8xf32> to vector<8xf32>
    %101 = vector.shape_cast %100 : vector<8xf32> to vector<8x1xf32>
    %102 = vector.broadcast %101 : vector<8x1xf32> to vector<8x8xf32>
    %103 = arith.divf %99, %102 : vector<8x8xf32>
    %cst_34 = arith.constant dense<0.000000e+00> : vector<8x16xf32>
    %104 = tpu.matmul %103, %89, %cst_34 {dimension_numbers = #tpu.dot_dimension_numbers<[1], [0], [0], [1], [0, 0, 1, 1], [], []>} : vector<8x8xf32>, vector<8x16xf32>, vector<8x16xf32> -> vector<8x16xf32>
    %105 = tpu.concatenate %86, %104 in 1 : vector<8x16xf32>, vector<8x16xf32> -> vector<8x32xf32>
    %106 = tpu.concatenate %67, %105 in 0 : vector<8x32xf32>, vector<8x32xf32> -> vector<16x32xf32>
    %c8 = arith.constant 8 : index
    %c0_35 = arith.constant 0 : index
    %107 = vector.load %arg3[%c8, %c0_35] : memref<432x32xf32, #tpu.memory_space<vmem>>, vector<32x32xf32>
    %cst_36 = arith.constant dense<0.000000e+00> : vector<16x32xf32>
    %108 = tpu.matmul %106, %107, %cst_36 {dimension_numbers = #tpu.dot_dimension_numbers<[1], [0], [0], [1], [0, 0, 1, 1], [], []>} : vector<16x32xf32>, vector<32x32xf32>, vector<16x32xf32> -> vector<16x32xf32>
    %c104 = arith.constant 104 : index
    %c0_37 = arith.constant 0 : index
    %109 = vector.load %arg3[%c104, %c0_37] : memref<432x32xf32, #tpu.memory_space<vmem>>, vector<1x32xf32>
    %110 = vector.broadcast %109 : vector<1x32xf32> to vector<16x32xf32>
    %111 = arith.addf %108, %110 : vector<16x32xf32>
    %112 = arith.addf %111, %24 : vector<16x32xf32>
    %c105 = arith.constant 105 : index
    %c0_38 = arith.constant 0 : index
    %113 = vector.load %arg3[%c105, %c0_38] : memref<432x32xf32, #tpu.memory_space<vmem>>, vector<1x32xf32>
    %c106 = arith.constant 106 : index
    %c0_39 = arith.constant 0 : index
    %114 = vector.load %arg3[%c106, %c0_39] : memref<432x32xf32, #tpu.memory_space<vmem>>, vector<1x32xf32>
    %cst_40 = arith.constant dense<0.000000e+00> : vector<16xf32>
    %115 = vector.multi_reduction <add>, %112, %cst_40 [1] : vector<16x32xf32> to vector<16xf32>
    %116 = vector.shape_cast %115 : vector<16xf32> to vector<16x1xf32>
    %cst_41 = arith.constant 3.200000e+01 : f32
    %117 = vector.broadcast %cst_41 : f32 to vector<16x1xf32>
    %118 = arith.divf %116, %117 : vector<16x1xf32>
    %119 = vector.broadcast %118 : vector<16x1xf32> to vector<16x32xf32>
    %120 = arith.subf %112, %119 : vector<16x32xf32>
    %121 = arith.mulf %120, %120 : vector<16x32xf32>
    %cst_42 = arith.constant dense<0.000000e+00> : vector<16xf32>
    %122 = vector.multi_reduction <add>, %121, %cst_42 [1] : vector<16x32xf32> to vector<16xf32>
    %123 = vector.shape_cast %122 : vector<16xf32> to vector<16x1xf32>
    %cst_43 = arith.constant 3.200000e+01 : f32
    %124 = vector.broadcast %cst_43 : f32 to vector<16x1xf32>
    %125 = arith.divf %123, %124 : vector<16x1xf32>
    %cst_44 = arith.constant 9.99999996E-13 : f32
    %126 = vector.broadcast %cst_44 : f32 to vector<16x1xf32>
    %127 = arith.addf %125, %126 : vector<16x1xf32>
    %128 = math.rsqrt %127 : vector<16x1xf32>
    %129 = vector.broadcast %128 : vector<16x1xf32> to vector<16x32xf32>
    %130 = arith.mulf %120, %129 : vector<16x32xf32>
    %131 = vector.broadcast %113 : vector<1x32xf32> to vector<16x32xf32>
    %132 = arith.mulf %130, %131 : vector<16x32xf32>
    %133 = vector.broadcast %114 : vector<1x32xf32> to vector<16x32xf32>
    %134 = arith.addf %132, %133 : vector<16x32xf32>
    %c0_45 = arith.constant 0 : index
    %c0_46 = arith.constant 0 : index
    %135 = vector.load %arg4[%c0_45, %c0_46] : memref<160x64xf32, #tpu.memory_space<vmem>>, vector<32x64xf32>
    %cst_47 = arith.constant dense<0.000000e+00> : vector<16x64xf32>
    %136 = tpu.matmul %134, %135, %cst_47 {dimension_numbers = #tpu.dot_dimension_numbers<[1], [0], [0], [1], [0, 0, 1, 1], [], []>} : vector<16x32xf32>, vector<32x64xf32>, vector<16x64xf32> -> vector<16x64xf32>
    %c32_48 = arith.constant 32 : index
    %c0_49 = arith.constant 0 : index
    %137 = vector.load %arg4[%c32_48, %c0_49] : memref<160x64xf32, #tpu.memory_space<vmem>>, vector<1x64xf32>
    %138 = vector.broadcast %137 : vector<1x64xf32> to vector<16x64xf32>
    %139 = arith.addf %136, %138 : vector<16x64xf32>
    %140 = arith.mulf %139, %139 : vector<16x64xf32>
    %141 = arith.mulf %139, %140 : vector<16x64xf32>
    %cst_50 = arith.constant 4.471500e-02 : f32
    %142 = vector.broadcast %cst_50 : f32 to vector<16x64xf32>
    %143 = arith.mulf %142, %141 : vector<16x64xf32>
    %144 = arith.addf %139, %143 : vector<16x64xf32>
    %cst_51 = arith.constant 0.797884583 : f32
    %145 = vector.broadcast %cst_51 : f32 to vector<16x64xf32>
    %146 = arith.mulf %145, %144 : vector<16x64xf32>
    %147 = math.tanh %146 : vector<16x64xf32>
    %cst_52 = arith.constant 1.000000e+00 : f32
    %148 = vector.broadcast %cst_52 : f32 to vector<16x64xf32>
    %149 = arith.addf %148, %147 : vector<16x64xf32>
    %cst_53 = arith.constant 5.000000e-01 : f32
    %150 = vector.broadcast %cst_53 : f32 to vector<16x64xf32>
    %151 = arith.mulf %150, %149 : vector<16x64xf32>
    %152 = arith.mulf %139, %151 : vector<16x64xf32>
    %c40 = arith.constant 40 : index
    %c0_54 = arith.constant 0 : index
    %153 = vector.load %arg3[%c40, %c0_54] : memref<432x32xf32, #tpu.memory_space<vmem>>, vector<64x32xf32>
    %cst_55 = arith.constant dense<0.000000e+00> : vector<16x32xf32>
    %154 = tpu.matmul %152, %153, %cst_55 {dimension_numbers = #tpu.dot_dimension_numbers<[1], [0], [0], [1], [0, 0, 1, 1], [], []>} : vector<16x64xf32>, vector<64x32xf32>, vector<16x32xf32> -> vector<16x32xf32>
    %c107 = arith.constant 107 : index
    %c0_56 = arith.constant 0 : index
    %155 = vector.load %arg3[%c107, %c0_56] : memref<432x32xf32, #tpu.memory_space<vmem>>, vector<1x32xf32>
    %156 = vector.broadcast %155 : vector<1x32xf32> to vector<16x32xf32>
    %157 = arith.addf %154, %156 : vector<16x32xf32>
    %158 = arith.addf %157, %134 : vector<16x32xf32>
    %c108 = arith.constant 108 : index
    %c0_57 = arith.constant 0 : index
    %159 = vector.load %arg3[%c108, %c0_57] : memref<432x32xf32, #tpu.memory_space<vmem>>, vector<1x32xf32>
    %c109 = arith.constant 109 : index
    %c0_58 = arith.constant 0 : index
    %160 = vector.load %arg3[%c109, %c0_58] : memref<432x32xf32, #tpu.memory_space<vmem>>, vector<1x32xf32>
    %cst_59 = arith.constant dense<0.000000e+00> : vector<16xf32>
    %161 = vector.multi_reduction <add>, %158, %cst_59 [1] : vector<16x32xf32> to vector<16xf32>
    %162 = vector.shape_cast %161 : vector<16xf32> to vector<16x1xf32>
    %cst_60 = arith.constant 3.200000e+01 : f32
    %163 = vector.broadcast %cst_60 : f32 to vector<16x1xf32>
    %164 = arith.divf %162, %163 : vector<16x1xf32>
    %165 = vector.broadcast %164 : vector<16x1xf32> to vector<16x32xf32>
    %166 = arith.subf %158, %165 : vector<16x32xf32>
    %167 = arith.mulf %166, %166 : vector<16x32xf32>
    %cst_61 = arith.constant dense<0.000000e+00> : vector<16xf32>
    %168 = vector.multi_reduction <add>, %167, %cst_61 [1] : vector<16x32xf32> to vector<16xf32>
    %169 = vector.shape_cast %168 : vector<16xf32> to vector<16x1xf32>
    %cst_62 = arith.constant 3.200000e+01 : f32
    %170 = vector.broadcast %cst_62 : f32 to vector<16x1xf32>
    %171 = arith.divf %169, %170 : vector<16x1xf32>
    %cst_63 = arith.constant 9.99999996E-13 : f32
    %172 = vector.broadcast %cst_63 : f32 to vector<16x1xf32>
    %173 = arith.addf %171, %172 : vector<16x1xf32>
    %174 = math.rsqrt %173 : vector<16x1xf32>
    %175 = vector.broadcast %174 : vector<16x1xf32> to vector<16x32xf32>
    %176 = arith.mulf %166, %175 : vector<16x32xf32>
    %177 = vector.broadcast %159 : vector<1x32xf32> to vector<16x32xf32>
    %178 = arith.mulf %176, %177 : vector<16x32xf32>
    %179 = vector.broadcast %160 : vector<1x32xf32> to vector<16x32xf32>
    %180 = arith.addf %178, %179 : vector<16x32xf32>
    %c40_64 = arith.constant 40 : index
    %c0_65 = arith.constant 0 : index
    %181 = vector.load %arg2[%c40_64, %c0_65] : memref<160x96xf32, #tpu.memory_space<vmem>>, vector<32x96xf32>
    %cst_66 = arith.constant dense<0.000000e+00> : vector<16x96xf32>
    %182 = tpu.matmul %180, %181, %cst_66 {dimension_numbers = #tpu.dot_dimension_numbers<[1], [0], [0], [1], [0, 0, 1, 1], [], []>} : vector<16x32xf32>, vector<32x96xf32>, vector<16x96xf32> -> vector<16x96xf32>
    %c72 = arith.constant 72 : index
    %c0_67 = arith.constant 0 : index
    %183 = vector.load %arg2[%c72, %c0_67] : memref<160x96xf32, #tpu.memory_space<vmem>>, vector<1x96xf32>
    %184 = vector.broadcast %183 : vector<1x96xf32> to vector<16x96xf32>
    %185 = arith.addf %182, %184 : vector<16x96xf32>
    %186 = vector.extract_strided_slice %1 {offsets = [0, 0], sizes = [1, 8], strides = [1, 1]} : vector<2x8xf32> to vector<1x8xf32>
    %187 = vector.extract_strided_slice %185 {offsets = [0, 0], sizes = [8, 16], strides = [1, 1]} : vector<16x96xf32> to vector<8x16xf32>
    %188 = vector.extract_strided_slice %185 {offsets = [0, 32], sizes = [8, 16], strides = [1, 1]} : vector<16x96xf32> to vector<8x16xf32>
    %189 = vector.extract_strided_slice %185 {offsets = [0, 64], sizes = [8, 16], strides = [1, 1]} : vector<16x96xf32> to vector<8x16xf32>
    %cst_68 = arith.constant dense<0.000000e+00> : vector<8x8xf32>
    %190 = tpu.matmul %187, %188, %cst_68 {dimension_numbers = #tpu.dot_dimension_numbers<[1], [1], [0], [0], [0, 0, 1, 0], [], []>} : vector<8x16xf32>, vector<8x16xf32>, vector<8x8xf32> -> vector<8x8xf32>
    %cst_69 = arith.constant 2.500000e-01 : f32
    %191 = vector.broadcast %cst_69 : f32 to vector<8x8xf32>
    %192 = arith.mulf %190, %191 : vector<8x8xf32>
    %193 = vector.broadcast %186 : vector<1x8xf32> to vector<8x8xf32>
    %194 = arith.addf %192, %193 : vector<8x8xf32>
    %cst_70 = arith.constant dense<0xFF800000> : vector<8xf32>
    %195 = vector.multi_reduction <maximumf>, %194, %cst_70 [1] : vector<8x8xf32> to vector<8xf32>
    %196 = vector.shape_cast %195 : vector<8xf32> to vector<8x1xf32>
    %197 = vector.broadcast %196 : vector<8x1xf32> to vector<8x8xf32>
    %198 = arith.subf %194, %197 : vector<8x8xf32>
    %199 = math.exp %198 : vector<8x8xf32>
    %cst_71 = arith.constant dense<0.000000e+00> : vector<8xf32>
    %200 = vector.multi_reduction <add>, %199, %cst_71 [1] : vector<8x8xf32> to vector<8xf32>
    %201 = vector.shape_cast %200 : vector<8xf32> to vector<8x1xf32>
    %202 = vector.broadcast %201 : vector<8x1xf32> to vector<8x8xf32>
    %203 = arith.divf %199, %202 : vector<8x8xf32>
    %cst_72 = arith.constant dense<0.000000e+00> : vector<8x16xf32>
    %204 = tpu.matmul %203, %189, %cst_72 {dimension_numbers = #tpu.dot_dimension_numbers<[1], [0], [0], [1], [0, 0, 1, 1], [], []>} : vector<8x8xf32>, vector<8x16xf32>, vector<8x16xf32> -> vector<8x16xf32>
    %205 = vector.extract_strided_slice %185 {offsets = [0, 16], sizes = [8, 16], strides = [1, 1]} : vector<16x96xf32> to vector<8x16xf32>
    %206 = vector.extract_strided_slice %185 {offsets = [0, 48], sizes = [8, 16], strides = [1, 1]} : vector<16x96xf32> to vector<8x16xf32>
    %207 = vector.extract_strided_slice %185 {offsets = [0, 80], sizes = [8, 16], strides = [1, 1]} : vector<16x96xf32> to vector<8x16xf32>
    %cst_73 = arith.constant dense<0.000000e+00> : vector<8x8xf32>
    %208 = tpu.matmul %205, %206, %cst_73 {dimension_numbers = #tpu.dot_dimension_numbers<[1], [1], [0], [0], [0, 0, 1, 0], [], []>} : vector<8x16xf32>, vector<8x16xf32>, vector<8x8xf32> -> vector<8x8xf32>
    %cst_74 = arith.constant 2.500000e-01 : f32
    %209 = vector.broadcast %cst_74 : f32 to vector<8x8xf32>
    %210 = arith.mulf %208, %209 : vector<8x8xf32>
    %211 = vector.broadcast %186 : vector<1x8xf32> to vector<8x8xf32>
    %212 = arith.addf %210, %211 : vector<8x8xf32>
    %cst_75 = arith.constant dense<0xFF800000> : vector<8xf32>
    %213 = vector.multi_reduction <maximumf>, %212, %cst_75 [1] : vector<8x8xf32> to vector<8xf32>
    %214 = vector.shape_cast %213 : vector<8xf32> to vector<8x1xf32>
    %215 = vector.broadcast %214 : vector<8x1xf32> to vector<8x8xf32>
    %216 = arith.subf %212, %215 : vector<8x8xf32>
    %217 = math.exp %216 : vector<8x8xf32>
    %cst_76 = arith.constant dense<0.000000e+00> : vector<8xf32>
    %218 = vector.multi_reduction <add>, %217, %cst_76 [1] : vector<8x8xf32> to vector<8xf32>
    %219 = vector.shape_cast %218 : vector<8xf32> to vector<8x1xf32>
    %220 = vector.broadcast %219 : vector<8x1xf32> to vector<8x8xf32>
    %221 = arith.divf %217, %220 : vector<8x8xf32>
    %cst_77 = arith.constant dense<0.000000e+00> : vector<8x16xf32>
    %222 = tpu.matmul %221, %207, %cst_77 {dimension_numbers = #tpu.dot_dimension_numbers<[1], [0], [0], [1], [0, 0, 1, 1], [], []>} : vector<8x8xf32>, vector<8x16xf32>, vector<8x16xf32> -> vector<8x16xf32>
    %223 = tpu.concatenate %204, %222 in 1 : vector<8x16xf32>, vector<8x16xf32> -> vector<8x32xf32>
    %224 = vector.extract_strided_slice %1 {offsets = [1, 0], sizes = [1, 8], strides = [1, 1]} : vector<2x8xf32> to vector<1x8xf32>
    %225 = vector.extract_strided_slice %185 {offsets = [8, 0], sizes = [8, 16], strides = [1, 1]} : vector<16x96xf32> to vector<8x16xf32>
    %226 = vector.extract_strided_slice %185 {offsets = [8, 32], sizes = [8, 16], strides = [1, 1]} : vector<16x96xf32> to vector<8x16xf32>
    %227 = vector.extract_strided_slice %185 {offsets = [8, 64], sizes = [8, 16], strides = [1, 1]} : vector<16x96xf32> to vector<8x16xf32>
    %cst_78 = arith.constant dense<0.000000e+00> : vector<8x8xf32>
    %228 = tpu.matmul %225, %226, %cst_78 {dimension_numbers = #tpu.dot_dimension_numbers<[1], [1], [0], [0], [0, 0, 1, 0], [], []>} : vector<8x16xf32>, vector<8x16xf32>, vector<8x8xf32> -> vector<8x8xf32>
    %cst_79 = arith.constant 2.500000e-01 : f32
    %229 = vector.broadcast %cst_79 : f32 to vector<8x8xf32>
    %230 = arith.mulf %228, %229 : vector<8x8xf32>
    %231 = vector.broadcast %224 : vector<1x8xf32> to vector<8x8xf32>
    %232 = arith.addf %230, %231 : vector<8x8xf32>
    %cst_80 = arith.constant dense<0xFF800000> : vector<8xf32>
    %233 = vector.multi_reduction <maximumf>, %232, %cst_80 [1] : vector<8x8xf32> to vector<8xf32>
    %234 = vector.shape_cast %233 : vector<8xf32> to vector<8x1xf32>
    %235 = vector.broadcast %234 : vector<8x1xf32> to vector<8x8xf32>
    %236 = arith.subf %232, %235 : vector<8x8xf32>
    %237 = math.exp %236 : vector<8x8xf32>
    %cst_81 = arith.constant dense<0.000000e+00> : vector<8xf32>
    %238 = vector.multi_reduction <add>, %237, %cst_81 [1] : vector<8x8xf32> to vector<8xf32>
    %239 = vector.shape_cast %238 : vector<8xf32> to vector<8x1xf32>
    %240 = vector.broadcast %239 : vector<8x1xf32> to vector<8x8xf32>
    %241 = arith.divf %237, %240 : vector<8x8xf32>
    %cst_82 = arith.constant dense<0.000000e+00> : vector<8x16xf32>
    %242 = tpu.matmul %241, %227, %cst_82 {dimension_numbers = #tpu.dot_dimension_numbers<[1], [0], [0], [1], [0, 0, 1, 1], [], []>} : vector<8x8xf32>, vector<8x16xf32>, vector<8x16xf32> -> vector<8x16xf32>
    %243 = vector.extract_strided_slice %185 {offsets = [8, 16], sizes = [8, 16], strides = [1, 1]} : vector<16x96xf32> to vector<8x16xf32>
    %244 = vector.extract_strided_slice %185 {offsets = [8, 48], sizes = [8, 16], strides = [1, 1]} : vector<16x96xf32> to vector<8x16xf32>
    %245 = vector.extract_strided_slice %185 {offsets = [8, 80], sizes = [8, 16], strides = [1, 1]} : vector<16x96xf32> to vector<8x16xf32>
    %cst_83 = arith.constant dense<0.000000e+00> : vector<8x8xf32>
    %246 = tpu.matmul %243, %244, %cst_83 {dimension_numbers = #tpu.dot_dimension_numbers<[1], [1], [0], [0], [0, 0, 1, 0], [], []>} : vector<8x16xf32>, vector<8x16xf32>, vector<8x8xf32> -> vector<8x8xf32>
    %cst_84 = arith.constant 2.500000e-01 : f32
    %247 = vector.broadcast %cst_84 : f32 to vector<8x8xf32>
    %248 = arith.mulf %246, %247 : vector<8x8xf32>
    %249 = vector.broadcast %224 : vector<1x8xf32> to vector<8x8xf32>
    %250 = arith.addf %248, %249 : vector<8x8xf32>
    %cst_85 = arith.constant dense<0xFF800000> : vector<8xf32>
    %251 = vector.multi_reduction <maximumf>, %250, %cst_85 [1] : vector<8x8xf32> to vector<8xf32>
    %252 = vector.shape_cast %251 : vector<8xf32> to vector<8x1xf32>
    %253 = vector.broadcast %252 : vector<8x1xf32> to vector<8x8xf32>
    %254 = arith.subf %250, %253 : vector<8x8xf32>
    %255 = math.exp %254 : vector<8x8xf32>
    %cst_86 = arith.constant dense<0.000000e+00> : vector<8xf32>
    %256 = vector.multi_reduction <add>, %255, %cst_86 [1] : vector<8x8xf32> to vector<8xf32>
    %257 = vector.shape_cast %256 : vector<8xf32> to vector<8x1xf32>
    %258 = vector.broadcast %257 : vector<8x1xf32> to vector<8x8xf32>
    %259 = arith.divf %255, %258 : vector<8x8xf32>
    %cst_87 = arith.constant dense<0.000000e+00> : vector<8x16xf32>
    %260 = tpu.matmul %259, %245, %cst_87 {dimension_numbers = #tpu.dot_dimension_numbers<[1], [0], [0], [1], [0, 0, 1, 1], [], []>} : vector<8x8xf32>, vector<8x16xf32>, vector<8x16xf32> -> vector<8x16xf32>
    %261 = tpu.concatenate %242, %260 in 1 : vector<8x16xf32>, vector<8x16xf32> -> vector<8x32xf32>
    %262 = tpu.concatenate %223, %261 in 0 : vector<8x32xf32>, vector<8x32xf32> -> vector<16x32xf32>
    %c112 = arith.constant 112 : index
    %c0_88 = arith.constant 0 : index
    %263 = vector.load %arg3[%c112, %c0_88] : memref<432x32xf32, #tpu.memory_space<vmem>>, vector<32x32xf32>
    %cst_89 = arith.constant dense<0.000000e+00> : vector<16x32xf32>
    %264 = tpu.matmul %262, %263, %cst_89 {dimension_numbers = #tpu.dot_dimension_numbers<[1], [0], [0], [1], [0, 0, 1, 1], [], []>} : vector<16x32xf32>, vector<32x32xf32>, vector<16x32xf32> -> vector<16x32xf32>
    %c208 = arith.constant 208 : index
    %c0_90 = arith.constant 0 : index
    %265 = vector.load %arg3[%c208, %c0_90] : memref<432x32xf32, #tpu.memory_space<vmem>>, vector<1x32xf32>
    %266 = vector.broadcast %265 : vector<1x32xf32> to vector<16x32xf32>
    %267 = arith.addf %264, %266 : vector<16x32xf32>
    %268 = arith.addf %267, %180 : vector<16x32xf32>
    %c209 = arith.constant 209 : index
    %c0_91 = arith.constant 0 : index
    %269 = vector.load %arg3[%c209, %c0_91] : memref<432x32xf32, #tpu.memory_space<vmem>>, vector<1x32xf32>
    %c210 = arith.constant 210 : index
    %c0_92 = arith.constant 0 : index
    %270 = vector.load %arg3[%c210, %c0_92] : memref<432x32xf32, #tpu.memory_space<vmem>>, vector<1x32xf32>
    %cst_93 = arith.constant dense<0.000000e+00> : vector<16xf32>
    %271 = vector.multi_reduction <add>, %268, %cst_93 [1] : vector<16x32xf32> to vector<16xf32>
    %272 = vector.shape_cast %271 : vector<16xf32> to vector<16x1xf32>
    %cst_94 = arith.constant 3.200000e+01 : f32
    %273 = vector.broadcast %cst_94 : f32 to vector<16x1xf32>
    %274 = arith.divf %272, %273 : vector<16x1xf32>
    %275 = vector.broadcast %274 : vector<16x1xf32> to vector<16x32xf32>
    %276 = arith.subf %268, %275 : vector<16x32xf32>
    %277 = arith.mulf %276, %276 : vector<16x32xf32>
    %cst_95 = arith.constant dense<0.000000e+00> : vector<16xf32>
    %278 = vector.multi_reduction <add>, %277, %cst_95 [1] : vector<16x32xf32> to vector<16xf32>
    %279 = vector.shape_cast %278 : vector<16xf32> to vector<16x1xf32>
    %cst_96 = arith.constant 3.200000e+01 : f32
    %280 = vector.broadcast %cst_96 : f32 to vector<16x1xf32>
    %281 = arith.divf %279, %280 : vector<16x1xf32>
    %cst_97 = arith.constant 9.99999996E-13 : f32
    %282 = vector.broadcast %cst_97 : f32 to vector<16x1xf32>
    %283 = arith.addf %281, %282 : vector<16x1xf32>
    %284 = math.rsqrt %283 : vector<16x1xf32>
    %285 = vector.broadcast %284 : vector<16x1xf32> to vector<16x32xf32>
    %286 = arith.mulf %276, %285 : vector<16x32xf32>
    %287 = vector.broadcast %269 : vector<1x32xf32> to vector<16x32xf32>
    %288 = arith.mulf %286, %287 : vector<16x32xf32>
    %289 = vector.broadcast %270 : vector<1x32xf32> to vector<16x32xf32>
    %290 = arith.addf %288, %289 : vector<16x32xf32>
    %c40_98 = arith.constant 40 : index
    %c0_99 = arith.constant 0 : index
    %291 = vector.load %arg4[%c40_98, %c0_99] : memref<160x64xf32, #tpu.memory_space<vmem>>, vector<32x64xf32>
    %cst_100 = arith.constant dense<0.000000e+00> : vector<16x64xf32>
    %292 = tpu.matmul %290, %291, %cst_100 {dimension_numbers = #tpu.dot_dimension_numbers<[1], [0], [0], [1], [0, 0, 1, 1], [], []>} : vector<16x32xf32>, vector<32x64xf32>, vector<16x64xf32> -> vector<16x64xf32>
    %c72_101 = arith.constant 72 : index
    %c0_102 = arith.constant 0 : index
    %293 = vector.load %arg4[%c72_101, %c0_102] : memref<160x64xf32, #tpu.memory_space<vmem>>, vector<1x64xf32>
    %294 = vector.broadcast %293 : vector<1x64xf32> to vector<16x64xf32>
    %295 = arith.addf %292, %294 : vector<16x64xf32>
    %296 = arith.mulf %295, %295 : vector<16x64xf32>
    %297 = arith.mulf %295, %296 : vector<16x64xf32>
    %cst_103 = arith.constant 4.471500e-02 : f32
    %298 = vector.broadcast %cst_103 : f32 to vector<16x64xf32>
    %299 = arith.mulf %298, %297 : vector<16x64xf32>
    %300 = arith.addf %295, %299 : vector<16x64xf32>
    %cst_104 = arith.constant 0.797884583 : f32
    %301 = vector.broadcast %cst_104 : f32 to vector<16x64xf32>
    %302 = arith.mulf %301, %300 : vector<16x64xf32>
    %303 = math.tanh %302 : vector<16x64xf32>
    %cst_105 = arith.constant 1.000000e+00 : f32
    %304 = vector.broadcast %cst_105 : f32 to vector<16x64xf32>
    %305 = arith.addf %304, %303 : vector<16x64xf32>
    %cst_106 = arith.constant 5.000000e-01 : f32
    %306 = vector.broadcast %cst_106 : f32 to vector<16x64xf32>
    %307 = arith.mulf %306, %305 : vector<16x64xf32>
    %308 = arith.mulf %295, %307 : vector<16x64xf32>
    %c144 = arith.constant 144 : index
    %c0_107 = arith.constant 0 : index
    %309 = vector.load %arg3[%c144, %c0_107] : memref<432x32xf32, #tpu.memory_space<vmem>>, vector<64x32xf32>
    %cst_108 = arith.constant dense<0.000000e+00> : vector<16x32xf32>
    %310 = tpu.matmul %308, %309, %cst_108 {dimension_numbers = #tpu.dot_dimension_numbers<[1], [0], [0], [1], [0, 0, 1, 1], [], []>} : vector<16x64xf32>, vector<64x32xf32>, vector<16x32xf32> -> vector<16x32xf32>
    %c211 = arith.constant 211 : index
    %c0_109 = arith.constant 0 : index
    %311 = vector.load %arg3[%c211, %c0_109] : memref<432x32xf32, #tpu.memory_space<vmem>>, vector<1x32xf32>
    %312 = vector.broadcast %311 : vector<1x32xf32> to vector<16x32xf32>
    %313 = arith.addf %310, %312 : vector<16x32xf32>
    %314 = arith.addf %313, %290 : vector<16x32xf32>
    %c212 = arith.constant 212 : index
    %c0_110 = arith.constant 0 : index
    %315 = vector.load %arg3[%c212, %c0_110] : memref<432x32xf32, #tpu.memory_space<vmem>>, vector<1x32xf32>
    %c213 = arith.constant 213 : index
    %c0_111 = arith.constant 0 : index
    %316 = vector.load %arg3[%c213, %c0_111] : memref<432x32xf32, #tpu.memory_space<vmem>>, vector<1x32xf32>
    %cst_112 = arith.constant dense<0.000000e+00> : vector<16xf32>
    %317 = vector.multi_reduction <add>, %314, %cst_112 [1] : vector<16x32xf32> to vector<16xf32>
    %318 = vector.shape_cast %317 : vector<16xf32> to vector<16x1xf32>
    %cst_113 = arith.constant 3.200000e+01 : f32
    %319 = vector.broadcast %cst_113 : f32 to vector<16x1xf32>
    %320 = arith.divf %318, %319 : vector<16x1xf32>
    %321 = vector.broadcast %320 : vector<16x1xf32> to vector<16x32xf32>
    %322 = arith.subf %314, %321 : vector<16x32xf32>
    %323 = arith.mulf %322, %322 : vector<16x32xf32>
    %cst_114 = arith.constant dense<0.000000e+00> : vector<16xf32>
    %324 = vector.multi_reduction <add>, %323, %cst_114 [1] : vector<16x32xf32> to vector<16xf32>
    %325 = vector.shape_cast %324 : vector<16xf32> to vector<16x1xf32>
    %cst_115 = arith.constant 3.200000e+01 : f32
    %326 = vector.broadcast %cst_115 : f32 to vector<16x1xf32>
    %327 = arith.divf %325, %326 : vector<16x1xf32>
    %cst_116 = arith.constant 9.99999996E-13 : f32
    %328 = vector.broadcast %cst_116 : f32 to vector<16x1xf32>
    %329 = arith.addf %327, %328 : vector<16x1xf32>
    %330 = math.rsqrt %329 : vector<16x1xf32>
    %331 = vector.broadcast %330 : vector<16x1xf32> to vector<16x32xf32>
    %332 = arith.mulf %322, %331 : vector<16x32xf32>
    %333 = vector.broadcast %315 : vector<1x32xf32> to vector<16x32xf32>
    %334 = arith.mulf %332, %333 : vector<16x32xf32>
    %335 = vector.broadcast %316 : vector<1x32xf32> to vector<16x32xf32>
    %336 = arith.addf %334, %335 : vector<16x32xf32>
    %337 = vector.extract_strided_slice %336 {offsets = [0, 0], sizes = [1, 32], strides = [1, 1]} : vector<16x32xf32> to vector<1x32xf32>
    %338 = vector.extract_strided_slice %336 {offsets = [8, 0], sizes = [1, 32], strides = [1, 1]} : vector<16x32xf32> to vector<1x32xf32>
    %339 = tpu.concatenate %337, %338 in 0 : vector<1x32xf32>, vector<1x32xf32> -> vector<2x32xf32>
    %340 = arith.addf %0, %339 : vector<2x32xf32>
    %c2 = arith.constant 2 : index
    %c0_117 = arith.constant 0 : index
    %341 = vector.load %arg1[%c2, %c0_117] : memref<4x8xf32, #tpu.memory_space<vmem>>, vector<2x8xf32>
    %c16 = arith.constant 16 : index
    %c0_118 = arith.constant 0 : index
    %342 = vector.load %arg0[%c16, %c0_118] : memref<32x32xf32, #tpu.memory_space<vmem>>, vector<16x32xf32>
    %c216 = arith.constant 216 : index
    %c0_119 = arith.constant 0 : index
    %343 = vector.load %arg3[%c216, %c0_119] : memref<432x32xf32, #tpu.memory_space<vmem>>, vector<1x32xf32>
    %c217 = arith.constant 217 : index
    %c0_120 = arith.constant 0 : index
    %344 = vector.load %arg3[%c217, %c0_120] : memref<432x32xf32, #tpu.memory_space<vmem>>, vector<1x32xf32>
    %cst_121 = arith.constant dense<0.000000e+00> : vector<16xf32>
    %345 = vector.multi_reduction <add>, %342, %cst_121 [1] : vector<16x32xf32> to vector<16xf32>
    %346 = vector.shape_cast %345 : vector<16xf32> to vector<16x1xf32>
    %cst_122 = arith.constant 3.200000e+01 : f32
    %347 = vector.broadcast %cst_122 : f32 to vector<16x1xf32>
    %348 = arith.divf %346, %347 : vector<16x1xf32>
    %349 = vector.broadcast %348 : vector<16x1xf32> to vector<16x32xf32>
    %350 = arith.subf %342, %349 : vector<16x32xf32>
    %351 = arith.mulf %350, %350 : vector<16x32xf32>
    %cst_123 = arith.constant dense<0.000000e+00> : vector<16xf32>
    %352 = vector.multi_reduction <add>, %351, %cst_123 [1] : vector<16x32xf32> to vector<16xf32>
    %353 = vector.shape_cast %352 : vector<16xf32> to vector<16x1xf32>
    %cst_124 = arith.constant 3.200000e+01 : f32
    %354 = vector.broadcast %cst_124 : f32 to vector<16x1xf32>
    %355 = arith.divf %353, %354 : vector<16x1xf32>
    %cst_125 = arith.constant 9.99999996E-13 : f32
    %356 = vector.broadcast %cst_125 : f32 to vector<16x1xf32>
    %357 = arith.addf %355, %356 : vector<16x1xf32>
    %358 = math.rsqrt %357 : vector<16x1xf32>
    %359 = vector.broadcast %358 : vector<16x1xf32> to vector<16x32xf32>
    %360 = arith.mulf %350, %359 : vector<16x32xf32>
    %361 = vector.broadcast %343 : vector<1x32xf32> to vector<16x32xf32>
    %362 = arith.mulf %360, %361 : vector<16x32xf32>
    %363 = vector.broadcast %344 : vector<1x32xf32> to vector<16x32xf32>
    %364 = arith.addf %362, %363 : vector<16x32xf32>
    %c80 = arith.constant 80 : index
    %c0_126 = arith.constant 0 : index
    %365 = vector.load %arg2[%c80, %c0_126] : memref<160x96xf32, #tpu.memory_space<vmem>>, vector<32x96xf32>
    %cst_127 = arith.constant dense<0.000000e+00> : vector<16x96xf32>
    %366 = tpu.matmul %364, %365, %cst_127 {dimension_numbers = #tpu.dot_dimension_numbers<[1], [0], [0], [1], [0, 0, 1, 1], [], []>} : vector<16x32xf32>, vector<32x96xf32>, vector<16x96xf32> -> vector<16x96xf32>
    %c112_128 = arith.constant 112 : index
    %c0_129 = arith.constant 0 : index
    %367 = vector.load %arg2[%c112_128, %c0_129] : memref<160x96xf32, #tpu.memory_space<vmem>>, vector<1x96xf32>
    %368 = vector.broadcast %367 : vector<1x96xf32> to vector<16x96xf32>
    %369 = arith.addf %366, %368 : vector<16x96xf32>
    %370 = vector.extract_strided_slice %341 {offsets = [0, 0], sizes = [1, 8], strides = [1, 1]} : vector<2x8xf32> to vector<1x8xf32>
    %371 = vector.extract_strided_slice %369 {offsets = [0, 0], sizes = [8, 16], strides = [1, 1]} : vector<16x96xf32> to vector<8x16xf32>
    %372 = vector.extract_strided_slice %369 {offsets = [0, 32], sizes = [8, 16], strides = [1, 1]} : vector<16x96xf32> to vector<8x16xf32>
    %373 = vector.extract_strided_slice %369 {offsets = [0, 64], sizes = [8, 16], strides = [1, 1]} : vector<16x96xf32> to vector<8x16xf32>
    %cst_130 = arith.constant dense<0.000000e+00> : vector<8x8xf32>
    %374 = tpu.matmul %371, %372, %cst_130 {dimension_numbers = #tpu.dot_dimension_numbers<[1], [1], [0], [0], [0, 0, 1, 0], [], []>} : vector<8x16xf32>, vector<8x16xf32>, vector<8x8xf32> -> vector<8x8xf32>
    %cst_131 = arith.constant 2.500000e-01 : f32
    %375 = vector.broadcast %cst_131 : f32 to vector<8x8xf32>
    %376 = arith.mulf %374, %375 : vector<8x8xf32>
    %377 = vector.broadcast %370 : vector<1x8xf32> to vector<8x8xf32>
    %378 = arith.addf %376, %377 : vector<8x8xf32>
    %cst_132 = arith.constant dense<0xFF800000> : vector<8xf32>
    %379 = vector.multi_reduction <maximumf>, %378, %cst_132 [1] : vector<8x8xf32> to vector<8xf32>
    %380 = vector.shape_cast %379 : vector<8xf32> to vector<8x1xf32>
    %381 = vector.broadcast %380 : vector<8x1xf32> to vector<8x8xf32>
    %382 = arith.subf %378, %381 : vector<8x8xf32>
    %383 = math.exp %382 : vector<8x8xf32>
    %cst_133 = arith.constant dense<0.000000e+00> : vector<8xf32>
    %384 = vector.multi_reduction <add>, %383, %cst_133 [1] : vector<8x8xf32> to vector<8xf32>
    %385 = vector.shape_cast %384 : vector<8xf32> to vector<8x1xf32>
    %386 = vector.broadcast %385 : vector<8x1xf32> to vector<8x8xf32>
    %387 = arith.divf %383, %386 : vector<8x8xf32>
    %cst_134 = arith.constant dense<0.000000e+00> : vector<8x16xf32>
    %388 = tpu.matmul %387, %373, %cst_134 {dimension_numbers = #tpu.dot_dimension_numbers<[1], [0], [0], [1], [0, 0, 1, 1], [], []>} : vector<8x8xf32>, vector<8x16xf32>, vector<8x16xf32> -> vector<8x16xf32>
    %389 = vector.extract_strided_slice %369 {offsets = [0, 16], sizes = [8, 16], strides = [1, 1]} : vector<16x96xf32> to vector<8x16xf32>
    %390 = vector.extract_strided_slice %369 {offsets = [0, 48], sizes = [8, 16], strides = [1, 1]} : vector<16x96xf32> to vector<8x16xf32>
    %391 = vector.extract_strided_slice %369 {offsets = [0, 80], sizes = [8, 16], strides = [1, 1]} : vector<16x96xf32> to vector<8x16xf32>
    %cst_135 = arith.constant dense<0.000000e+00> : vector<8x8xf32>
    %392 = tpu.matmul %389, %390, %cst_135 {dimension_numbers = #tpu.dot_dimension_numbers<[1], [1], [0], [0], [0, 0, 1, 0], [], []>} : vector<8x16xf32>, vector<8x16xf32>, vector<8x8xf32> -> vector<8x8xf32>
    %cst_136 = arith.constant 2.500000e-01 : f32
    %393 = vector.broadcast %cst_136 : f32 to vector<8x8xf32>
    %394 = arith.mulf %392, %393 : vector<8x8xf32>
    %395 = vector.broadcast %370 : vector<1x8xf32> to vector<8x8xf32>
    %396 = arith.addf %394, %395 : vector<8x8xf32>
    %cst_137 = arith.constant dense<0xFF800000> : vector<8xf32>
    %397 = vector.multi_reduction <maximumf>, %396, %cst_137 [1] : vector<8x8xf32> to vector<8xf32>
    %398 = vector.shape_cast %397 : vector<8xf32> to vector<8x1xf32>
    %399 = vector.broadcast %398 : vector<8x1xf32> to vector<8x8xf32>
    %400 = arith.subf %396, %399 : vector<8x8xf32>
    %401 = math.exp %400 : vector<8x8xf32>
    %cst_138 = arith.constant dense<0.000000e+00> : vector<8xf32>
    %402 = vector.multi_reduction <add>, %401, %cst_138 [1] : vector<8x8xf32> to vector<8xf32>
    %403 = vector.shape_cast %402 : vector<8xf32> to vector<8x1xf32>
    %404 = vector.broadcast %403 : vector<8x1xf32> to vector<8x8xf32>
    %405 = arith.divf %401, %404 : vector<8x8xf32>
    %cst_139 = arith.constant dense<0.000000e+00> : vector<8x16xf32>
    %406 = tpu.matmul %405, %391, %cst_139 {dimension_numbers = #tpu.dot_dimension_numbers<[1], [0], [0], [1], [0, 0, 1, 1], [], []>} : vector<8x8xf32>, vector<8x16xf32>, vector<8x16xf32> -> vector<8x16xf32>
    %407 = tpu.concatenate %388, %406 in 1 : vector<8x16xf32>, vector<8x16xf32> -> vector<8x32xf32>
    %408 = vector.extract_strided_slice %341 {offsets = [1, 0], sizes = [1, 8], strides = [1, 1]} : vector<2x8xf32> to vector<1x8xf32>
    %409 = vector.extract_strided_slice %369 {offsets = [8, 0], sizes = [8, 16], strides = [1, 1]} : vector<16x96xf32> to vector<8x16xf32>
    %410 = vector.extract_strided_slice %369 {offsets = [8, 32], sizes = [8, 16], strides = [1, 1]} : vector<16x96xf32> to vector<8x16xf32>
    %411 = vector.extract_strided_slice %369 {offsets = [8, 64], sizes = [8, 16], strides = [1, 1]} : vector<16x96xf32> to vector<8x16xf32>
    %cst_140 = arith.constant dense<0.000000e+00> : vector<8x8xf32>
    %412 = tpu.matmul %409, %410, %cst_140 {dimension_numbers = #tpu.dot_dimension_numbers<[1], [1], [0], [0], [0, 0, 1, 0], [], []>} : vector<8x16xf32>, vector<8x16xf32>, vector<8x8xf32> -> vector<8x8xf32>
    %cst_141 = arith.constant 2.500000e-01 : f32
    %413 = vector.broadcast %cst_141 : f32 to vector<8x8xf32>
    %414 = arith.mulf %412, %413 : vector<8x8xf32>
    %415 = vector.broadcast %408 : vector<1x8xf32> to vector<8x8xf32>
    %416 = arith.addf %414, %415 : vector<8x8xf32>
    %cst_142 = arith.constant dense<0xFF800000> : vector<8xf32>
    %417 = vector.multi_reduction <maximumf>, %416, %cst_142 [1] : vector<8x8xf32> to vector<8xf32>
    %418 = vector.shape_cast %417 : vector<8xf32> to vector<8x1xf32>
    %419 = vector.broadcast %418 : vector<8x1xf32> to vector<8x8xf32>
    %420 = arith.subf %416, %419 : vector<8x8xf32>
    %421 = math.exp %420 : vector<8x8xf32>
    %cst_143 = arith.constant dense<0.000000e+00> : vector<8xf32>
    %422 = vector.multi_reduction <add>, %421, %cst_143 [1] : vector<8x8xf32> to vector<8xf32>
    %423 = vector.shape_cast %422 : vector<8xf32> to vector<8x1xf32>
    %424 = vector.broadcast %423 : vector<8x1xf32> to vector<8x8xf32>
    %425 = arith.divf %421, %424 : vector<8x8xf32>
    %cst_144 = arith.constant dense<0.000000e+00> : vector<8x16xf32>
    %426 = tpu.matmul %425, %411, %cst_144 {dimension_numbers = #tpu.dot_dimension_numbers<[1], [0], [0], [1], [0, 0, 1, 1], [], []>} : vector<8x8xf32>, vector<8x16xf32>, vector<8x16xf32> -> vector<8x16xf32>
    %427 = vector.extract_strided_slice %369 {offsets = [8, 16], sizes = [8, 16], strides = [1, 1]} : vector<16x96xf32> to vector<8x16xf32>
    %428 = vector.extract_strided_slice %369 {offsets = [8, 48], sizes = [8, 16], strides = [1, 1]} : vector<16x96xf32> to vector<8x16xf32>
    %429 = vector.extract_strided_slice %369 {offsets = [8, 80], sizes = [8, 16], strides = [1, 1]} : vector<16x96xf32> to vector<8x16xf32>
    %cst_145 = arith.constant dense<0.000000e+00> : vector<8x8xf32>
    %430 = tpu.matmul %427, %428, %cst_145 {dimension_numbers = #tpu.dot_dimension_numbers<[1], [1], [0], [0], [0, 0, 1, 0], [], []>} : vector<8x16xf32>, vector<8x16xf32>, vector<8x8xf32> -> vector<8x8xf32>
    %cst_146 = arith.constant 2.500000e-01 : f32
    %431 = vector.broadcast %cst_146 : f32 to vector<8x8xf32>
    %432 = arith.mulf %430, %431 : vector<8x8xf32>
    %433 = vector.broadcast %408 : vector<1x8xf32> to vector<8x8xf32>
    %434 = arith.addf %432, %433 : vector<8x8xf32>
    %cst_147 = arith.constant dense<0xFF800000> : vector<8xf32>
    %435 = vector.multi_reduction <maximumf>, %434, %cst_147 [1] : vector<8x8xf32> to vector<8xf32>
    %436 = vector.shape_cast %435 : vector<8xf32> to vector<8x1xf32>
    %437 = vector.broadcast %436 : vector<8x1xf32> to vector<8x8xf32>
    %438 = arith.subf %434, %437 : vector<8x8xf32>
    %439 = math.exp %438 : vector<8x8xf32>
    %cst_148 = arith.constant dense<0.000000e+00> : vector<8xf32>
    %440 = vector.multi_reduction <add>, %439, %cst_148 [1] : vector<8x8xf32> to vector<8xf32>
    %441 = vector.shape_cast %440 : vector<8xf32> to vector<8x1xf32>
    %442 = vector.broadcast %441 : vector<8x1xf32> to vector<8x8xf32>
    %443 = arith.divf %439, %442 : vector<8x8xf32>
    %cst_149 = arith.constant dense<0.000000e+00> : vector<8x16xf32>
    %444 = tpu.matmul %443, %429, %cst_149 {dimension_numbers = #tpu.dot_dimension_numbers<[1], [0], [0], [1], [0, 0, 1, 1], [], []>} : vector<8x8xf32>, vector<8x16xf32>, vector<8x16xf32> -> vector<8x16xf32>
    %445 = tpu.concatenate %426, %444 in 1 : vector<8x16xf32>, vector<8x16xf32> -> vector<8x32xf32>
    %446 = tpu.concatenate %407, %445 in 0 : vector<8x32xf32>, vector<8x32xf32> -> vector<16x32xf32>
    %c224 = arith.constant 224 : index
    %c0_150 = arith.constant 0 : index
    %447 = vector.load %arg3[%c224, %c0_150] : memref<432x32xf32, #tpu.memory_space<vmem>>, vector<32x32xf32>
    %cst_151 = arith.constant dense<0.000000e+00> : vector<16x32xf32>
    %448 = tpu.matmul %446, %447, %cst_151 {dimension_numbers = #tpu.dot_dimension_numbers<[1], [0], [0], [1], [0, 0, 1, 1], [], []>} : vector<16x32xf32>, vector<32x32xf32>, vector<16x32xf32> -> vector<16x32xf32>
    %c320 = arith.constant 320 : index
    %c0_152 = arith.constant 0 : index
    %449 = vector.load %arg3[%c320, %c0_152] : memref<432x32xf32, #tpu.memory_space<vmem>>, vector<1x32xf32>
    %450 = vector.broadcast %449 : vector<1x32xf32> to vector<16x32xf32>
    %451 = arith.addf %448, %450 : vector<16x32xf32>
    %452 = arith.addf %451, %364 : vector<16x32xf32>
    %c321 = arith.constant 321 : index
    %c0_153 = arith.constant 0 : index
    %453 = vector.load %arg3[%c321, %c0_153] : memref<432x32xf32, #tpu.memory_space<vmem>>, vector<1x32xf32>
    %c322 = arith.constant 322 : index
    %c0_154 = arith.constant 0 : index
    %454 = vector.load %arg3[%c322, %c0_154] : memref<432x32xf32, #tpu.memory_space<vmem>>, vector<1x32xf32>
    %cst_155 = arith.constant dense<0.000000e+00> : vector<16xf32>
    %455 = vector.multi_reduction <add>, %452, %cst_155 [1] : vector<16x32xf32> to vector<16xf32>
    %456 = vector.shape_cast %455 : vector<16xf32> to vector<16x1xf32>
    %cst_156 = arith.constant 3.200000e+01 : f32
    %457 = vector.broadcast %cst_156 : f32 to vector<16x1xf32>
    %458 = arith.divf %456, %457 : vector<16x1xf32>
    %459 = vector.broadcast %458 : vector<16x1xf32> to vector<16x32xf32>
    %460 = arith.subf %452, %459 : vector<16x32xf32>
    %461 = arith.mulf %460, %460 : vector<16x32xf32>
    %cst_157 = arith.constant dense<0.000000e+00> : vector<16xf32>
    %462 = vector.multi_reduction <add>, %461, %cst_157 [1] : vector<16x32xf32> to vector<16xf32>
    %463 = vector.shape_cast %462 : vector<16xf32> to vector<16x1xf32>
    %cst_158 = arith.constant 3.200000e+01 : f32
    %464 = vector.broadcast %cst_158 : f32 to vector<16x1xf32>
    %465 = arith.divf %463, %464 : vector<16x1xf32>
    %cst_159 = arith.constant 9.99999996E-13 : f32
    %466 = vector.broadcast %cst_159 : f32 to vector<16x1xf32>
    %467 = arith.addf %465, %466 : vector<16x1xf32>
    %468 = math.rsqrt %467 : vector<16x1xf32>
    %469 = vector.broadcast %468 : vector<16x1xf32> to vector<16x32xf32>
    %470 = arith.mulf %460, %469 : vector<16x32xf32>
    %471 = vector.broadcast %453 : vector<1x32xf32> to vector<16x32xf32>
    %472 = arith.mulf %470, %471 : vector<16x32xf32>
    %473 = vector.broadcast %454 : vector<1x32xf32> to vector<16x32xf32>
    %474 = arith.addf %472, %473 : vector<16x32xf32>
    %c80_160 = arith.constant 80 : index
    %c0_161 = arith.constant 0 : index
    %475 = vector.load %arg4[%c80_160, %c0_161] : memref<160x64xf32, #tpu.memory_space<vmem>>, vector<32x64xf32>
    %cst_162 = arith.constant dense<0.000000e+00> : vector<16x64xf32>
    %476 = tpu.matmul %474, %475, %cst_162 {dimension_numbers = #tpu.dot_dimension_numbers<[1], [0], [0], [1], [0, 0, 1, 1], [], []>} : vector<16x32xf32>, vector<32x64xf32>, vector<16x64xf32> -> vector<16x64xf32>
    %c112_163 = arith.constant 112 : index
    %c0_164 = arith.constant 0 : index
    %477 = vector.load %arg4[%c112_163, %c0_164] : memref<160x64xf32, #tpu.memory_space<vmem>>, vector<1x64xf32>
    %478 = vector.broadcast %477 : vector<1x64xf32> to vector<16x64xf32>
    %479 = arith.addf %476, %478 : vector<16x64xf32>
    %480 = arith.mulf %479, %479 : vector<16x64xf32>
    %481 = arith.mulf %479, %480 : vector<16x64xf32>
    %cst_165 = arith.constant 4.471500e-02 : f32
    %482 = vector.broadcast %cst_165 : f32 to vector<16x64xf32>
    %483 = arith.mulf %482, %481 : vector<16x64xf32>
    %484 = arith.addf %479, %483 : vector<16x64xf32>
    %cst_166 = arith.constant 0.797884583 : f32
    %485 = vector.broadcast %cst_166 : f32 to vector<16x64xf32>
    %486 = arith.mulf %485, %484 : vector<16x64xf32>
    %487 = math.tanh %486 : vector<16x64xf32>
    %cst_167 = arith.constant 1.000000e+00 : f32
    %488 = vector.broadcast %cst_167 : f32 to vector<16x64xf32>
    %489 = arith.addf %488, %487 : vector<16x64xf32>
    %cst_168 = arith.constant 5.000000e-01 : f32
    %490 = vector.broadcast %cst_168 : f32 to vector<16x64xf32>
    %491 = arith.mulf %490, %489 : vector<16x64xf32>
    %492 = arith.mulf %479, %491 : vector<16x64xf32>
    %c256 = arith.constant 256 : index
    %c0_169 = arith.constant 0 : index
    %493 = vector.load %arg3[%c256, %c0_169] : memref<432x32xf32, #tpu.memory_space<vmem>>, vector<64x32xf32>
    %cst_170 = arith.constant dense<0.000000e+00> : vector<16x32xf32>
    %494 = tpu.matmul %492, %493, %cst_170 {dimension_numbers = #tpu.dot_dimension_numbers<[1], [0], [0], [1], [0, 0, 1, 1], [], []>} : vector<16x64xf32>, vector<64x32xf32>, vector<16x32xf32> -> vector<16x32xf32>
    %c323 = arith.constant 323 : index
    %c0_171 = arith.constant 0 : index
    %495 = vector.load %arg3[%c323, %c0_171] : memref<432x32xf32, #tpu.memory_space<vmem>>, vector<1x32xf32>
    %496 = vector.broadcast %495 : vector<1x32xf32> to vector<16x32xf32>
    %497 = arith.addf %494, %496 : vector<16x32xf32>
    %498 = arith.addf %497, %474 : vector<16x32xf32>
    %c324 = arith.constant 324 : index
    %c0_172 = arith.constant 0 : index
    %499 = vector.load %arg3[%c324, %c0_172] : memref<432x32xf32, #tpu.memory_space<vmem>>, vector<1x32xf32>
    %c325 = arith.constant 325 : index
    %c0_173 = arith.constant 0 : index
    %500 = vector.load %arg3[%c325, %c0_173] : memref<432x32xf32, #tpu.memory_space<vmem>>, vector<1x32xf32>
    %cst_174 = arith.constant dense<0.000000e+00> : vector<16xf32>
    %501 = vector.multi_reduction <add>, %498, %cst_174 [1] : vector<16x32xf32> to vector<16xf32>
    %502 = vector.shape_cast %501 : vector<16xf32> to vector<16x1xf32>
    %cst_175 = arith.constant 3.200000e+01 : f32
    %503 = vector.broadcast %cst_175 : f32 to vector<16x1xf32>
    %504 = arith.divf %502, %503 : vector<16x1xf32>
    %505 = vector.broadcast %504 : vector<16x1xf32> to vector<16x32xf32>
    %506 = arith.subf %498, %505 : vector<16x32xf32>
    %507 = arith.mulf %506, %506 : vector<16x32xf32>
    %cst_176 = arith.constant dense<0.000000e+00> : vector<16xf32>
    %508 = vector.multi_reduction <add>, %507, %cst_176 [1] : vector<16x32xf32> to vector<16xf32>
    %509 = vector.shape_cast %508 : vector<16xf32> to vector<16x1xf32>
    %cst_177 = arith.constant 3.200000e+01 : f32
    %510 = vector.broadcast %cst_177 : f32 to vector<16x1xf32>
    %511 = arith.divf %509, %510 : vector<16x1xf32>
    %cst_178 = arith.constant 9.99999996E-13 : f32
    %512 = vector.broadcast %cst_178 : f32 to vector<16x1xf32>
    %513 = arith.addf %511, %512 : vector<16x1xf32>
    %514 = math.rsqrt %513 : vector<16x1xf32>
    %515 = vector.broadcast %514 : vector<16x1xf32> to vector<16x32xf32>
    %516 = arith.mulf %506, %515 : vector<16x32xf32>
    %517 = vector.broadcast %499 : vector<1x32xf32> to vector<16x32xf32>
    %518 = arith.mulf %516, %517 : vector<16x32xf32>
    %519 = vector.broadcast %500 : vector<1x32xf32> to vector<16x32xf32>
    %520 = arith.addf %518, %519 : vector<16x32xf32>
    %c120 = arith.constant 120 : index
    %c0_179 = arith.constant 0 : index
    %521 = vector.load %arg2[%c120, %c0_179] : memref<160x96xf32, #tpu.memory_space<vmem>>, vector<32x96xf32>
    %cst_180 = arith.constant dense<0.000000e+00> : vector<16x96xf32>
    %522 = tpu.matmul %520, %521, %cst_180 {dimension_numbers = #tpu.dot_dimension_numbers<[1], [0], [0], [1], [0, 0, 1, 1], [], []>} : vector<16x32xf32>, vector<32x96xf32>, vector<16x96xf32> -> vector<16x96xf32>
    %c152 = arith.constant 152 : index
    %c0_181 = arith.constant 0 : index
    %523 = vector.load %arg2[%c152, %c0_181] : memref<160x96xf32, #tpu.memory_space<vmem>>, vector<1x96xf32>
    %524 = vector.broadcast %523 : vector<1x96xf32> to vector<16x96xf32>
    %525 = arith.addf %522, %524 : vector<16x96xf32>
    %526 = vector.extract_strided_slice %341 {offsets = [0, 0], sizes = [1, 8], strides = [1, 1]} : vector<2x8xf32> to vector<1x8xf32>
    %527 = vector.extract_strided_slice %525 {offsets = [0, 0], sizes = [8, 16], strides = [1, 1]} : vector<16x96xf32> to vector<8x16xf32>
    %528 = vector.extract_strided_slice %525 {offsets = [0, 32], sizes = [8, 16], strides = [1, 1]} : vector<16x96xf32> to vector<8x16xf32>
    %529 = vector.extract_strided_slice %525 {offsets = [0, 64], sizes = [8, 16], strides = [1, 1]} : vector<16x96xf32> to vector<8x16xf32>
    %cst_182 = arith.constant dense<0.000000e+00> : vector<8x8xf32>
    %530 = tpu.matmul %527, %528, %cst_182 {dimension_numbers = #tpu.dot_dimension_numbers<[1], [1], [0], [0], [0, 0, 1, 0], [], []>} : vector<8x16xf32>, vector<8x16xf32>, vector<8x8xf32> -> vector<8x8xf32>
    %cst_183 = arith.constant 2.500000e-01 : f32
    %531 = vector.broadcast %cst_183 : f32 to vector<8x8xf32>
    %532 = arith.mulf %530, %531 : vector<8x8xf32>
    %533 = vector.broadcast %526 : vector<1x8xf32> to vector<8x8xf32>
    %534 = arith.addf %532, %533 : vector<8x8xf32>
    %cst_184 = arith.constant dense<0xFF800000> : vector<8xf32>
    %535 = vector.multi_reduction <maximumf>, %534, %cst_184 [1] : vector<8x8xf32> to vector<8xf32>
    %536 = vector.shape_cast %535 : vector<8xf32> to vector<8x1xf32>
    %537 = vector.broadcast %536 : vector<8x1xf32> to vector<8x8xf32>
    %538 = arith.subf %534, %537 : vector<8x8xf32>
    %539 = math.exp %538 : vector<8x8xf32>
    %cst_185 = arith.constant dense<0.000000e+00> : vector<8xf32>
    %540 = vector.multi_reduction <add>, %539, %cst_185 [1] : vector<8x8xf32> to vector<8xf32>
    %541 = vector.shape_cast %540 : vector<8xf32> to vector<8x1xf32>
    %542 = vector.broadcast %541 : vector<8x1xf32> to vector<8x8xf32>
    %543 = arith.divf %539, %542 : vector<8x8xf32>
    %cst_186 = arith.constant dense<0.000000e+00> : vector<8x16xf32>
    %544 = tpu.matmul %543, %529, %cst_186 {dimension_numbers = #tpu.dot_dimension_numbers<[1], [0], [0], [1], [0, 0, 1, 1], [], []>} : vector<8x8xf32>, vector<8x16xf32>, vector<8x16xf32> -> vector<8x16xf32>
    %545 = vector.extract_strided_slice %525 {offsets = [0, 16], sizes = [8, 16], strides = [1, 1]} : vector<16x96xf32> to vector<8x16xf32>
    %546 = vector.extract_strided_slice %525 {offsets = [0, 48], sizes = [8, 16], strides = [1, 1]} : vector<16x96xf32> to vector<8x16xf32>
    %547 = vector.extract_strided_slice %525 {offsets = [0, 80], sizes = [8, 16], strides = [1, 1]} : vector<16x96xf32> to vector<8x16xf32>
    %cst_187 = arith.constant dense<0.000000e+00> : vector<8x8xf32>
    %548 = tpu.matmul %545, %546, %cst_187 {dimension_numbers = #tpu.dot_dimension_numbers<[1], [1], [0], [0], [0, 0, 1, 0], [], []>} : vector<8x16xf32>, vector<8x16xf32>, vector<8x8xf32> -> vector<8x8xf32>
    %cst_188 = arith.constant 2.500000e-01 : f32
    %549 = vector.broadcast %cst_188 : f32 to vector<8x8xf32>
    %550 = arith.mulf %548, %549 : vector<8x8xf32>
    %551 = vector.broadcast %526 : vector<1x8xf32> to vector<8x8xf32>
    %552 = arith.addf %550, %551 : vector<8x8xf32>
    %cst_189 = arith.constant dense<0xFF800000> : vector<8xf32>
    %553 = vector.multi_reduction <maximumf>, %552, %cst_189 [1] : vector<8x8xf32> to vector<8xf32>
    %554 = vector.shape_cast %553 : vector<8xf32> to vector<8x1xf32>
    %555 = vector.broadcast %554 : vector<8x1xf32> to vector<8x8xf32>
    %556 = arith.subf %552, %555 : vector<8x8xf32>
    %557 = math.exp %556 : vector<8x8xf32>
    %cst_190 = arith.constant dense<0.000000e+00> : vector<8xf32>
    %558 = vector.multi_reduction <add>, %557, %cst_190 [1] : vector<8x8xf32> to vector<8xf32>
    %559 = vector.shape_cast %558 : vector<8xf32> to vector<8x1xf32>
    %560 = vector.broadcast %559 : vector<8x1xf32> to vector<8x8xf32>
    %561 = arith.divf %557, %560 : vector<8x8xf32>
    %cst_191 = arith.constant dense<0.000000e+00> : vector<8x16xf32>
    %562 = tpu.matmul %561, %547, %cst_191 {dimension_numbers = #tpu.dot_dimension_numbers<[1], [0], [0], [1], [0, 0, 1, 1], [], []>} : vector<8x8xf32>, vector<8x16xf32>, vector<8x16xf32> -> vector<8x16xf32>
    %563 = tpu.concatenate %544, %562 in 1 : vector<8x16xf32>, vector<8x16xf32> -> vector<8x32xf32>
    %564 = vector.extract_strided_slice %341 {offsets = [1, 0], sizes = [1, 8], strides = [1, 1]} : vector<2x8xf32> to vector<1x8xf32>
    %565 = vector.extract_strided_slice %525 {offsets = [8, 0], sizes = [8, 16], strides = [1, 1]} : vector<16x96xf32> to vector<8x16xf32>
    %566 = vector.extract_strided_slice %525 {offsets = [8, 32], sizes = [8, 16], strides = [1, 1]} : vector<16x96xf32> to vector<8x16xf32>
    %567 = vector.extract_strided_slice %525 {offsets = [8, 64], sizes = [8, 16], strides = [1, 1]} : vector<16x96xf32> to vector<8x16xf32>
    %cst_192 = arith.constant dense<0.000000e+00> : vector<8x8xf32>
    %568 = tpu.matmul %565, %566, %cst_192 {dimension_numbers = #tpu.dot_dimension_numbers<[1], [1], [0], [0], [0, 0, 1, 0], [], []>} : vector<8x16xf32>, vector<8x16xf32>, vector<8x8xf32> -> vector<8x8xf32>
    %cst_193 = arith.constant 2.500000e-01 : f32
    %569 = vector.broadcast %cst_193 : f32 to vector<8x8xf32>
    %570 = arith.mulf %568, %569 : vector<8x8xf32>
    %571 = vector.broadcast %564 : vector<1x8xf32> to vector<8x8xf32>
    %572 = arith.addf %570, %571 : vector<8x8xf32>
    %cst_194 = arith.constant dense<0xFF800000> : vector<8xf32>
    %573 = vector.multi_reduction <maximumf>, %572, %cst_194 [1] : vector<8x8xf32> to vector<8xf32>
    %574 = vector.shape_cast %573 : vector<8xf32> to vector<8x1xf32>
    %575 = vector.broadcast %574 : vector<8x1xf32> to vector<8x8xf32>
    %576 = arith.subf %572, %575 : vector<8x8xf32>
    %577 = math.exp %576 : vector<8x8xf32>
    %cst_195 = arith.constant dense<0.000000e+00> : vector<8xf32>
    %578 = vector.multi_reduction <add>, %577, %cst_195 [1] : vector<8x8xf32> to vector<8xf32>
    %579 = vector.shape_cast %578 : vector<8xf32> to vector<8x1xf32>
    %580 = vector.broadcast %579 : vector<8x1xf32> to vector<8x8xf32>
    %581 = arith.divf %577, %580 : vector<8x8xf32>
    %cst_196 = arith.constant dense<0.000000e+00> : vector<8x16xf32>
    %582 = tpu.matmul %581, %567, %cst_196 {dimension_numbers = #tpu.dot_dimension_numbers<[1], [0], [0], [1], [0, 0, 1, 1], [], []>} : vector<8x8xf32>, vector<8x16xf32>, vector<8x16xf32> -> vector<8x16xf32>
    %583 = vector.extract_strided_slice %525 {offsets = [8, 16], sizes = [8, 16], strides = [1, 1]} : vector<16x96xf32> to vector<8x16xf32>
    %584 = vector.extract_strided_slice %525 {offsets = [8, 48], sizes = [8, 16], strides = [1, 1]} : vector<16x96xf32> to vector<8x16xf32>
    %585 = vector.extract_strided_slice %525 {offsets = [8, 80], sizes = [8, 16], strides = [1, 1]} : vector<16x96xf32> to vector<8x16xf32>
    %cst_197 = arith.constant dense<0.000000e+00> : vector<8x8xf32>
    %586 = tpu.matmul %583, %584, %cst_197 {dimension_numbers = #tpu.dot_dimension_numbers<[1], [1], [0], [0], [0, 0, 1, 0], [], []>} : vector<8x16xf32>, vector<8x16xf32>, vector<8x8xf32> -> vector<8x8xf32>
    %cst_198 = arith.constant 2.500000e-01 : f32
    %587 = vector.broadcast %cst_198 : f32 to vector<8x8xf32>
    %588 = arith.mulf %586, %587 : vector<8x8xf32>
    %589 = vector.broadcast %564 : vector<1x8xf32> to vector<8x8xf32>
    %590 = arith.addf %588, %589 : vector<8x8xf32>
    %cst_199 = arith.constant dense<0xFF800000> : vector<8xf32>
    %591 = vector.multi_reduction <maximumf>, %590, %cst_199 [1] : vector<8x8xf32> to vector<8xf32>
    %592 = vector.shape_cast %591 : vector<8xf32> to vector<8x1xf32>
    %593 = vector.broadcast %592 : vector<8x1xf32> to vector<8x8xf32>
    %594 = arith.subf %590, %593 : vector<8x8xf32>
    %595 = math.exp %594 : vector<8x8xf32>
    %cst_200 = arith.constant dense<0.000000e+00> : vector<8xf32>
    %596 = vector.multi_reduction <add>, %595, %cst_200 [1] : vector<8x8xf32> to vector<8xf32>
    %597 = vector.shape_cast %596 : vector<8xf32> to vector<8x1xf32>
    %598 = vector.broadcast %597 : vector<8x1xf32> to vector<8x8xf32>
    %599 = arith.divf %595, %598 : vector<8x8xf32>
    %cst_201 = arith.constant dense<0.000000e+00> : vector<8x16xf32>
    %600 = tpu.matmul %599, %585, %cst_201 {dimension_numbers = #tpu.dot_dimension_numbers<[1], [0], [0], [1], [0, 0, 1, 1], [], []>} : vector<8x8xf32>, vector<8x16xf32>, vector<8x16xf32> -> vector<8x16xf32>
    %601 = tpu.concatenate %582, %600 in 1 : vector<8x16xf32>, vector<8x16xf32> -> vector<8x32xf32>
    %602 = tpu.concatenate %563, %601 in 0 : vector<8x32xf32>, vector<8x32xf32> -> vector<16x32xf32>
    %c328 = arith.constant 328 : index
    %c0_202 = arith.constant 0 : index
    %603 = vector.load %arg3[%c328, %c0_202] : memref<432x32xf32, #tpu.memory_space<vmem>>, vector<32x32xf32>
    %cst_203 = arith.constant dense<0.000000e+00> : vector<16x32xf32>
    %604 = tpu.matmul %602, %603, %cst_203 {dimension_numbers = #tpu.dot_dimension_numbers<[1], [0], [0], [1], [0, 0, 1, 1], [], []>} : vector<16x32xf32>, vector<32x32xf32>, vector<16x32xf32> -> vector<16x32xf32>
    %c424 = arith.constant 424 : index
    %c0_204 = arith.constant 0 : index
    %605 = vector.load %arg3[%c424, %c0_204] : memref<432x32xf32, #tpu.memory_space<vmem>>, vector<1x32xf32>
    %606 = vector.broadcast %605 : vector<1x32xf32> to vector<16x32xf32>
    %607 = arith.addf %604, %606 : vector<16x32xf32>
    %608 = arith.addf %607, %520 : vector<16x32xf32>
    %c425 = arith.constant 425 : index
    %c0_205 = arith.constant 0 : index
    %609 = vector.load %arg3[%c425, %c0_205] : memref<432x32xf32, #tpu.memory_space<vmem>>, vector<1x32xf32>
    %c426 = arith.constant 426 : index
    %c0_206 = arith.constant 0 : index
    %610 = vector.load %arg3[%c426, %c0_206] : memref<432x32xf32, #tpu.memory_space<vmem>>, vector<1x32xf32>
    %cst_207 = arith.constant dense<0.000000e+00> : vector<16xf32>
    %611 = vector.multi_reduction <add>, %608, %cst_207 [1] : vector<16x32xf32> to vector<16xf32>
    %612 = vector.shape_cast %611 : vector<16xf32> to vector<16x1xf32>
    %cst_208 = arith.constant 3.200000e+01 : f32
    %613 = vector.broadcast %cst_208 : f32 to vector<16x1xf32>
    %614 = arith.divf %612, %613 : vector<16x1xf32>
    %615 = vector.broadcast %614 : vector<16x1xf32> to vector<16x32xf32>
    %616 = arith.subf %608, %615 : vector<16x32xf32>
    %617 = arith.mulf %616, %616 : vector<16x32xf32>
    %cst_209 = arith.constant dense<0.000000e+00> : vector<16xf32>
    %618 = vector.multi_reduction <add>, %617, %cst_209 [1] : vector<16x32xf32> to vector<16xf32>
    %619 = vector.shape_cast %618 : vector<16xf32> to vector<16x1xf32>
    %cst_210 = arith.constant 3.200000e+01 : f32
    %620 = vector.broadcast %cst_210 : f32 to vector<16x1xf32>
    %621 = arith.divf %619, %620 : vector<16x1xf32>
    %cst_211 = arith.constant 9.99999996E-13 : f32
    %622 = vector.broadcast %cst_211 : f32 to vector<16x1xf32>
    %623 = arith.addf %621, %622 : vector<16x1xf32>
    %624 = math.rsqrt %623 : vector<16x1xf32>
    %625 = vector.broadcast %624 : vector<16x1xf32> to vector<16x32xf32>
    %626 = arith.mulf %616, %625 : vector<16x32xf32>
    %627 = vector.broadcast %609 : vector<1x32xf32> to vector<16x32xf32>
    %628 = arith.mulf %626, %627 : vector<16x32xf32>
    %629 = vector.broadcast %610 : vector<1x32xf32> to vector<16x32xf32>
    %630 = arith.addf %628, %629 : vector<16x32xf32>
    %c120_212 = arith.constant 120 : index
    %c0_213 = arith.constant 0 : index
    %631 = vector.load %arg4[%c120_212, %c0_213] : memref<160x64xf32, #tpu.memory_space<vmem>>, vector<32x64xf32>
    %cst_214 = arith.constant dense<0.000000e+00> : vector<16x64xf32>
    %632 = tpu.matmul %630, %631, %cst_214 {dimension_numbers = #tpu.dot_dimension_numbers<[1], [0], [0], [1], [0, 0, 1, 1], [], []>} : vector<16x32xf32>, vector<32x64xf32>, vector<16x64xf32> -> vector<16x64xf32>
    %c152_215 = arith.constant 152 : index
    %c0_216 = arith.constant 0 : index
    %633 = vector.load %arg4[%c152_215, %c0_216] : memref<160x64xf32, #tpu.memory_space<vmem>>, vector<1x64xf32>
    %634 = vector.broadcast %633 : vector<1x64xf32> to vector<16x64xf32>
    %635 = arith.addf %632, %634 : vector<16x64xf32>
    %636 = arith.mulf %635, %635 : vector<16x64xf32>
    %637 = arith.mulf %635, %636 : vector<16x64xf32>
    %cst_217 = arith.constant 4.471500e-02 : f32
    %638 = vector.broadcast %cst_217 : f32 to vector<16x64xf32>
    %639 = arith.mulf %638, %637 : vector<16x64xf32>
    %640 = arith.addf %635, %639 : vector<16x64xf32>
    %cst_218 = arith.constant 0.797884583 : f32
    %641 = vector.broadcast %cst_218 : f32 to vector<16x64xf32>
    %642 = arith.mulf %641, %640 : vector<16x64xf32>
    %643 = math.tanh %642 : vector<16x64xf32>
    %cst_219 = arith.constant 1.000000e+00 : f32
    %644 = vector.broadcast %cst_219 : f32 to vector<16x64xf32>
    %645 = arith.addf %644, %643 : vector<16x64xf32>
    %cst_220 = arith.constant 5.000000e-01 : f32
    %646 = vector.broadcast %cst_220 : f32 to vector<16x64xf32>
    %647 = arith.mulf %646, %645 : vector<16x64xf32>
    %648 = arith.mulf %635, %647 : vector<16x64xf32>
    %c360 = arith.constant 360 : index
    %c0_221 = arith.constant 0 : index
    %649 = vector.load %arg3[%c360, %c0_221] : memref<432x32xf32, #tpu.memory_space<vmem>>, vector<64x32xf32>
    %cst_222 = arith.constant dense<0.000000e+00> : vector<16x32xf32>
    %650 = tpu.matmul %648, %649, %cst_222 {dimension_numbers = #tpu.dot_dimension_numbers<[1], [0], [0], [1], [0, 0, 1, 1], [], []>} : vector<16x64xf32>, vector<64x32xf32>, vector<16x32xf32> -> vector<16x32xf32>
    %c427 = arith.constant 427 : index
    %c0_223 = arith.constant 0 : index
    %651 = vector.load %arg3[%c427, %c0_223] : memref<432x32xf32, #tpu.memory_space<vmem>>, vector<1x32xf32>
    %652 = vector.broadcast %651 : vector<1x32xf32> to vector<16x32xf32>
    %653 = arith.addf %650, %652 : vector<16x32xf32>
    %654 = arith.addf %653, %630 : vector<16x32xf32>
    %c428 = arith.constant 428 : index
    %c0_224 = arith.constant 0 : index
    %655 = vector.load %arg3[%c428, %c0_224] : memref<432x32xf32, #tpu.memory_space<vmem>>, vector<1x32xf32>
    %c429 = arith.constant 429 : index
    %c0_225 = arith.constant 0 : index
    %656 = vector.load %arg3[%c429, %c0_225] : memref<432x32xf32, #tpu.memory_space<vmem>>, vector<1x32xf32>
    %cst_226 = arith.constant dense<0.000000e+00> : vector<16xf32>
    %657 = vector.multi_reduction <add>, %654, %cst_226 [1] : vector<16x32xf32> to vector<16xf32>
    %658 = vector.shape_cast %657 : vector<16xf32> to vector<16x1xf32>
    %cst_227 = arith.constant 3.200000e+01 : f32
    %659 = vector.broadcast %cst_227 : f32 to vector<16x1xf32>
    %660 = arith.divf %658, %659 : vector<16x1xf32>
    %661 = vector.broadcast %660 : vector<16x1xf32> to vector<16x32xf32>
    %662 = arith.subf %654, %661 : vector<16x32xf32>
    %663 = arith.mulf %662, %662 : vector<16x32xf32>
    %cst_228 = arith.constant dense<0.000000e+00> : vector<16xf32>
    %664 = vector.multi_reduction <add>, %663, %cst_228 [1] : vector<16x32xf32> to vector<16xf32>
    %665 = vector.shape_cast %664 : vector<16xf32> to vector<16x1xf32>
    %cst_229 = arith.constant 3.200000e+01 : f32
    %666 = vector.broadcast %cst_229 : f32 to vector<16x1xf32>
    %667 = arith.divf %665, %666 : vector<16x1xf32>
    %cst_230 = arith.constant 9.99999996E-13 : f32
    %668 = vector.broadcast %cst_230 : f32 to vector<16x1xf32>
    %669 = arith.addf %667, %668 : vector<16x1xf32>
    %670 = math.rsqrt %669 : vector<16x1xf32>
    %671 = vector.broadcast %670 : vector<16x1xf32> to vector<16x32xf32>
    %672 = arith.mulf %662, %671 : vector<16x32xf32>
    %673 = vector.broadcast %655 : vector<1x32xf32> to vector<16x32xf32>
    %674 = arith.mulf %672, %673 : vector<16x32xf32>
    %675 = vector.broadcast %656 : vector<1x32xf32> to vector<16x32xf32>
    %676 = arith.addf %674, %675 : vector<16x32xf32>
    %677 = vector.extract_strided_slice %676 {offsets = [0, 0], sizes = [1, 32], strides = [1, 1]} : vector<16x32xf32> to vector<1x32xf32>
    %678 = vector.extract_strided_slice %676 {offsets = [8, 0], sizes = [1, 32], strides = [1, 1]} : vector<16x32xf32> to vector<1x32xf32>
    %679 = tpu.concatenate %677, %678 in 0 : vector<1x32xf32>, vector<1x32xf32> -> vector<2x32xf32>
    %680 = arith.addf %340, %679 : vector<2x32xf32>
    %c0_231 = arith.constant 0 : index
    %c0_232 = arith.constant 0 : index
    %681 = vector.load %arg5[%c0_231, %c0_232] : memref<8x32xf32, #tpu.memory_space<vmem>>, vector<2x32xf32>
    %c2_233 = arith.constant 2 : index
    %c0_234 = arith.constant 0 : index
    %682 = vector.load %arg5[%c2_233, %c0_234] : memref<8x32xf32, #tpu.memory_space<vmem>>, vector<1x32xf32>
    %cst_235 = arith.constant dense<0.000000e+00> : vector<2x2xf32>
    %683 = tpu.matmul %680, %681, %cst_235 {dimension_numbers = #tpu.dot_dimension_numbers<[1], [1], [0], [0], [0, 0, 1, 0], [], []>} : vector<2x32xf32>, vector<2x32xf32>, vector<2x2xf32> -> vector<2x2xf32>
    %684 = vector.extract_strided_slice %682 {offsets = [0, 0], sizes = [1, 2], strides = [1, 1]} : vector<1x32xf32> to vector<1x2xf32>
    %685 = vector.broadcast %684 : vector<1x2xf32> to vector<2x2xf32>
    %686 = arith.addf %683, %685 : vector<2x2xf32>
    %c0_236 = arith.constant 0 : index
    %c0_237 = arith.constant 0 : index
    %687 = vector.load %arg6[%c0_236, %c0_237] : memref<2x2xf32, #tpu.memory_space<vmem>>, vector<2x2xf32>
    tpu.vector_store %arg6[%c0_236, %c0_237], %686 {strides = array<i32>} : memref<2x2xf32, #tpu.memory_space<vmem>>, vector<2x2xf32>,
    return
  }
}

</mosaic_0001>

<llo_original>
// kernel: auto_biencoder_sum_forward.1
$region0: #{auto_biencoder_sum_forward.1}
  #allocation0 [shape = 'u32[]', space=smem, size = 0x4, offset = 0x4, fixed_abs, tag = 'smem constant byte address 0x4 - core index']
  #allocation1 [shape = 'u32[144,128]{1,0:T(1,128)}', space=vmem, size = 0x12000, scoped, tag = 'internal scratch']
  %s0 = inlined_call_operand.vmem [shape: f32[32,32], index: 0, kind: input, shape index: {}]
  %s1 = inlined_call_operand.vmem [shape: f32[4,8], index: 1, kind: input, shape index: {}]
  %s2 = inlined_call_operand.vmem [shape: f32[160,96], index: 2, kind: input, shape index: {}]
  %s3 = inlined_call_operand.vmem [shape: f32[432,32], index: 3, kind: input, shape index: {}]
  %s4 = inlined_call_operand.vmem [shape: f32[160,64], index: 4, kind: input, shape index: {}]
  %s5 = inlined_call_operand.vmem [shape: f32[8,32], index: 5, kind: input, shape index: {}]
  %s6 = inlined_call_operand.hbm [shape: f32[2,2], index: 6, kind: output, shape index: {}]
  %s7 = sld [smem:[#allocation0]]
  $region34: #{auto_biencoder_sum_forward.1} parent=0
    _
  %s9 = ssub.s32 1, %s7
  %s10 = scalar_select 0, %s9, %s7
  $region1: #{auto_biencoder_sum_forward.1} parent=0
    #allocation2 [shape = 'u8[1024]{0}', space=vmem, size = 0x400, scoped, tag = 'output window, operand 0, single buffered']
    #allocation3 [shape = 's32[1]{0}', space=sflag, size = 0x4, scoped, tag = 'scoped memory for auto_biencoder_sum_forward.1']
    %11 = vsyncpa [#allocation3], 0
    // Predicated region
    $region2: #{auto_biencoder_sum_forward.1} parent=1 // pred_check
      _
    $region3: #{auto_biencoder_sum_forward.1} parent=1 // pred_check_branch
      %13 = sbr.rel (0) target = $region5
    $region4: #{auto_biencoder_sum_forward.1} parent=1 // pred_region
      _
    $region5: #{auto_biencoder_sum_forward.1} parent=1 // pred_fallthru
      _
    // Predicated region
    $region6: #{auto_biencoder_sum_forward.1} parent=1 // pred_check
      _
    $region7: #{auto_biencoder_sum_forward.1} parent=1 // pred_check_branch
      %15 = sbr.rel (0) target = $region9
    $region8: #{auto_biencoder_sum_forward.1} parent=1 // pred_region
      _
    $region9: #{auto_biencoder_sum_forward.1} parent=1 // pred_fallthru
      _
    // Predicated region
    $region10: #{auto_biencoder_sum_forward.1} parent=1 // pred_check
      _
    $region11: #{auto_biencoder_sum_forward.1} parent=1 // pred_check_branch
      %17 = sbr.rel (0) target = $region13
    $region12: #{auto_biencoder_sum_forward.1} parent=1 // pred_region
      _
    $region13: #{auto_biencoder_sum_forward.1} parent=1 // pred_fallthru
      _
    // Predicated region
    $region14: #{auto_biencoder_sum_forward.1} parent=1 // pred_check
      _
    $region15: #{auto_biencoder_sum_forward.1} parent=1 // pred_check_branch
      %19 = sbr.rel (0) target = $region17
    $region16: #{auto_biencoder_sum_forward.1} parent=1 // pred_region
      _
    $region17: #{auto_biencoder_sum_forward.1} parent=1 // pred_fallthru
      _
    // Predicated region
    $region18: #{auto_biencoder_sum_forward.1} parent=1 // pred_check
      _
    $region19: #{auto_biencoder_sum_forward.1} parent=1 // pred_check_branch
      %21 = sbr.rel (0) target = $region21
    $region20: #{auto_biencoder_sum_forward.1} parent=1 // pred_region
      _
    $region21: #{auto_biencoder_sum_forward.1} parent=1 // pred_fallthru
      _
    // Predicated region
    $region22: #{auto_biencoder_sum_forward.1} parent=1 // pred_check
      _
    $region23: #{auto_biencoder_sum_forward.1} parent=1 // pred_check_branch
      %23 = sbr.rel (0) target = $region25
    $region24: #{auto_biencoder_sum_forward.1} parent=1 // pred_region
      _
    $region25: #{auto_biencoder_sum_forward.1} parent=1 // pred_fallthru
      _
    %v24 = vld [vmem:[%s1] sm:$0x3]
    %v25 = vld [vmem:[%s0] sm:$0xff]
    %v26 = vld [vmem:[%s0 + $0x8] sm:$0xff]
    %v27 = vld [vmem:[%s3] sm:$0x1]
    %v28 = vld [vmem:[%s3 + $0x1] sm:$0x1]
    %vm29 = vcmask 261120
    %v30 = vsel %vm29, %v25, 0.0
    %31 = vadd.xlane.f32.xlu0 %v30
    %v32 = vpop.xlane.xlu0 %31
    %v33 = vsel %vm29, %v26, 0.0
    %34 = vadd.xlane.f32.xlu0 %v33
    %v35 = vpop.xlane.xlu0 %34
    %v36 = vrcp.pop 32.0
    %v37 = vmul.f32 %v32, %v36
    %v38 = vmul.f32 %v35, %v36
    %v39 = vsub.f32 %v25, %v37
    %v40 = vsub.f32 %v26, %v38
    %v41 = vmul.f32 %v39, %v39
    %v42 = vmul.f32 %v40, %v40
    %v43 = vsel %vm29, %v41, 0.0
    %44 = vadd.xlane.f32.xlu0 %v43
    %v45 = vpop.xlane.xlu0 %44
    %v46 = vsel %vm29, %v42, 0.0
    %47 = vadd.xlane.f32.xlu0 %v46
    %v48 = vpop.xlane.xlu0 %47
    %v49 = vmul.f32 %v45, %v36
    %v50 = vmul.f32 %v48, %v36
    %v51 = vadd.f32 %v49, 1e-12
    %v52 = vadd.f32 %v50, 1e-12
    %v53 = vrsqrt.pop %v51
    %v54 = vrsqrt.pop %v52
    %v55 = vmul.f32 %v39, %v53
    %v56 = vmul.f32 %v40, %v54
    %v57 = vlaneseq
    %v58 = vshrl.u32 %v57, 7
    %v59 = vsub.s32 0, %v58
    %v60 = vrot.slane %v27, %v59
    %v61 = vmul.f32 %v55, %v60
    %v62 = vmul.f32 %v56, %v60
    %v63 = vlaneseq
    %v64 = vshrl.u32 %v63, 7
    %v65 = vsub.s32 0, %v64
    %v66 = vrot.slane %v28, %v65
    %v67 = vadd.f32 %v61, %v66
    %v68 = vadd.f32 %v62, %v66
    %v69 = vld [vmem:[%s2] sm:$0xff]
    %v70 = vld [vmem:[%s2 + $0x8] sm:$0xff]
    %v71 = vld [vmem:[%s2 + $0x10] sm:$0xff]
    %v72 = vld [vmem:[%s2 + $0x18] sm:$0xff]
    %v73 = vld [vmem:[%s2 + $0x20] sm:$0x1]
    %v74 = vlaneseq
    %v75 = vshrl.u32 %v74, 7
    %v76 = vsub.s32 0, %v75
    %v77 = vrot.slane %v73, %v76
    %v79 = vsel %vm29, %v67, 0
    %v82 = vsel %vm29, %v68, 0
    %84 = vmatprep.subr.mxu0 0.0
    %85 = vmatpush1.msra.mxu0 %v69
    %86 = vmatprep.subr.mxu0 0.0
    %87 = vmatpush1.msra.mxu0 %v70
    %88 = vmatprep.subr.mxu0 0.0
    %89 = vmatpush1.msra.mxu0 %v71
    %90 = vmatprep.subr.mxu0 0.0
    %91 = vmatpush1.msra.mxu0 %v72
    %92 = vmatprep.subr.mxu0 0.0
    %93 = vmatpush1.msra.mxu0 0.0
    %94 = vmatprep.subr.mxu0 0.0
    %95 = vmatpush1.msra.mxu0 0.0
    %96 = vmatprep.subr.mxu0 0.0
    %97 = vmatpush1.msra.mxu0 0.0
    %98 = vmatprep.subr.mxu0 0.0
    %99 = vmatpush1.msra.mxu0 0.0
    %100 = vmatprep.subr.mxu0 0.0
    %101 = vmatpush1.msra.mxu0 0.0
    %102 = vmatprep.subr.mxu0 0.0
    %103 = vmatpush1.msra.mxu0 0.0
    %104 = vmatprep.subr.mxu0 0.0
    %105 = vmatpush1.msra.mxu0 0.0
    %106 = vmatprep.subr.mxu0 0.0
    %107 = vmatpush1.msra.mxu0 0.0
    %108 = vmatprep.subr.mxu0 0.0
    %109 = vmatpush1.msra.mxu0 0.0
    %110 = vmatprep.subr.mxu0 0.0
    %111 = vmatpush1.msra.mxu0 0.0
    %112 = vmatprep.subr.mxu0 0.0
    %113 = vmatpush1.msra.mxu0 0.0
    %114 = vmatprep.subr.mxu0 0.0
    %115 = vmatpush1.msra.mxu0 0.0
    %116 = vmatprep.subr.mxu0 0.0
    %117 = vmatpush1.msra.mxu0 0.0
    %118 = vmatprep.subr.mxu0 0.0
    %119 = vmatpush1.msra.mxu0 0.0
    %120 = vmatprep.subr.mxu0 0.0
    %121 = vmatpush1.msra.mxu0 0.0
    %122 = vmatprep.subr.mxu0 0.0
    %123 = vmatpush1.msra.mxu0 0.0
    %124 = vmatprep.subr.mxu0 0.0
    %125 = vmatpush1.msra.mxu0 0.0
    %126 = vmatprep.subr.mxu0 0.0
    %127 = vmatpush1.msra.mxu0 0.0
    %128 = vmatprep.subr.mxu0 0.0
    %129 = vmatpush1.msra.mxu0 0.0
    %130 = vmatprep.subr.mxu0 0.0
    %131 = vmatpush1.msra.mxu0 0.0
    %132 = vmatprep.subr.mxu0 0.0
    %133 = vmatpush1.msra.mxu0 0.0
    %134 = vmatprep.subr.mxu0 0.0
    %135 = vmatpush1.msra.mxu0 0.0
    %136 = vmatprep.subr.mxu0 0.0
    %137 = vmatpush1.msra.mxu0 0.0
    %138 = vmatprep.subr.mxu0 0.0
    %139 = vmatpush1.msra.mxu0 0.0
    %140 = vmatprep.subr.mxu0 0.0
    %141 = vmatpush1.msra.mxu0 0.0
    %142 = vmatprep.subr.mxu0 0.0
    %143 = vmatpush1.msra.mxu0 0.0
    %144 = vmatprep.subr.mxu0 0.0
    %145 = vmatpush1.msra.mxu0 0.0
    %146 = vmatprep.subr.mxu0 0.0
    %147 = vmatpush1.msra.mxu0 0.0
    %148 = vmatprep.mubr.f32.mxu0 0.0
    %149 = vmatmul.mubr.f32.gmra.mrb[0].mxu0 %v79
    %v150 = vpop.f32.mrb[0].mxu0
    %v151 = vadd.f32 %v77, %v150
    %v152 = vpop.f32.mrb[0].mxu0
    %153 = vmatprep.mubr.f32.mxu0 0.0
    %154 = vmatmul.mubr.f32.gmra.mrb[0].mxu0 %v82
    %v155 = vpop.f32.mrb[0].mxu0
    %v156 = vadd.f32 %v77, %v155
    %v157 = vpop.f32.mrb[0].mxu0
    %158 = vdwg.mxu0
    %160 = vrot.lane.b32.xlu0 %v151, 96
    %v161 = vpop.permute.xlu0 %160
    %vm162 = vcmask 130048
    %v163 = vsel %vm162, %v151, 0
    %v165 = vsel %vm162, %v161, 0
    %167 = vmatprep.subr.mxu0 0.0
    %168 = vmatpush1.xpose.msra.mxu0 %v165
    %169 = vmatprep.subr.mxu0 0.0
    %170 = vmatpush1.xpose.msra.mxu0 0.0
    %171 = vmatprep.subr.mxu0 0.0
    %172 = vmatpush1.xpose.msra.mxu0 0.0
    %173 = vmatprep.subr.mxu0 0.0
    %174 = vmatpush1.xpose.msra.mxu0 0.0
    %175 = vmatprep.subr.mxu0 0.0
    %176 = vmatpush1.xpose.msra.mxu0 0.0
    %177 = vmatprep.subr.mxu0 0.0
    %178 = vmatpush1.xpose.msra.mxu0 0.0
    %179 = vmatprep.subr.mxu0 0.0
    %180 = vmatpush1.xpose.msra.mxu0 0.0
    %181 = vmatprep.subr.mxu0 0.0
    %182 = vmatpush1.xpose.msra.mxu0 0.0
    %183 = vmatprep.subr.mxu0 0.0
    %184 = vmatpush1.xpose.msra.mxu0 0.0
    %185 = vmatprep.subr.mxu0 0.0
    %186 = vmatpush1.xpose.msra.mxu0 0.0
    %187 = vmatprep.subr.mxu0 0.0
    %188 = vmatpush1.xpose.msra.mxu0 0.0
    %189 = vmatprep.subr.mxu0 0.0
    %190 = vmatpush1.xpose.msra.mxu0 0.0
    %191 = vmatprep.subr.mxu0 0.0
    %192 = vmatpush1.xpose.msra.mxu0 0.0
    %193 = vmatprep.subr.mxu0 0.0
    %194 = vmatpush1.xpose.msra.mxu0 0.0
    %195 = vmatprep.subr.mxu0 0.0
    %196 = vmatpush1.xpose.msra.mxu0 0.0
    %197 = vmatprep.subr.mxu0 0.0
    %198 = vmatpush1.xpose.msra.mxu0 0.0
    %199 = vmatprep.subr.mxu0 0.0
    %200 = vmatpush1.xpose.msra.mxu0 0.0
    %201 = vmatprep.subr.mxu0 0.0
    %202 = vmatpush1.xpose.msra.mxu0 0.0
    %203 = vmatprep.subr.mxu0 0.0
    %204 = vmatpush1.xpose.msra.mxu0 0.0
    %205 = vmatprep.subr.mxu0 0.0
    %206 = vmatpush1.xpose.msra.mxu0 0.0
    %207 = vmatprep.subr.mxu0 0.0
    %208 = vmatpush1.xpose.msra.mxu0 0.0
    %209 = vmatprep.subr.mxu0 0.0
    %210 = vmatpush1.xpose.msra.mxu0 0.0
    %211 = vmatprep.subr.mxu0 0.0
    %212 = vmatpush1.xpose.msra.mxu0 0.0
    %213 = vmatprep.subr.mxu0 0.0
    %214 = vmatpush1.xpose.msra.mxu0 0.0
    %215 = vmatprep.subr.mxu0 0.0
    %216 = vmatpush1.xpose.msra.mxu0 0.0
    %217 = vmatprep.subr.mxu0 0.0
    %218 = vmatpush1.xpose.msra.mxu0 0.0
    %219 = vmatprep.subr.mxu0 0.0
    %220 = vmatpush1.xpose.msra.mxu0 0.0
    %221 = vmatprep.subr.mxu0 0.0
    %222 = vmatpush1.xpose.msra.mxu0 0.0
    %223 = vmatprep.subr.mxu0 0.0
    %224 = vmatpush1.xpose.msra.mxu0 0.0
    %225 = vmatprep.subr.mxu0 0.0
    %226 = vmatpush1.xpose.msra.mxu0 0.0
    %227 = vmatprep.subr.mxu0 0.0
    %228 = vmatpush1.xpose.msra.mxu0 0.0
    %229 = vmatprep.subr.mxu0 0.0
    %230 = vmatpush1.xpose.msra.mxu0 0.0
    %231 = vmatprep.mubr.f32.mxu0 0.0
    %232 = vmatmul.mubr.f32.gmra.mrb[0].mxu0 %v163
    %v233 = vpop.f32.mrb[0].mxu0
    %v234 = vadd.f32 0.0, %v233
    %v235 = vpop.f32.mrb[0].mxu0
    %236 = vdwg.mxu0
    %v237 = vmul.f32 %v234, 0.25
    %v238 = vlaneseq
    %v239 = vshrl.u32 %v238, 7
    %v240 = vsub.s32 0, %v239
    %v241 = vrot.slane %v24, %v240
    %v242 = vadd.f32 %v237, %v241
    %vm243 = vcmask 64512
    %v244 = vsel %vm243, %v242, -inf
    %245 = vmax.xlane.f32.xlu0 %v244
    %v246 = vpop.xlane.xlu0 %245
    %v247 = vsub.f32 %v242, %v246
    %v248 = vmul.f32 %v247, 1.442695
    %v249 = vpow.pop %v248
    %v250 = vsel %vm243, %v249, 0.0
    %251 = vadd.xlane.f32.xlu0 %v250
    %v252 = vpop.xlane.xlu0 %251
    %v253 = vrcp.pop %v252
    %v254 = vmul.f32 %v249, %v253
    %255 = vrot.lane.b32.xlu0 %v151, 64
    %v256 = vpop.permute.xlu0 %255
    %v259 = vsel %vm243, %v254, 0
    %261 = vmatprep.subr.mxu0 0.0
    %262 = vmatpush1.msra.mxu0 %v256
    %263 = vmatprep.subr.mxu0 0.0
    %264 = vmatpush1.msra.mxu0 0.0
    %265 = vmatprep.subr.mxu0 0.0
    %266 = vmatpush1.msra.mxu0 0.0
    %267 = vmatprep.subr.mxu0 0.0
    %268 = vmatpush1.msra.mxu0 0.0
    %269 = vmatprep.subr.mxu0 0.0
    %270 = vmatpush1.msra.mxu0 0.0
    %271 = vmatprep.subr.mxu0 0.0
    %272 = vmatpush1.msra.mxu0 0.0
    %273 = vmatprep.subr.mxu0 0.0
    %274 = vmatpush1.msra.mxu0 0.0
    %275 = vmatprep.subr.mxu0 0.0
    %276 = vmatpush1.msra.mxu0 0.0
    %277 = vmatprep.subr.mxu0 0.0
    %278 = vmatpush1.msra.mxu0 0.0
    %279 = vmatprep.subr.mxu0 0.0
    %280 = vmatpush1.msra.mxu0 0.0
    %281 = vmatprep.subr.mxu0 0.0
    %282 = vmatpush1.msra.mxu0 0.0
    %283 = vmatprep.subr.mxu0 0.0
    %284 = vmatpush1.msra.mxu0 0.0
    %285 = vmatprep.subr.mxu0 0.0
    %286 = vmatpush1.msra.mxu0 0.0
    %287 = vmatprep.subr.mxu0 0.0
    %288 = vmatpush1.msra.mxu0 0.0
    %289 = vmatprep.subr.mxu0 0.0
    %290 = vmatpush1.msra.mxu0 0.0
    %291 = vmatprep.subr.mxu0 0.0
    %292 = vmatpush1.msra.mxu0 0.0
    %293 = vmatprep.subr.mxu0 0.0
    %294 = vmatpush1.msra.mxu0 0.0
    %295 = vmatprep.subr.mxu0 0.0
    %296 = vmatpush1.msra.mxu0 0.0
    %297 = vmatprep.subr.mxu0 0.0
    %298 = vmatpush1.msra.mxu0 0.0
    %299 = vmatprep.subr.mxu0 0.0
    %300 = vmatpush1.msra.mxu0 0.0
    %301 = vmatprep.subr.mxu0 0.0
    %302 = vmatpush1.msra.mxu0 0.0
    %303 = vmatprep.subr.mxu0 0.0
    %304 = vmatpush1.msra.mxu0 0.0
    %305 = vmatprep.subr.mxu0 0.0
    %306 = vmatpush1.msra.mxu0 0.0
    %307 = vmatprep.subr.mxu0 0.0
    %308 = vmatpush1.msra.mxu0 0.0
    %309 = vmatprep.subr.mxu0 0.0
    %310 = vmatpush1.msra.mxu0 0.0
    %311 = vmatprep.subr.mxu0 0.0
    %312 = vmatpush1.msra.mxu0 0.0
    %313 = vmatprep.subr.mxu0 0.0
    %314 = vmatpush1.msra.mxu0 0.0
    %315 = vmatprep.subr.mxu0 0.0
    %316 = vmatpush1.msra.mxu0 0.0
    %317 = vmatprep.subr.mxu0 0.0
    %318 = vmatpush1.msra.mxu0 0.0
    %319 = vmatprep.subr.mxu0 0.0
    %320 = vmatpush1.msra.mxu0 0.0
    %321 = vmatprep.subr.mxu0 0.0
    %322 = vmatpush1.msra.mxu0 0.0
    %323 = vmatprep.subr.mxu0 0.0
    %324 = vmatpush1.msra.mxu0 0.0
    %325 = vmatprep.mubr.f32.mxu0 0.0
    %326 = vmatmul.mubr.f32.gmra.mrb[0].mxu0 %v259
    %v327 = vpop.f32.mrb[0].mxu0
    %v328 = vadd.f32 0.0, %v327
    %v329 = vpop.f32.mrb[0].mxu0
    %330 = vdwg.mxu0
    %331 = vrot.lane.b32.xlu0 %v151, 112
    %v332 = vpop.permute.xlu0 %331
    %333 = vrot.lane.b32.xlu0 %v151, 80
    %v334 = vpop.permute.xlu0 %333
    %v335 = vsel %vm162, %v332, 0
    %v337 = vsel %vm162, %v334, 0
    %339 = vmatprep.subr.mxu0 0.0
    %340 = vmatpush1.xpose.msra.mxu0 %v337
    %341 = vmatprep.subr.mxu0 0.0
    %342 = vmatpush1.xpose.msra.mxu0 0.0
    %343 = vmatprep.subr.mxu0 0.0
    %344 = vmatpush1.xpose.msra.mxu0 0.0
    %345 = vmatprep.subr.mxu0 0.0
    %346 = vmatpush1.xpose.msra.mxu0 0.0
    %347 = vmatprep.subr.mxu0 0.0
    %348 = vmatpush1.xpose.msra.mxu0 0.0
    %349 = vmatprep.subr.mxu0 0.0
    %350 = vmatpush1.xpose.msra.mxu0 0.0
    %351 = vmatprep.subr.mxu0 0.0
    %352 = vmatpush1.xpose.msra.mxu0 0.0
    %353 = vmatprep.subr.mxu0 0.0
    %354 = vmatpush1.xpose.msra.mxu0 0.0
    %355 = vmatprep.subr.mxu0 0.0
    %356 = vmatpush1.xpose.msra.mxu0 0.0
    %357 = vmatprep.subr.mxu0 0.0
    %358 = vmatpush1.xpose.msra.mxu0 0.0
    %359 = vmatprep.subr.mxu0 0.0
    %360 = vmatpush1.xpose.msra.mxu0 0.0
    %361 = vmatprep.subr.mxu0 0.0
    %362 = vmatpush1.xpose.msra.mxu0 0.0
    %363 = vmatprep.subr.mxu0 0.0
    %364 = vmatpush1.xpose.msra.mxu0 0.0
    %365 = vmatprep.subr.mxu0 0.0
    %366 = vmatpush1.xpose.msra.mxu0 0.0
    %367 = vmatprep.subr.mxu0 0.0
    %368 = vmatpush1.xpose.msra.mxu0 0.0
    %369 = vmatprep.subr.mxu0 0.0
    %370 = vmatpush1.xpose.msra.mxu0 0.0
    %371 = vmatprep.subr.mxu0 0.0
    %372 = vmatpush1.xpose.msra.mxu0 0.0
    %373 = vmatprep.subr.mxu0 0.0
    %374 = vmatpush1.xpose.msra.mxu0 0.0
    %375 = vmatprep.subr.mxu0 0.0
    %376 = vmatpush1.xpose.msra.mxu0 0.0
    %377 = vmatprep.subr.mxu0 0.0
    %378 = vmatpush1.xpose.msra.mxu0 0.0
    %379 = vmatprep.subr.mxu0 0.0
    %380 = vmatpush1.xpose.msra.mxu0 0.0
    %381 = vmatprep.subr.mxu0 0.0
    %382 = vmatpush1.xpose.msra.mxu0 0.0
    %383 = vmatprep.subr.mxu0 0.0
    %384 = vmatpush1.xpose.msra.mxu0 0.0
    %385 = vmatprep.subr.mxu0 0.0
    %386 = vmatpush1.xpose.msra.mxu0 0.0
    %387 = vmatprep.subr.mxu0 0.0
    %388 = vmatpush1.xpose.msra.mxu0 0.0
    %389 = vmatprep.subr.mxu0 0.0
    %390 = vmatpush1.xpose.msra.mxu0 0.0
    %391 = vmatprep.subr.mxu0 0.0
    %392 = vmatpush1.xpose.msra.mxu0 0.0
    %393 = vmatprep.subr.mxu0 0.0
    %394 = vmatpush1.xpose.msra.mxu0 0.0
    %395 = vmatprep.subr.mxu0 0.0
    %396 = vmatpush1.xpose.msra.mxu0 0.0
    %397 = vmatprep.subr.mxu0 0.0
    %398 = vmatpush1.xpose.msra.mxu0 0.0
    %399 = vmatprep.subr.mxu0 0.0
    %400 = vmatpush1.xpose.msra.mxu0 0.0
    %401 = vmatprep.subr.mxu0 0.0
    %402 = vmatpush1.xpose.msra.mxu0 0.0
    %403 = vmatprep.mubr.f32.mxu0 0.0
    %404 = vmatmul.mubr.f32.gmra.mrb[0].mxu0 %v335
    %v405 = vpop.f32.mrb[0].mxu0
    %v406 = vadd.f32 0.0, %v405
    %v407 = vpop.f32.mrb[0].mxu0
    %408 = vdwg.mxu0
    %v409 = vmul.f32 %v406, 0.25
    %v410 = vadd.f32 %v409, %v241
    %v411 = vsel %vm243, %v410, -inf
    %412 = vmax.xlane.f32.xlu0 %v411
    %v413 = vpop.xlane.xlu0 %412
    %v414 = vsub.f32 %v410, %v413
    %v415 = vmul.f32 %v414, 1.442695
    %v416 = vpow.pop %v415
    %v417 = vsel %vm243, %v416, 0.0
    %418 = vadd.xlane.f32.xlu0 %v417
    %v419 = vpop.xlane.xlu0 %418
    %v420 = vrcp.pop %v419
    %v421 = vmul.f32 %v416, %v420
    %422 = vrot.lane.b32.xlu0 %v151, 48
    %v423 = vpop.permute.xlu0 %422
    %v426 = vsel %vm243, %v421, 0
    %428 = vmatprep.subr.mxu0 0.0
    %429 = vmatpush1.msra.mxu0 %v423
    %430 = vmatprep.subr.mxu0 0.0
    %431 = vmatpush1.msra.mxu0 0.0
    %432 = vmatprep.subr.mxu0 0.0
    %433 = vmatpush1.msra.mxu0 0.0
    %434 = vmatprep.subr.mxu0 0.0
    %435 = vmatpush1.msra.mxu0 0.0
    %436 = vmatprep.subr.mxu0 0.0
    %437 = vmatpush1.msra.mxu0 0.0
    %438 = vmatprep.subr.mxu0 0.0
    %439 = vmatpush1.msra.mxu0 0.0
    %440 = vmatprep.subr.mxu0 0.0
    %441 = vmatpush1.msra.mxu0 0.0
    %442 = vmatprep.subr.mxu0 0.0
    %443 = vmatpush1.msra.mxu0 0.0
    %444 = vmatprep.subr.mxu0 0.0
    %445 = vmatpush1.msra.mxu0 0.0
    %446 = vmatprep.subr.mxu0 0.0
    %447 = vmatpush1.msra.mxu0 0.0
    %448 = vmatprep.subr.mxu0 0.0
    %449 = vmatpush1.msra.mxu0 0.0
    %450 = vmatprep.subr.mxu0 0.0
    %451 = vmatpush1.msra.mxu0 0.0
    %452 = vmatprep.subr.mxu0 0.0
    %453 = vmatpush1.msra.mxu0 0.0
    %454 = vmatprep.subr.mxu0 0.0
    %455 = vmatpush1.msra.mxu0 0.0
    %456 = vmatprep.subr.mxu0 0.0
    %457 = vmatpush1.msra.mxu0 0.0
    %458 = vmatprep.subr.mxu0 0.0
    %459 = vmatpush1.msra.mxu0 0.0
    %460 = vmatprep.subr.mxu0 0.0
    %461 = vmatpush1.msra.mxu0 0.0
    %462 = vmatprep.subr.mxu0 0.0
    %463 = vmatpush1.msra.mxu0 0.0
    %464 = vmatprep.subr.mxu0 0.0
    %465 = vmatpush1.msra.mxu0 0.0
    %466 = vmatprep.subr.mxu0 0.0
    %467 = vmatpush1.msra.mxu0 0.0
    %468 = vmatprep.subr.mxu0 0.0
    %469 = vmatpush1.msra.mxu0 0.0
    %470 = vmatprep.subr.mxu0 0.0
    %471 = vmatpush1.msra.mxu0 0.0
    %472 = vmatprep.subr.mxu0 0.0
    %473 = vmatpush1.msra.mxu0 0.0
    %474 = vmatprep.subr.mxu0 0.0
    %475 = vmatpush1.msra.mxu0 0.0
    %476 = vmatprep.subr.mxu0 0.0
    %477 = vmatpush1.msra.mxu0 0.0
    %478 = vmatprep.subr.mxu0 0.0
    %479 = vmatpush1.msra.mxu0 0.0
    %480 = vmatprep.subr.mxu0 0.0
    %481 = vmatpush1.msra.mxu0 0.0
    %482 = vmatprep.subr.mxu0 0.0
    %483 = vmatpush1.msra.mxu0 0.0
    %484 = vmatprep.subr.mxu0 0.0
    %485 = vmatpush1.msra.mxu0 0.0
    %486 = vmatprep.subr.mxu0 0.0
    %487 = vmatpush1.msra.mxu0 0.0
    %488 = vmatprep.subr.mxu0 0.0
    %489 = vmatpush1.msra.mxu0 0.0
    %490 = vmatprep.subr.mxu0 0.0
    %491 = vmatpush1.msra.mxu0 0.0
    %492 = vmatprep.mubr.f32.mxu0 0.0
    %493 = vmatmul.mubr.f32.gmra.mrb[0].mxu0 %v426
    %v494 = vpop.f32.mrb[0].mxu0
    %v495 = vadd.f32 0.0, %v494
    %v496 = vpop.f32.mrb[0].mxu0
    %497 = vdwg.mxu0
    %499 = vrot.lane.b32.xlu0 %v495, 16
    %v500 = vpop.permute.xlu0 %499
    %v502 = vsel %vm162, %v328, %v500
    %504 = vrot.lane.b32.xlu0 %v156, 96
    %v505 = vpop.permute.xlu0 %504
    %v506 = vsel %vm162, %v156, 0
    %v508 = vsel %vm162, %v505, 0
    %510 = vmatprep.subr.mxu0 0.0
    %511 = vmatpush1.xpose.msra.mxu0 %v508
    %512 = vmatprep.subr.mxu0 0.0
    %513 = vmatpush1.xpose.msra.mxu0 0.0
    %514 = vmatprep.subr.mxu0 0.0
    %515 = vmatpush1.xpose.msra.mxu0 0.0
    %516 = vmatprep.subr.mxu0 0.0
    %517 = vmatpush1.xpose.msra.mxu0 0.0
    %518 = vmatprep.subr.mxu0 0.0
    %519 = vmatpush1.xpose.msra.mxu0 0.0
    %520 = vmatprep.subr.mxu0 0.0
    %521 = vmatpush1.xpose.msra.mxu0 0.0
    %522 = vmatprep.subr.mxu0 0.0
    %523 = vmatpush1.xpose.msra.mxu0 0.0
    %524 = vmatprep.subr.mxu0 0.0
    %525 = vmatpush1.xpose.msra.mxu0 0.0
    %526 = vmatprep.subr.mxu0 0.0
    %527 = vmatpush1.xpose.msra.mxu0 0.0
    %528 = vmatprep.subr.mxu0 0.0
    %529 = vmatpush1.xpose.msra.mxu0 0.0
    %530 = vmatprep.subr.mxu0 0.0
    %531 = vmatpush1.xpose.msra.mxu0 0.0
    %532 = vmatprep.subr.mxu0 0.0
    %533 = vmatpush1.xpose.msra.mxu0 0.0
    %534 = vmatprep.subr.mxu0 0.0
    %535 = vmatpush1.xpose.msra.mxu0 0.0
    %536 = vmatprep.subr.mxu0 0.0
    %537 = vmatpush1.xpose.msra.mxu0 0.0
    %538 = vmatprep.subr.mxu0 0.0
    %539 = vmatpush1.xpose.msra.mxu0 0.0
    %540 = vmatprep.subr.mxu0 0.0
    %541 = vmatpush1.xpose.msra.mxu0 0.0
    %542 = vmatprep.subr.mxu0 0.0
    %543 = vmatpush1.xpose.msra.mxu0 0.0
    %544 = vmatprep.subr.mxu0 0.0
    %545 = vmatpush1.xpose.msra.mxu0 0.0
    %546 = vmatprep.subr.mxu0 0.0
    %547 = vmatpush1.xpose.msra.mxu0 0.0
    %548 = vmatprep.subr.mxu0 0.0
    %549 = vmatpush1.xpose.msra.mxu0 0.0
    %550 = vmatprep.subr.mxu0 0.0
    %551 = vmatpush1.xpose.msra.mxu0 0.0
    %552 = vmatprep.subr.mxu0 0.0
    %553 = vmatpush1.xpose.msra.mxu0 0.0
    %554 = vmatprep.subr.mxu0 0.0
    %555 = vmatpush1.xpose.msra.mxu0 0.0
    %556 = vmatprep.subr.mxu0 0.0
    %557 = vmatpush1.xpose.msra.mxu0 0.0
    %558 = vmatprep.subr.mxu0 0.0
    %559 = vmatpush1.xpose.msra.mxu0 0.0
    %560 = vmatprep.subr.mxu0 0.0
    %561 = vmatpush1.xpose.msra.mxu0 0.0
    %562 = vmatprep.subr.mxu0 0.0
    %563 = vmatpush1.xpose.msra.mxu0 0.0
    %564 = vmatprep.subr.mxu0 0.0
    %565 = vmatpush1.xpose.msra.mxu0 0.0
    %566 = vmatprep.subr.mxu0 0.0
    %567 = vmatpush1.xpose.msra.mxu0 0.0
    %568 = vmatprep.subr.mxu0 0.0
    %569 = vmatpush1.xpose.msra.mxu0 0.0
    %570 = vmatprep.subr.mxu0 0.0
    %571 = vmatpush1.xpose.msra.mxu0 0.0
    %572 = vmatprep.subr.mxu0 0.0
    %573 = vmatpush1.xpose.msra.mxu0 0.0
    %574 = vmatprep.mubr.f32.mxu0 0.0
    %575 = vmatmul.mubr.f32.gmra.mrb[0].mxu0 %v506
    %v576 = vpop.f32.mrb[0].mxu0
    %v577 = vadd.f32 0.0, %v576
    %v578 = vpop.f32.mrb[0].mxu0
    %579 = vdwg.mxu0
    %v580 = vmul.f32 %v577, 0.25
    %v581 = vlaneseq
    %v582 = vshrl.u32 %v581, 7
    %v583 = vsub.s32 1, %v582
    %v584 = vrot.slane %v24, %v583
    %v585 = vadd.f32 %v580, %v584
    %v586 = vsel %vm243, %v585, -inf
    %587 = vmax.xlane.f32.xlu0 %v586
    %v588 = vpop.xlane.xlu0 %587
    %v589 = vsub.f32 %v585, %v588
    %v590 = vmul.f32 %v589, 1.442695
    %v591 = vpow.pop %v590
    %v592 = vsel %vm243, %v591, 0.0
    %593 = vadd.xlane.f32.xlu0 %v592
    %v594 = vpop.xlane.xlu0 %593
    %v595 = vrcp.pop %v594
    %v596 = vmul.f32 %v591, %v595
    %597 = vrot.lane.b32.xlu0 %v156, 64
    %v598 = vpop.permute.xlu0 %597
    %v601 = vsel %vm243, %v596, 0
    %603 = vmatprep.subr.mxu0 0.0
    %604 = vmatpush1.msra.mxu0 %v598
    %605 = vmatprep.subr.mxu0 0.0
    %606 = vmatpush1.msra.mxu0 0.0
    %607 = vmatprep.subr.mxu0 0.0
    %608 = vmatpush1.msra.mxu0 0.0
    %609 = vmatprep.subr.mxu0 0.0
    %610 = vmatpush1.msra.mxu0 0.0
    %611 = vmatprep.subr.mxu0 0.0
    %612 = vmatpush1.msra.mxu0 0.0
    %613 = vmatprep.subr.mxu0 0.0
    %614 = vmatpush1.msra.mxu0 0.0
    %615 = vmatprep.subr.mxu0 0.0
    %616 = vmatpush1.msra.mxu0 0.0
    %617 = vmatprep.subr.mxu0 0.0
    %618 = vmatpush1.msra.mxu0 0.0
    %619 = vmatprep.subr.mxu0 0.0
    %620 = vmatpush1.msra.mxu0 0.0
    %621 = vmatprep.subr.mxu0 0.0
    %622 = vmatpush1.msra.mxu0 0.0
    %623 = vmatprep.subr.mxu0 0.0
    %624 = vmatpush1.msra.mxu0 0.0
    %625 = vmatprep.subr.mxu0 0.0
    %626 = vmatpush1.msra.mxu0 0.0
    %627 = vmatprep.subr.mxu0 0.0
    %628 = vmatpush1.msra.mxu0 0.0
    %629 = vmatprep.subr.mxu0 0.0
    %630 = vmatpush1.msra.mxu0 0.0
    %631 = vmatprep.subr.mxu0 0.0
    %632 = vmatpush1.msra.mxu0 0.0
    %633 = vmatprep.subr.mxu0 0.0
    %634 = vmatpush1.msra.mxu0 0.0
    %635 = vmatprep.subr.mxu0 0.0
    %636 = vmatpush1.msra.mxu0 0.0
    %637 = vmatprep.subr.mxu0 0.0
    %638 = vmatpush1.msra.mxu0 0.0
    %639 = vmatprep.subr.mxu0 0.0
    %640 = vmatpush1.msra.mxu0 0.0
    %641 = vmatprep.subr.mxu0 0.0
    %642 = vmatpush1.msra.mxu0 0.0
    %643 = vmatprep.subr.mxu0 0.0
    %644 = vmatpush1.msra.mxu0 0.0
    %645 = vmatprep.subr.mxu0 0.0
    %646 = vmatpush1.msra.mxu0 0.0
    %647 = vmatprep.subr.mxu0 0.0
    %648 = vmatpush1.msra.mxu0 0.0
    %649 = vmatprep.subr.mxu0 0.0
    %650 = vmatpush1.msra.mxu0 0.0
    %651 = vmatprep.subr.mxu0 0.0
    %652 = vmatpush1.msra.mxu0 0.0
    %653 = vmatprep.subr.mxu0 0.0
    %654 = vmatpush1.msra.mxu0 0.0
    %655 = vmatprep.subr.mxu0 0.0
    %656 = vmatpush1.msra.mxu0 0.0
    %657 = vmatprep.subr.mxu0 0.0
    %658 = vmatpush1.msra.mxu0 0.0
    %659 = vmatprep.subr.mxu0 0.0
    %660 = vmatpush1.msra.mxu0 0.0
    %661 = vmatprep.subr.mxu0 0.0
    %662 = vmatpush1.msra.mxu0 0.0
    %663 = vmatprep.subr.mxu0 0.0
    %664 = vmatpush1.msra.mxu0 0.0
    %665 = vmatprep.subr.mxu0 0.0
    %666 = vmatpush1.msra.mxu0 0.0
    %667 = vmatprep.mubr.f32.mxu0 0.0
    %668 = vmatmul.mubr.f32.gmra.mrb[0].mxu0 %v601
    %v669 = vpop.f32.mrb[0].mxu0
    %v670 = vadd.f32 0.0, %v669
    %v671 = vpop.f32.mrb[0].mxu0
    %672 = vdwg.mxu0
    %673 = vrot.lane.b32.xlu0 %v156, 112
    %v674 = vpop.permute.xlu0 %673
    %675 = vrot.lane.b32.xlu0 %v156, 80
    %v676 = vpop.permute.xlu0 %675
    %v677 = vsel %vm162, %v674, 0
    %v679 = vsel %vm162, %v676, 0
    %681 = vmatprep.subr.mxu0 0.0
    %682 = vmatpush1.xpose.msra.mxu0 %v679
    %683 = vmatprep.subr.mxu0 0.0
    %684 = vmatpush1.xpose.msra.mxu0 0.0
    %685 = vmatprep.subr.mxu0 0.0
    %686 = vmatpush1.xpose.msra.mxu0 0.0
    %687 = vmatprep.subr.mxu0 0.0
    %688 = vmatpush1.xpose.msra.mxu0 0.0
    %689 = vmatprep.subr.mxu0 0.0
    %690 = vmatpush1.xpose.msra.mxu0 0.0
    %691 = vmatprep.subr.mxu0 0.0
    %692 = vmatpush1.xpose.msra.mxu0 0.0
    %693 = vmatprep.subr.mxu0 0.0
    %694 = vmatpush1.xpose.msra.mxu0 0.0
    %695 = vmatprep.subr.mxu0 0.0
    %696 = vmatpush1.xpose.msra.mxu0 0.0
    %697 = vmatprep.subr.mxu0 0.0
    %698 = vmatpush1.xpose.msra.mxu0 0.0
    %699 = vmatprep.subr.mxu0 0.0
    %700 = vmatpush1.xpose.msra.mxu0 0.0
    %701 = vmatprep.subr.mxu0 0.0
    %702 = vmatpush1.xpose.msra.mxu0 0.0
    %703 = vmatprep.subr.mxu0 0.0
    %704 = vmatpush1.xpose.msra.mxu0 0.0
    %705 = vmatprep.subr.mxu0 0.0
    %706 = vmatpush1.xpose.msra.mxu0 0.0
    %707 = vmatprep.subr.mxu0 0.0
    %708 = vmatpush1.xpose.msra.mxu0 0.0
    %709 = vmatprep.subr.mxu0 0.0
    %710 = vmatpush1.xpose.msra.mxu0 0.0
    %711 = vmatprep.subr.mxu0 0.0
    %712 = vmatpush1.xpose.msra.mxu0 0.0
    %713 = vmatprep.subr.mxu0 0.0
    %714 = vmatpush1.xpose.msra.mxu0 0.0
    %715 = vmatprep.subr.mxu0 0.0
    %716 = vmatpush1.xpose.msra.mxu0 0.0
    %717 = vmatprep.subr.mxu0 0.0
    %718 = vmatpush1.xpose.msra.mxu0 0.0
    %719 = vmatprep.subr.mxu0 0.0
    %720 = vmatpush1.xpose.msra.mxu0 0.0
    %721 = vmatprep.subr.mxu0 0.0
    %722 = vmatpush1.xpose.msra.mxu0 0.0
    %723 = vmatprep.subr.mxu0 0.0
    %724 = vmatpush1.xpose.msra.mxu0 0.0
    %725 = vmatprep.subr.mxu0 0.0
    %726 = vmatpush1.xpose.msra.mxu0 0.0
    %727 = vmatprep.subr.mxu0 0.0
    %728 = vmatpush1.xpose.msra.mxu0 0.0
    %729 = vmatprep.subr.mxu0 0.0
    %730 = vmatpush1.xpose.msra.mxu0 0.0
    %731 = vmatprep.subr.mxu0 0.0
    %732 = vmatpush1.xpose.msra.mxu0 0.0
    %733 = vmatprep.subr.mxu0 0.0
    %734 = vmatpush1.xpose.msra.mxu0 0.0
    %735 = vmatprep.subr.mxu0 0.0
    %736 = vmatpush1.xpose.msra.mxu0 0.0
    %737 = vmatprep.subr.mxu0 0.0
    %738 = vmatpush1.xpose.msra.mxu0 0.0
    %739 = vmatprep.subr.mxu0 0.0
    %740 = vmatpush1.xpose.msra.mxu0 0.0
    %741 = vmatprep.subr.mxu0 0.0
    %742 = vmatpush1.xpose.msra.mxu0 0.0
    %743 = vmatprep.subr.mxu0 0.0
    %744 = vmatpush1.xpose.msra.mxu0 0.0
    %745 = vmatprep.mubr.f32.mxu0 0.0
    %746 = vmatmul.mubr.f32.gmra.mrb[0].mxu0 %v677
    %v747 = vpop.f32.mrb[0].mxu0
    %v748 = vadd.f32 0.0, %v747
    %v749 = vpop.f32.mrb[0].mxu0
    %750 = vdwg.mxu0
    %v751 = vmul.f32 %v748, 0.25
    %v752 = vadd.f32 %v751, %v584
    %v753 = vsel %vm243, %v752, -inf
    %754 = vmax.xlane.f32.xlu0 %v753
    %v755 = vpop.xlane.xlu0 %754
    %v756 = vsub.f32 %v752, %v755
    %v757 = vmul.f32 %v756, 1.442695
    %v758 = vpow.pop %v757
    %v759 = vsel %vm243, %v758, 0.0
    %760 = vadd.xlane.f32.xlu0 %v759
    %v761 = vpop.xlane.xlu0 %760
    %v762 = vrcp.pop %v761
    %v763 = vmul.f32 %v758, %v762
    %764 = vrot.lane.b32.xlu0 %v156, 48
    %v765 = vpop.permute.xlu0 %764
    %v768 = vsel %vm243, %v763, 0
    %770 = vmatprep.subr.mxu0 0.0
    %771 = vmatpush1.msra.mxu0 %v765
    %772 = vmatprep.subr.mxu0 0.0
    %773 = vmatpush1.msra.mxu0 0.0
    %774 = vmatprep.subr.mxu0 0.0
    %775 = vmatpush1.msra.mxu0 0.0
    %776 = vmatprep.subr.mxu0 0.0
    %777 = vmatpush1.msra.mxu0 0.0
    %778 = vmatprep.subr.mxu0 0.0
    %779 = vmatpush1.msra.mxu0 0.0
    %780 = vmatprep.subr.mxu0 0.0
    %781 = vmatpush1.msra.mxu0 0.0
    %782 = vmatprep.subr.mxu0 0.0
    %783 = vmatpush1.msra.mxu0 0.0
    %784 = vmatprep.subr.mxu0 0.0
    %785 = vmatpush1.msra.mxu0 0.0
    %786 = vmatprep.subr.mxu0 0.0
    %787 = vmatpush1.msra.mxu0 0.0
    %788 = vmatprep.subr.mxu0 0.0
    %789 = vmatpush1.msra.mxu0 0.0
    %790 = vmatprep.subr.mxu0 0.0
    %791 = vmatpush1.msra.mxu0 0.0
    %792 = vmatprep.subr.mxu0 0.0
    %793 = vmatpush1.msra.mxu0 0.0
    %794 = vmatprep.subr.mxu0 0.0
    %795 = vmatpush1.msra.mxu0 0.0
    %796 = vmatprep.subr.mxu0 0.0
    %797 = vmatpush1.msra.mxu0 0.0
    %798 = vmatprep.subr.mxu0 0.0
    %799 = vmatpush1.msra.mxu0 0.0
    %800 = vmatprep.subr.mxu0 0.0
    %801 = vmatpush1.msra.mxu0 0.0
    %802 = vmatprep.subr.mxu0 0.0
    %803 = vmatpush1.msra.mxu0 0.0
    %804 = vmatprep.subr.mxu0 0.0
    %805 = vmatpush1.msra.mxu0 0.0
    %806 = vmatprep.subr.mxu0 0.0
    %807 = vmatpush1.msra.mxu0 0.0
    %808 = vmatprep.subr.mxu0 0.0
    %809 = vmatpush1.msra.mxu0 0.0
    %810 = vmatprep.subr.mxu0 0.0
    %811 = vmatpush1.msra.mxu0 0.0
    %812 = vmatprep.subr.mxu0 0.0
    %813 = vmatpush1.msra.mxu0 0.0
    %814 = vmatprep.subr.mxu0 0.0
    %815 = vmatpush1.msra.mxu0 0.0
    %816 = vmatprep.subr.mxu0 0.0
    %817 = vmatpush1.msra.mxu0 0.0
    %818 = vmatprep.subr.mxu0 0.0
    %819 = vmatpush1.msra.mxu0 0.0
    %820 = vmatprep.subr.mxu0 0.0
    %821 = vmatpush1.msra.mxu0 0.0
    %822 = vmatprep.subr.mxu0 0.0
    %823 = vmatpush1.msra.mxu0 0.0
    %824 = vmatprep.subr.mxu0 0.0
    %825 = vmatpush1.msra.mxu0 0.0
    %826 = vmatprep.subr.mxu0 0.0
    %827 = vmatpush1.msra.mxu0 0.0
    %828 = vmatprep.subr.mxu0 0.0
    %829 = vmatpush1.msra.mxu0 0.0
    %830 = vmatprep.subr.mxu0 0.0
    %831 = vmatpush1.msra.mxu0 0.0
    %832 = vmatprep.subr.mxu0 0.0
    %833 = vmatpush1.msra.mxu0 0.0
    %834 = vmatprep.mubr.f32.mxu0 0.0
    %835 = vmatmul.mubr.f32.gmra.mrb[0].mxu0 %v768
    %v836 = vpop.f32.mrb[0].mxu0
    %v837 = vadd.f32 0.0, %v836
    %v838 = vpop.f32.mrb[0].mxu0
    %839 = vdwg.mxu0
    %841 = vrot.lane.b32.xlu0 %v837, 16
    %v842 = vpop.permute.xlu0 %841
    %v844 = vsel %vm162, %v670, %v842
    %v845 = vld [vmem:[%s3 + $0x8] sm:$0xff]
    %v846 = vld [vmem:[%s3 + $0x10] sm:$0xff]
    %v847 = vld [vmem:[%s3 + $0x18] sm:$0xff]
    %v848 = vld [vmem:[%s3 + $0x20] sm:$0xff]
    %v849 = vld [vmem:[%s3 + $0x68] sm:$0x1]
    %v850 = vlaneseq
    %v851 = vshrl.u32 %v850, 7
    %v852 = vsub.s32 0, %v851
    %v853 = vrot.slane %v849, %v852
    %v855 = vsel %vm29, %v502, 0
    %v858 = vsel %vm29, %v844, 0
    %860 = vmatprep.subr.mxu0 0.0
    %861 = vmatpush1.msra.mxu0 %v845
    %862 = vmatprep.subr.mxu0 0.0
    %863 = vmatpush1.msra.mxu0 %v846
    %864 = vmatprep.subr.mxu0 0.0
    %865 = vmatpush1.msra.mxu0 %v847
    %866 = vmatprep.subr.mxu0 0.0
    %867 = vmatpush1.msra.mxu0 %v848
    %868 = vmatprep.subr.mxu0 0.0
    %869 = vmatpush1.msra.mxu0 0.0
    %870 = vmatprep.subr.mxu0 0.0
    %871 = vmatpush1.msra.mxu0 0.0
    %872 = vmatprep.subr.mxu0 0.0
    %873 = vmatpush1.msra.mxu0 0.0
    %874 = vmatprep.subr.mxu0 0.0
    %875 = vmatpush1.msra.mxu0 0.0
    %876 = vmatprep.subr.mxu0 0.0
    %877 = vmatpush1.msra.mxu0 0.0
    %878 = vmatprep.subr.mxu0 0.0
    %879 = vmatpush1.msra.mxu0 0.0
    %880 = vmatprep.subr.mxu0 0.0
    %881 = vmatpush1.msra.mxu0 0.0
    %882 = vmatprep.subr.mxu0 0.0
    %883 = vmatpush1.msra.mxu0 0.0
    %884 = vmatprep.subr.mxu0 0.0
    %885 = vmatpush1.msra.mxu0 0.0
    %886 = vmatprep.subr.mxu0 0.0
    %887 = vmatpush1.msra.mxu0 0.0
    %888 = vmatprep.subr.mxu0 0.0
    %889 = vmatpush1.msra.mxu0 0.0
    %890 = vmatprep.subr.mxu0 0.0
    %891 = vmatpush1.msra.mxu0 0.0
    %892 = vmatprep.subr.mxu0 0.0
    %893 = vmatpush1.msra.mxu0 0.0
    %894 = vmatprep.subr.mxu0 0.0
    %895 = vmatpush1.msra.mxu0 0.0
    %896 = vmatprep.subr.mxu0 0.0
    %897 = vmatpush1.msra.mxu0 0.0
    %898 = vmatprep.subr.mxu0 0.0
    %899 = vmatpush1.msra.mxu0 0.0
    %900 = vmatprep.subr.mxu0 0.0
    %901 = vmatpush1.msra.mxu0 0.0
    %902 = vmatprep.subr.mxu0 0.0
    %903 = vmatpush1.msra.mxu0 0.0
    %904 = vmatprep.subr.mxu0 0.0
    %905 = vmatpush1.msra.mxu0 0.0
    %906 = vmatprep.subr.mxu0 0.0
    %907 = vmatpush1.msra.mxu0 0.0
    %908 = vmatprep.subr.mxu0 0.0
    %909 = vmatpush1.msra.mxu0 0.0
    %910 = vmatprep.subr.mxu0 0.0
    %911 = vmatpush1.msra.mxu0 0.0
    %912 = vmatprep.subr.mxu0 0.0
    %913 = vmatpush1.msra.mxu0 0.0
    %914 = vmatprep.subr.mxu0 0.0
    %915 = vmatpush1.msra.mxu0 0.0
    %916 = vmatprep.subr.mxu0 0.0
    %917 = vmatpush1.msra.mxu0 0.0
    %918 = vmatprep.subr.mxu0 0.0
    %919 = vmatpush1.msra.mxu0 0.0
    %920 = vmatprep.subr.mxu0 0.0
    %921 = vmatpush1.msra.mxu0 0.0
    %922 = vmatprep.subr.mxu0 0.0
    %923 = vmatpush1.msra.mxu0 0.0
    %924 = vmatprep.mubr.f32.mxu0 0.0
    %925 = vmatmul.mubr.f32.gmra.mrb[0].mxu0 %v855
    %v926 = vpop.f32.mrb[0].mxu0
    %v927 = vadd.f32 %v853, %v926
    %v928 = vpop.f32.mrb[0].mxu0
    %929 = vmatprep.mubr.f32.mxu0 0.0
    %930 = vmatmul.mubr.f32.gmra.mrb[0].mxu0 %v858
    %v931 = vpop.f32.mrb[0].mxu0
    %v932 = vadd.f32 %v853, %v931
    %v933 = vpop.f32.mrb[0].mxu0
    %934 = vdwg.mxu0
    %v935 = vadd.f32 %v927, %v67
    %v936 = vadd.f32 %v932, %v68
    %v937 = vld [vmem:[%s3 + $0x69] sm:$0x1]
    %v938 = vld [vmem:[%s3 + $0x6a] sm:$0x1]
    %v939 = vsel %vm29, %v935, 0.0
    %940 = vadd.xlane.f32.xlu0 %v939
    %v941 = vpop.xlane.xlu0 %940
    %v942 = vsel %vm29, %v936, 0.0
    %943 = vadd.xlane.f32.xlu0 %v942
    %v944 = vpop.xlane.xlu0 %943
    %v945 = vmul.f32 %v941, %v36
    %v946 = vmul.f32 %v944, %v36
    %v947 = vsub.f32 %v935, %v945
    %v948 = vsub.f32 %v936, %v946
    %v949 = vmul.f32 %v947, %v947
    %v950 = vmul.f32 %v948, %v948
    %v951 = vsel %vm29, %v949, 0.0
    %952 = vadd.xlane.f32.xlu0 %v951
    %v953 = vpop.xlane.xlu0 %952
    %v954 = vsel %vm29, %v950, 0.0
    %955 = vadd.xlane.f32.xlu0 %v954
    %v956 = vpop.xlane.xlu0 %955
    %v957 = vmul.f32 %v953, %v36
    %v958 = vmul.f32 %v956, %v36
    %v959 = vadd.f32 %v957, 1e-12
    %v960 = vadd.f32 %v958, 1e-12
    %v961 = vrsqrt.pop %v959
    %v962 = vrsqrt.pop %v960
    %v963 = vmul.f32 %v947, %v961
    %v964 = vmul.f32 %v948, %v962
    %v965 = vlaneseq
    %v966 = vshrl.u32 %v965, 7
    %v967 = vsub.s32 0, %v966
    %v968 = vrot.slane %v937, %v967
    %v969 = vmul.f32 %v963, %v968
    %v970 = vmul.f32 %v964, %v968
    %v971 = vlaneseq
    %v972 = vshrl.u32 %v971, 7
    %v973 = vsub.s32 0, %v972
    %v974 = vrot.slane %v938, %v973
    %v975 = vadd.f32 %v969, %v974
    %v976 = vadd.f32 %v970, %v974
    %v977 = vld [vmem:[%s4] sm:$0xff]
    %v978 = vld [vmem:[%s4 + $0x8] sm:$0xff]
    %v979 = vld [vmem:[%s4 + $0x10] sm:$0xff]
    %v980 = vld [vmem:[%s4 + $0x18] sm:$0xff]
    %v981 = vld [vmem:[%s4 + $0x20] sm:$0x1]
    %v982 = vlaneseq
    %v983 = vshrl.u32 %v982, 7
    %v984 = vsub.s32 0, %v983
    %v985 = vrot.slane %v981, %v984
    %v987 = vsel %vm29, %v975, 0
    %v990 = vsel %vm29, %v976, 0
    %992 = vmatprep.subr.mxu0 0.0
    %993 = vmatpush1.msra.mxu0 %v977
    %994 = vmatprep.subr.mxu0 0.0
    %995 = vmatpush1.msra.mxu0 %v978
    %996 = vmatprep.subr.mxu0 0.0
    %997 = vmatpush1.msra.mxu0 %v979
    %998 = vmatprep.subr.mxu0 0.0
    %999 = vmatpush1.msra.mxu0 %v980
    %1000 = vmatprep.subr.mxu0 0.0
    %1001 = vmatpush1.msra.mxu0 0.0
    %1002 = vmatprep.subr.mxu0 0.0
    %1003 = vmatpush1.msra.mxu0 0.0
    %1004 = vmatprep.subr.mxu0 0.0
    %1005 = vmatpush1.msra.mxu0 0.0
    %1006 = vmatprep.subr.mxu0 0.0
    %1007 = vmatpush1.msra.mxu0 0.0
    %1008 = vmatprep.subr.mxu0 0.0
    %1009 = vmatpush1.msra.mxu0 0.0
    %1010 = vmatprep.subr.mxu0 0.0
    %1011 = vmatpush1.msra.mxu0 0.0
    %1012 = vmatprep.subr.mxu0 0.0
    %1013 = vmatpush1.msra.mxu0 0.0
    %1014 = vmatprep.subr.mxu0 0.0
    %1015 = vmatpush1.msra.mxu0 0.0
    %1016 = vmatprep.subr.mxu0 0.0
    %1017 = vmatpush1.msra.mxu0 0.0
    %1018 = vmatprep.subr.mxu0 0.0
    %1019 = vmatpush1.msra.mxu0 0.0
    %1020 = vmatprep.subr.mxu0 0.0
    %1021 = vmatpush1.msra.mxu0 0.0
    %1022 = vmatprep.subr.mxu0 0.0
    %1023 = vmatpush1.msra.mxu0 0.0
    %1024 = vmatprep.subr.mxu0 0.0
    %1025 = vmatpush1.msra.mxu0 0.0
    %1026 = vmatprep.subr.mxu0 0.0
    %1027 = vmatpush1.msra.mxu0 0.0
    %1028 = vmatprep.subr.mxu0 0.0
    %1029 = vmatpush1.msra.mxu0 0.0
    %1030 = vmatprep.subr.mxu0 0.0
    %1031 = vmatpush1.msra.mxu0 0.0
    %1032 = vmatprep.subr.mxu0 0.0
    %1033 = vmatpush1.msra.mxu0 0.0
    %1034 = vmatprep.subr.mxu0 0.0
    %1035 = vmatpush1.msra.mxu0 0.0
    %1036 = vmatprep.subr.mxu0 0.0
    %1037 = vmatpush1.msra.mxu0 0.0
    %1038 = vmatprep.subr.mxu0 0.0
    %1039 = vmatpush1.msra.mxu0 0.0
    %1040 = vmatprep.subr.mxu0 0.0
    %1041 = vmatpush1.msra.mxu0 0.0
    %1042 = vmatprep.subr.mxu0 0.0
    %1043 = vmatpush1.msra.mxu0 0.0
    %1044 = vmatprep.subr.mxu0 0.0
    %1045 = vmatpush1.msra.mxu0 0.0
    %1046 = vmatprep.subr.mxu0 0.0
    %1047 = vmatpush1.msra.mxu0 0.0
    %1048 = vmatprep.subr.mxu0 0.0
    %1049 = vmatpush1.msra.mxu0 0.0
    %1050 = vmatprep.subr.mxu0 0.0
    %1051 = vmatpush1.msra.mxu0 0.0
    %1052 = vmatprep.subr.mxu0 0.0
    %1053 = vmatpush1.msra.mxu0 0.0
    %1054 = vmatprep.subr.mxu0 0.0
    %1055 = vmatpush1.msra.mxu0 0.0
    %1056 = vmatprep.mubr.f32.mxu0 0.0
    %1057 = vmatmul.mubr.f32.gmra.mrb[0].mxu0 %v987
    %v1058 = vpop.f32.mrb[0].mxu0
    %v1059 = vadd.f32 %v985, %v1058
    %v1060 = vpop.f32.mrb[0].mxu0
    %1061 = vmatprep.mubr.f32.mxu0 0.0
    %1062 = vmatmul.mubr.f32.gmra.mrb[0].mxu0 %v990
    %v1063 = vpop.f32.mrb[0].mxu0
    %v1064 = vadd.f32 %v985, %v1063
    %v1065 = vpop.f32.mrb[0].mxu0
    %1066 = vdwg.mxu0
    %v1067 = vmul.f32 %v1059, %v1059
    %v1068 = vmul.f32 %v1064, %v1064
    %v1069 = vmul.f32 %v1059, %v1067
    %v1070 = vmul.f32 %v1064, %v1068
    %v1071 = vmul.f32 %v1069, 0.044715
    %v1072 = vmul.f32 %v1070, 0.044715
    %v1073 = vadd.f32 %v1059, %v1071
    %v1074 = vadd.f32 %v1064, %v1072
    %v1075 = vmul.f32 %v1073, 0.7978846
    %v1076 = vmul.f32 %v1074, 0.7978846
    %v1077 = vtanh.pop %v1075
    %v1078 = vtanh.pop %v1076
    %v1079 = vadd.f32 %v1077, 1.0
    %v1080 = vadd.f32 %v1078, 1.0
    %v1081 = vmul.f32 %v1079, 0.5
    %v1082 = vmul.f32 %v1080, 0.5
    %v1083 = vmul.f32 %v1059, %v1081
    %v1084 = vmul.f32 %v1064, %v1082
    %v1085 = vld [vmem:[%s3 + $0x28] sm:$0xff]
    %v1086 = vld [vmem:[%s3 + $0x30] sm:$0xff]
    %v1087 = vld [vmem:[%s3 + $0x38] sm:$0xff]
    %v1088 = vld [vmem:[%s3 + $0x40] sm:$0xff]
    %v1089 = vld [vmem:[%s3 + $0x48] sm:$0xff]
    %v1090 = vld [vmem:[%s3 + $0x50] sm:$0xff]
    %v1091 = vld [vmem:[%s3 + $0x58] sm:$0xff]
    %v1092 = vld [vmem:[%s3 + $0x60] sm:$0xff]
    %v1093 = vld [vmem:[%s3 + $0x6b] sm:$0x1]
    %v1094 = vlaneseq
    %v1095 = vshrl.u32 %v1094, 7
    %v1096 = vsub.s32 0, %v1095
    %v1097 = vrot.slane %v1093, %v1096
    %vm1098 = vcmask 523264
    %v1100 = vsel %vm1098, %v1083, 0
    %v1103 = vsel %vm1098, %v1084, 0
    %1105 = vmatprep.subr.mxu0 0.0
    %1106 = vmatpush1.msra.mxu0 %v1085
    %1107 = vmatprep.subr.mxu0 0.0
    %1108 = vmatpush1.msra.mxu0 %v1086
    %1109 = vmatprep.subr.mxu0 0.0
    %1110 = vmatpush1.msra.mxu0 %v1087
    %1111 = vmatprep.subr.mxu0 0.0
    %1112 = vmatpush1.msra.mxu0 %v1088
    %1113 = vmatprep.subr.mxu0 0.0
    %1114 = vmatpush1.msra.mxu0 %v1089
    %1115 = vmatprep.subr.mxu0 0.0
    %1116 = vmatpush1.msra.mxu0 %v1090
    %1117 = vmatprep.subr.mxu0 0.0
    %1118 = vmatpush1.msra.mxu0 %v1091
    %1119 = vmatprep.subr.mxu0 0.0
    %1120 = vmatpush1.msra.mxu0 %v1092
    %1121 = vmatprep.subr.mxu0 0.0
    %1122 = vmatpush1.msra.mxu0 0.0
    %1123 = vmatprep.subr.mxu0 0.0
    %1124 = vmatpush1.msra.mxu0 0.0
    %1125 = vmatprep.subr.mxu0 0.0
    %1126 = vmatpush1.msra.mxu0 0.0
    %1127 = vmatprep.subr.mxu0 0.0
    %1128 = vmatpush1.msra.mxu0 0.0
    %1129 = vmatprep.subr.mxu0 0.0
    %1130 = vmatpush1.msra.mxu0 0.0
    %1131 = vmatprep.subr.mxu0 0.0
    %1132 = vmatpush1.msra.mxu0 0.0
    %1133 = vmatprep.subr.mxu0 0.0
    %1134 = vmatpush1.msra.mxu0 0.0
    %1135 = vmatprep.subr.mxu0 0.0
    %1136 = vmatpush1.msra.mxu0 0.0
    %1137 = vmatprep.subr.mxu0 0.0
    %1138 = vmatpush1.msra.mxu0 0.0
    %1139 = vmatprep.subr.mxu0 0.0
    %1140 = vmatpush1.msra.mxu0 0.0
    %1141 = vmatprep.subr.mxu0 0.0
    %1142 = vmatpush1.msra.mxu0 0.0
    %1143 = vmatprep.subr.mxu0 0.0
    %1144 = vmatpush1.msra.mxu0 0.0
    %1145 = vmatprep.subr.mxu0 0.0
    %1146 = vmatpush1.msra.mxu0 0.0
    %1147 = vmatprep.subr.mxu0 0.0
    %1148 = vmatpush1.msra.mxu0 0.0
    %1149 = vmatprep.subr.mxu0 0.0
    %1150 = vmatpush1.msra.mxu0 0.0
    %1151 = vmatprep.subr.mxu0 0.0
    %1152 = vmatpush1.msra.mxu0 0.0
    %1153 = vmatprep.subr.mxu0 0.0
    %1154 = vmatpush1.msra.mxu0 0.0
    %1155 = vmatprep.subr.mxu0 0.0
    %1156 = vmatpush1.msra.mxu0 0.0
    %1157 = vmatprep.subr.mxu0 0.0
    %1158 = vmatpush1.msra.mxu0 0.0
    %1159 = vmatprep.subr.mxu0 0.0
    %1160 = vmatpush1.msra.mxu0 0.0
    %1161 = vmatprep.subr.mxu0 0.0
    %1162 = vmatpush1.msra.mxu0 0.0
    %1163 = vmatprep.subr.mxu0 0.0
    %1164 = vmatpush1.msra.mxu0 0.0
    %1165 = vmatprep.subr.mxu0 0.0
    %1166 = vmatpush1.msra.mxu0 0.0
    %1167 = vmatprep.subr.mxu0 0.0
    %1168 = vmatpush1.msra.mxu0 0.0
    %1169 = vmatprep.mubr.f32.mxu0 0.0
    %1170 = vmatmul.mubr.f32.gmra.mrb[0].mxu0 %v1100
    %v1171 = vpop.f32.mrb[0].mxu0
    %v1172 = vadd.f32 %v1097, %v1171
    %v1173 = vpop.f32.mrb[0].mxu0
    %1174 = vmatprep.mubr.f32.mxu0 0.0
    %1175 = vmatmul.mubr.f32.gmra.mrb[0].mxu0 %v1103
    %v1176 = vpop.f32.mrb[0].mxu0
    %v1177 = vadd.f32 %v1097, %v1176
    %v1178 = vpop.f32.mrb[0].mxu0
    %1179 = vdwg.mxu0
    %v1180 = vadd.f32 %v1172, %v975
    %v1181 = vadd.f32 %v1177, %v976
    %v1182 = vld [vmem:[%s3 + $0x6c] sm:$0x1]
    %v1183 = vld [vmem:[%s3 + $0x6d] sm:$0x1]
    %v1184 = vsel %vm29, %v1180, 0.0
    %1185 = vadd.xlane.f32.xlu0 %v1184
    %v1186 = vpop.xlane.xlu0 %1185
    %v1187 = vsel %vm29, %v1181, 0.0
    %1188 = vadd.xlane.f32.xlu0 %v1187
    %v1189 = vpop.xlane.xlu0 %1188
    %v1190 = vmul.f32 %v1186, %v36
    %v1191 = vmul.f32 %v1189, %v36
    %v1192 = vsub.f32 %v1180, %v1190
    %v1193 = vsub.f32 %v1181, %v1191
    %v1194 = vmul.f32 %v1192, %v1192
    %v1195 = vmul.f32 %v1193, %v1193
    %v1196 = vsel %vm29, %v1194, 0.0
    %1197 = vadd.xlane.f32.xlu0 %v1196
    %v1198 = vpop.xlane.xlu0 %1197
    %v1199 = vsel %vm29, %v1195, 0.0
    %1200 = vadd.xlane.f32.xlu0 %v1199
    %v1201 = vpop.xlane.xlu0 %1200
    %v1202 = vmul.f32 %v1198, %v36
    %v1203 = vmul.f32 %v1201, %v36
    %v1204 = vadd.f32 %v1202, 1e-12
    %v1205 = vadd.f32 %v1203, 1e-12
    %v1206 = vrsqrt.pop %v1204
    %v1207 = vrsqrt.pop %v1205
    %v1208 = vmul.f32 %v1192, %v1206
    %v1209 = vmul.f32 %v1193, %v1207
    %v1210 = vlaneseq
    %v1211 = vshrl.u32 %v1210, 7
    %v1212 = vsub.s32 0, %v1211
    %v1213 = vrot.slane %v1182, %v1212
    %v1214 = vmul.f32 %v1208, %v1213
    %v1215 = vmul.f32 %v1209, %v1213
    %v1216 = vlaneseq
    %v1217 = vshrl.u32 %v1216, 7
    %v1218 = vsub.s32 0, %v1217
    %v1219 = vrot.slane %v1183, %v1218
    %v1220 = vadd.f32 %v1214, %v1219
    %v1221 = vadd.f32 %v1215, %v1219
    %v1222 = vld [vmem:[%s2 + $0x28] sm:$0xff]
    %v1223 = vld [vmem:[%s2 + $0x30] sm:$0xff]
    %v1224 = vld [vmem:[%s2 + $0x38] sm:$0xff]
    %v1225 = vld [vmem:[%s2 + $0x40] sm:$0xff]
    %v1226 = vld [vmem:[%s2 + $0x48] sm:$0x1]
    %v1227 = vlaneseq
    %v1228 = vshrl.u32 %v1227, 7
    %v1229 = vsub.s32 0, %v1228
    %v1230 = vrot.slane %v1226, %v1229
    %v1232 = vsel %vm29, %v1220, 0
    %v1235 = vsel %vm29, %v1221, 0
    %1237 = vmatprep.subr.mxu0 0.0
    %1238 = vmatpush1.msra.mxu0 %v1222
    %1239 = vmatprep.subr.mxu0 0.0
    %1240 = vmatpush1.msra.mxu0 %v1223
    %1241 = vmatprep.subr.mxu0 0.0
    %1242 = vmatpush1.msra.mxu0 %v1224
    %1243 = vmatprep.subr.mxu0 0.0
    %1244 = vmatpush1.msra.mxu0 %v1225
    %1245 = vmatprep.subr.mxu0 0.0
    %1246 = vmatpush1.msra.mxu0 0.0
    %1247 = vmatprep.subr.mxu0 0.0
    %1248 = vmatpush1.msra.mxu0 0.0
    %1249 = vmatprep.subr.mxu0 0.0
    %1250 = vmatpush1.msra.mxu0 0.0
    %1251 = vmatprep.subr.mxu0 0.0
    %1252 = vmatpush1.msra.mxu0 0.0
    %1253 = vmatprep.subr.mxu0 0.0
    %1254 = vmatpush1.msra.mxu0 0.0
    %1255 = vmatprep.subr.mxu0 0.0
    %1256 = vmatpush1.msra.mxu0 0.0
    %1257 = vmatprep.subr.mxu0 0.0
    %1258 = vmatpush1.msra.mxu0 0.0
    %1259 = vmatprep.subr.mxu0 0.0
    %1260 = vmatpush1.msra.mxu0 0.0
    %1261 = vmatprep.subr.mxu0 0.0
    %1262 = vmatpush1.msra.mxu0 0.0
    %1263 = vmatprep.subr.mxu0 0.0
    %1264 = vmatpush1.msra.mxu0 0.0
    %1265 = vmatprep.subr.mxu0 0.0
    %1266 = vmatpush1.msra.mxu0 0.0
    %1267 = vmatprep.subr.mxu0 0.0
    %1268 = vmatpush1.msra.mxu0 0.0
    %1269 = vmatprep.subr.mxu0 0.0
    %1270 = vmatpush1.msra.mxu0 0.0
    %1271 = vmatprep.subr.mxu0 0.0
    %1272 = vmatpush1.msra.mxu0 0.0
    %1273 = vmatprep.subr.mxu0 0.0
    %1274 = vmatpush1.msra.mxu0 0.0
    %1275 = vmatprep.subr.mxu0 0.0
    %1276 = vmatpush1.msra.mxu0 0.0
    %1277 = vmatprep.subr.mxu0 0.0
    %1278 = vmatpush1.msra.mxu0 0.0
    %1279 = vmatprep.subr.mxu0 0.0
    %1280 = vmatpush1.msra.mxu0 0.0
    %1281 = vmatprep.subr.mxu0 0.0
    %1282 = vmatpush1.msra.mxu0 0.0
    %1283 = vmatprep.subr.mxu0 0.0
    %1284 = vmatpush1.msra.mxu0 0.0
    %1285 = vmatprep.subr.mxu0 0.0
    %1286 = vmatpush1.msra.mxu0 0.0
    %1287 = vmatprep.subr.mxu0 0.0
    %1288 = vmatpush1.msra.mxu0 0.0
    %1289 = vmatprep.subr.mxu0 0.0
    %1290 = vmatpush1.msra.mxu0 0.0
    %1291 = vmatprep.subr.mxu0 0.0
    %1292 = vmatpush1.msra.mxu0 0.0
    %1293 = vmatprep.subr.mxu0 0.0
    %1294 = vmatpush1.msra.mxu0 0.0
    %1295 = vmatprep.subr.mxu0 0.0
    %1296 = vmatpush1.msra.mxu0 0.0
    %1297 = vmatprep.subr.mxu0 0.0
    %1298 = vmatpush1.msra.mxu0 0.0
    %1299 = vmatprep.subr.mxu0 0.0
    %1300 = vmatpush1.msra.mxu0 0.0
    %1301 = vmatprep.mubr.f32.mxu0 0.0
    %1302 = vmatmul.mubr.f32.gmra.mrb[0].mxu0 %v1232
    %v1303 = vpop.f32.mrb[0].mxu0
    %v1304 = vadd.f32 %v1230, %v1303
    %v1305 = vpop.f32.mrb[0].mxu0
    %1306 = vmatprep.mubr.f32.mxu0 0.0
    %1307 = vmatmul.mubr.f32.gmra.mrb[0].mxu0 %v1235
    %v1308 = vpop.f32.mrb[0].mxu0
    %v1309 = vadd.f32 %v1230, %v1308
    %v1310 = vpop.f32.mrb[0].mxu0
    %1311 = vdwg.mxu0
    %1313 = vrot.lane.b32.xlu0 %v1304, 96
    %v1314 = vpop.permute.xlu0 %1313
    %v1315 = vsel %vm162, %v1304, 0
    %v1317 = vsel %vm162, %v1314, 0
    %1319 = vmatprep.subr.mxu0 0.0
    %1320 = vmatpush1.xpose.msra.mxu0 %v1317
    %1321 = vmatprep.subr.mxu0 0.0
    %1322 = vmatpush1.xpose.msra.mxu0 0.0
    %1323 = vmatprep.subr.mxu0 0.0
    %1324 = vmatpush1.xpose.msra.mxu0 0.0
    %1325 = vmatprep.subr.mxu0 0.0
    %1326 = vmatpush1.xpose.msra.mxu0 0.0
    %1327 = vmatprep.subr.mxu0 0.0
    %1328 = vmatpush1.xpose.msra.mxu0 0.0
    %1329 = vmatprep.subr.mxu0 0.0
    %1330 = vmatpush1.xpose.msra.mxu0 0.0
    %1331 = vmatprep.subr.mxu0 0.0
    %1332 = vmatpush1.xpose.msra.mxu0 0.0
    %1333 = vmatprep.subr.mxu0 0.0
    %1334 = vmatpush1.xpose.msra.mxu0 0.0
    %1335 = vmatprep.subr.mxu0 0.0
    %1336 = vmatpush1.xpose.msra.mxu0 0.0
    %1337 = vmatprep.subr.mxu0 0.0
    %1338 = vmatpush1.xpose.msra.mxu0 0.0
    %1339 = vmatprep.subr.mxu0 0.0
    %1340 = vmatpush1.xpose.msra.mxu0 0.0
    %1341 = vmatprep.subr.mxu0 0.0
    %1342 = vmatpush1.xpose.msra.mxu0 0.0
    %1343 = vmatprep.subr.mxu0 0.0
    %1344 = vmatpush1.xpose.msra.mxu0 0.0
    %1345 = vmatprep.subr.mxu0 0.0
    %1346 = vmatpush1.xpose.msra.mxu0 0.0
    %1347 = vmatprep.subr.mxu0 0.0
    %1348 = vmatpush1.xpose.msra.mxu0 0.0
    %1349 = vmatprep.subr.mxu0 0.0
    %1350 = vmatpush1.xpose.msra.mxu0 0.0
    %1351 = vmatprep.subr.mxu0 0.0
    %1352 = vmatpush1.xpose.msra.mxu0 0.0
    %1353 = vmatprep.subr.mxu0 0.0
    %1354 = vmatpush1.xpose.msra.mxu0 0.0
    %1355 = vmatprep.subr.mxu0 0.0
    %1356 = vmatpush1.xpose.msra.mxu0 0.0
    %1357 = vmatprep.subr.mxu0 0.0
    %1358 = vmatpush1.xpose.msra.mxu0 0.0
    %1359 = vmatprep.subr.mxu0 0.0
    %1360 = vmatpush1.xpose.msra.mxu0 0.0
    %1361 = vmatprep.subr.mxu0 0.0
    %1362 = vmatpush1.xpose.msra.mxu0 0.0
    %1363 = vmatprep.subr.mxu0 0.0
    %1364 = vmatpush1.xpose.msra.mxu0 0.0
    %1365 = vmatprep.subr.mxu0 0.0
    %1366 = vmatpush1.xpose.msra.mxu0 0.0
    %1367 = vmatprep.subr.mxu0 0.0
    %1368 = vmatpush1.xpose.msra.mxu0 0.0
    %1369 = vmatprep.subr.mxu0 0.0
    %1370 = vmatpush1.xpose.msra.mxu0 0.0
    %1371 = vmatprep.subr.mxu0 0.0
    %1372 = vmatpush1.xpose.msra.mxu0 0.0
    %1373 = vmatprep.subr.mxu0 0.0
    %1374 = vmatpush1.xpose.msra.mxu0 0.0
    %1375 = vmatprep.subr.mxu0 0.0
    %1376 = vmatpush1.xpose.msra.mxu0 0.0
    %1377 = vmatprep.subr.mxu0 0.0
    %1378 = vmatpush1.xpose.msra.mxu0 0.0
    %1379 = vmatprep.subr.mxu0 0.0
    %1380 = vmatpush1.xpose.msra.mxu0 0.0
    %1381 = vmatprep.subr.mxu0 0.0
    %1382 = vmatpush1.xpose.msra.mxu0 0.0
    %1383 = vmatprep.mubr.f32.mxu0 0.0
    %1384 = vmatmul.mubr.f32.gmra.mrb[0].mxu0 %v1315
    %v1385 = vpop.f32.mrb[0].mxu0
    %v1386 = vadd.f32 0.0, %v1385
    %v1387 = vpop.f32.mrb[0].mxu0
    %1388 = vdwg.mxu0
    %v1389 = vmul.f32 %v1386, 0.25
    %v1390 = vadd.f32 %v1389, %v241
    %v1391 = vsel %vm243, %v1390, -inf
    %1392 = vmax.xlane.f32.xlu0 %v1391
    %v1393 = vpop.xlane.xlu0 %1392
    %v1394 = vsub.f32 %v1390, %v1393
    %v1395 = vmul.f32 %v1394, 1.442695
    %v1396 = vpow.pop %v1395
    %v1397 = vsel %vm243, %v1396, 0.0
    %1398 = vadd.xlane.f32.xlu0 %v1397
    %v1399 = vpop.xlane.xlu0 %1398
    %v1400 = vrcp.pop %v1399
    %v1401 = vmul.f32 %v1396, %v1400
    %1402 = vrot.lane.b32.xlu0 %v1304, 64
    %v1403 = vpop.permute.xlu0 %1402
    %v1406 = vsel %vm243, %v1401, 0
    %1408 = vmatprep.subr.mxu0 0.0
    %1409 = vmatpush1.msra.mxu0 %v1403
    %1410 = vmatprep.subr.mxu0 0.0
    %1411 = vmatpush1.msra.mxu0 0.0
    %1412 = vmatprep.subr.mxu0 0.0
    %1413 = vmatpush1.msra.mxu0 0.0
    %1414 = vmatprep.subr.mxu0 0.0
    %1415 = vmatpush1.msra.mxu0 0.0
    %1416 = vmatprep.subr.mxu0 0.0
    %1417 = vmatpush1.msra.mxu0 0.0
    %1418 = vmatprep.subr.mxu0 0.0
    %1419 = vmatpush1.msra.mxu0 0.0
    %1420 = vmatprep.subr.mxu0 0.0
    %1421 = vmatpush1.msra.mxu0 0.0
    %1422 = vmatprep.subr.mxu0 0.0
    %1423 = vmatpush1.msra.mxu0 0.0
    %1424 = vmatprep.subr.mxu0 0.0
    %1425 = vmatpush1.msra.mxu0 0.0
    %1426 = vmatprep.subr.mxu0 0.0
    %1427 = vmatpush1.msra.mxu0 0.0
    %1428 = vmatprep.subr.mxu0 0.0
    %1429 = vmatpush1.msra.mxu0 0.0
    %1430 = vmatprep.subr.mxu0 0.0
    %1431 = vmatpush1.msra.mxu0 0.0
    %1432 = vmatprep.subr.mxu0 0.0
    %1433 = vmatpush1.msra.mxu0 0.0
    %1434 = vmatprep.subr.mxu0 0.0
    %1435 = vmatpush1.msra.mxu0 0.0
    %1436 = vmatprep.subr.mxu0 0.0
    %1437 = vmatpush1.msra.mxu0 0.0
    %1438 = vmatprep.subr.mxu0 0.0
    %1439 = vmatpush1.msra.mxu0 0.0
    %1440 = vmatprep.subr.mxu0 0.0
    %1441 = vmatpush1.msra.mxu0 0.0
    %1442 = vmatprep.subr.mxu0 0.0
    %1443 = vmatpush1.msra.mxu0 0.0
    %1444 = vmatprep.subr.mxu0 0.0
    %1445 = vmatpush1.msra.mxu0 0.0
    %1446 = vmatprep.subr.mxu0 0.0
    %1447 = vmatpush1.msra.mxu0 0.0
    %1448 = vmatprep.subr.mxu0 0.0
    %1449 = vmatpush1.msra.mxu0 0.0
    %1450 = vmatprep.subr.mxu0 0.0
    %1451 = vmatpush1.msra.mxu0 0.0
    %1452 = vmatprep.subr.mxu0 0.0
    %1453 = vmatpush1.msra.mxu0 0.0
    %1454 = vmatprep.subr.mxu0 0.0
    %1455 = vmatpush1.msra.mxu0 0.0
    %1456 = vmatprep.subr.mxu0 0.0
    %1457 = vmatpush1.msra.mxu0 0.0
    %1458 = vmatprep.subr.mxu0 0.0
    %1459 = vmatpush1.msra.mxu0 0.0
    %1460 = vmatprep.subr.mxu0 0.0
    %1461 = vmatpush1.msra.mxu0 0.0
    %1462 = vmatprep.subr.mxu0 0.0
    %1463 = vmatpush1.msra.mxu0 0.0
    %1464 = vmatprep.subr.mxu0 0.0
    %1465 = vmatpush1.msra.mxu0 0.0
    %1466 = vmatprep.subr.mxu0 0.0
    %1467 = vmatpush1.msra.mxu0 0.0
    %1468 = vmatprep.subr.mxu0 0.0
    %1469 = vmatpush1.msra.mxu0 0.0
    %1470 = vmatprep.subr.mxu0 0.0
    %1471 = vmatpush1.msra.mxu0 0.0
    %1472 = vmatprep.mubr.f32.mxu0 0.0
    %1473 = vmatmul.mubr.f32.gmra.mrb[0].mxu0 %v1406
    %v1474 = vpop.f32.mrb[0].mxu0
    %v1475 = vadd.f32 0.0, %v1474
    %v1476 = vpop.f32.mrb[0].mxu0
    %1477 = vdwg.mxu0
    %1478 = vrot.lane.b32.xlu0 %v1304, 112
    %v1479 = vpop.permute.xlu0 %1478
    %1480 = vrot.lane.b32.xlu0 %v1304, 80
    %v1481 = vpop.permute.xlu0 %1480
    %v1482 = vsel %vm162, %v1479, 0
    %v1484 = vsel %vm162, %v1481, 0
    %1486 = vmatprep.subr.mxu0 0.0
    %1487 = vmatpush1.xpose.msra.mxu0 %v1484
    %1488 = vmatprep.subr.mxu0 0.0
    %1489 = vmatpush1.xpose.msra.mxu0 0.0
    %1490 = vmatprep.subr.mxu0 0.0
    %1491 = vmatpush1.xpose.msra.mxu0 0.0
    %1492 = vmatprep.subr.mxu0 0.0
    %1493 = vmatpush1.xpose.msra.mxu0 0.0
    %1494 = vmatprep.subr.mxu0 0.0
    %1495 = vmatpush1.xpose.msra.mxu0 0.0
    %1496 = vmatprep.subr.mxu0 0.0
    %1497 = vmatpush1.xpose.msra.mxu0 0.0
    %1498 = vmatprep.subr.mxu0 0.0
    %1499 = vmatpush1.xpose.msra.mxu0 0.0
    %1500 = vmatprep.subr.mxu0 0.0
    %1501 = vmatpush1.xpose.msra.mxu0 0.0
    %1502 = vmatprep.subr.mxu0 0.0
    %1503 = vmatpush1.xpose.msra.mxu0 0.0
    %1504 = vmatprep.subr.mxu0 0.0
    %1505 = vmatpush1.xpose.msra.mxu0 0.0
    %1506 = vmatprep.subr.mxu0 0.0
    %1507 = vmatpush1.xpose.msra.mxu0 0.0
    %1508 = vmatprep.subr.mxu0 0.0
    %1509 = vmatpush1.xpose.msra.mxu0 0.0
    %1510 = vmatprep.subr.mxu0 0.0
    %1511 = vmatpush1.xpose.msra.mxu0 0.0
    %1512 = vmatprep.subr.mxu0 0.0
    %1513 = vmatpush1.xpose.msra.mxu0 0.0
    %1514 = vmatprep.subr.mxu0 0.0
    %1515 = vmatpush1.xpose.msra.mxu0 0.0
    %1516 = vmatprep.subr.mxu0 0.0
    %1517 = vmatpush1.xpose.msra.mxu0 0.0
    %1518 = vmatprep.subr.mxu0 0.0
    %1519 = vmatpush1.xpose.msra.mxu0 0.0
    %1520 = vmatprep.subr.mxu0 0.0
    %1521 = vmatpush1.xpose.msra.mxu0 0.0
    %1522 = vmatprep.subr.mxu0 0.0
    %1523 = vmatpush1.xpose.msra.mxu0 0.0
    %1524 = vmatprep.subr.mxu0 0.0
    %1525 = vmatpush1.xpose.msra.mxu0 0.0
    %1526 = vmatprep.subr.mxu0 0.0
    %1527 = vmatpush1.xpose.msra.mxu0 0.0
    %1528 = vmatprep.subr.mxu0 0.0
    %1529 = vmatpush1.xpose.msra.mxu0 0.0
    %1530 = vmatprep.subr.mxu0 0.0
    %1531 = vmatpush1.xpose.msra.mxu0 0.0
    %1532 = vmatprep.subr.mxu0 0.0
    %1533 = vmatpush1.xpose.msra.mxu0 0.0
    %1534 = vmatprep.subr.mxu0 0.0
    %1535 = vmatpush1.xpose.msra.mxu0 0.0
    %1536 = vmatprep.subr.mxu0 0.0
    %1537 = vmatpush1.xpose.msra.mxu0 0.0
    %1538 = vmatprep.subr.mxu0 0.0
    %1539 = vmatpush1.xpose.msra.mxu0 0.0
    %1540 = vmatprep.subr.mxu0 0.0
    %1541 = vmatpush1.xpose.msra.mxu0 0.0
    %1542 = vmatprep.subr.mxu0 0.0
    %1543 = vmatpush1.xpose.msra.mxu0 0.0
    %1544 = vmatprep.subr.mxu0 0.0
    %1545 = vmatpush1.xpose.msra.mxu0 0.0
    %1546 = vmatprep.subr.mxu0 0.0
    %1547 = vmatpush1.xpose.msra.mxu0 0.0
    %1548 = vmatprep.subr.mxu0 0.0
    %1549 = vmatpush1.xpose.msra.mxu0 0.0
    %1550 = vmatprep.mubr.f32.mxu0 0.0
    %1551 = vmatmul.mubr.f32.gmra.mrb[0].mxu0 %v1482
    %v1552 = vpop.f32.mrb[0].mxu0
    %v1553 = vadd.f32 0.0, %v1552
    %v1554 = vpop.f32.mrb[0].mxu0
    %1555 = vdwg.mxu0
    %v1556 = vmul.f32 %v1553, 0.25
    %v1557 = vadd.f32 %v1556, %v241
    %v1558 = vsel %vm243, %v1557, -inf
    %1559 = vmax.xlane.f32.xlu0 %v1558
    %v1560 = vpop.xlane.xlu0 %1559
    %v1561 = vsub.f32 %v1557, %v1560
    %v1562 = vmul.f32 %v1561, 1.442695
    %v1563 = vpow.pop %v1562
    %v1564 = vsel %vm243, %v1563, 0.0
    %1565 = vadd.xlane.f32.xlu0 %v1564
    %v1566 = vpop.xlane.xlu0 %1565
    %v1567 = vrcp.pop %v1566
    %v1568 = vmul.f32 %v1563, %v1567
    %1569 = vrot.lane.b32.xlu0 %v1304, 48
    %v1570 = vpop.permute.xlu0 %1569
    %v1573 = vsel %vm243, %v1568, 0
    %1575 = vmatprep.subr.mxu0 0.0
    %1576 = vmatpush1.msra.mxu0 %v1570
    %1577 = vmatprep.subr.mxu0 0.0
    %1578 = vmatpush1.msra.mxu0 0.0
    %1579 = vmatprep.subr.mxu0 0.0
    %1580 = vmatpush1.msra.mxu0 0.0
    %1581 = vmatprep.subr.mxu0 0.0
    %1582 = vmatpush1.msra.mxu0 0.0
    %1583 = vmatprep.subr.mxu0 0.0
    %1584 = vmatpush1.msra.mxu0 0.0
    %1585 = vmatprep.subr.mxu0 0.0
    %1586 = vmatpush1.msra.mxu0 0.0
    %1587 = vmatprep.subr.mxu0 0.0
    %1588 = vmatpush1.msra.mxu0 0.0
    %1589 = vmatprep.subr.mxu0 0.0
    %1590 = vmatpush1.msra.mxu0 0.0
    %1591 = vmatprep.subr.mxu0 0.0
    %1592 = vmatpush1.msra.mxu0 0.0
    %1593 = vmatprep.subr.mxu0 0.0
    %1594 = vmatpush1.msra.mxu0 0.0
    %1595 = vmatprep.subr.mxu0 0.0
    %1596 = vmatpush1.msra.mxu0 0.0
    %1597 = vmatprep.subr.mxu0 0.0
    %1598 = vmatpush1.msra.mxu0 0.0
    %1599 = vmatprep.subr.mxu0 0.0
    %1600 = vmatpush1.msra.mxu0 0.0
    %1601 = vmatprep.subr.mxu0 0.0
    %1602 = vmatpush1.msra.mxu0 0.0
    %1603 = vmatprep.subr.mxu0 0.0
    %1604 = vmatpush1.msra.mxu0 0.0
    %1605 = vmatprep.subr.mxu0 0.0
    %1606 = vmatpush1.msra.mxu0 0.0
    %1607 = vmatprep.subr.mxu0 0.0
    %1608 = vmatpush1.msra.mxu0 0.0
    %1609 = vmatprep.subr.mxu0 0.0
    %1610 = vmatpush1.msra.mxu0 0.0
    %1611 = vmatprep.subr.mxu0 0.0
    %1612 = vmatpush1.msra.mxu0 0.0
    %1613 = vmatprep.subr.mxu0 0.0
    %1614 = vmatpush1.msra.mxu0 0.0
    %1615 = vmatprep.subr.mxu0 0.0
    %1616 = vmatpush1.msra.mxu0 0.0
    %1617 = vmatprep.subr.mxu0 0.0
    %1618 = vmatpush1.msra.mxu0 0.0
    %1619 = vmatprep.subr.mxu0 0.0
    %1620 = vmatpush1.msra.mxu0 0.0
    %1621 = vmatprep.subr.mxu0 0.0
    %1622 = vmatpush1.msra.mxu0 0.0
    %1623 = vmatprep.subr.mxu0 0.0
    %1624 = vmatpush1.msra.mxu0 0.0
    %1625 = vmatprep.subr.mxu0 0.0
    %1626 = vmatpush1.msra.mxu0 0.0
    %1627 = vmatprep.subr.mxu0 0.0
    %1628 = vmatpush1.msra.mxu0 0.0
    %1629 = vmatprep.subr.mxu0 0.0
    %1630 = vmatpush1.msra.mxu0 0.0
    %1631 = vmatprep.subr.mxu0 0.0
    %1632 = vmatpush1.msra.mxu0 0.0
    %1633 = vmatprep.subr.mxu0 0.0
    %1634 = vmatpush1.msra.mxu0 0.0
    %1635 = vmatprep.subr.mxu0 0.0
    %1636 = vmatpush1.msra.mxu0 0.0
    %1637 = vmatprep.subr.mxu0 0.0
    %1638 = vmatpush1.msra.mxu0 0.0
    %1639 = vmatprep.mubr.f32.mxu0 0.0
    %1640 = vmatmul.mubr.f32.gmra.mrb[0].mxu0 %v1573
    %v1641 = vpop.f32.mrb[0].mxu0
    %v1642 = vadd.f32 0.0, %v1641
    %v1643 = vpop.f32.mrb[0].mxu0
    %1644 = vdwg.mxu0
    %1646 = vrot.lane.b32.xlu0 %v1642, 16
    %v1647 = vpop.permute.xlu0 %1646
    %v1649 = vsel %vm162, %v1475, %v1647
    %1651 = vrot.lane.b32.xlu0 %v1309, 96
    %v1652 = vpop.permute.xlu0 %1651
    %v1653 = vsel %vm162, %v1309, 0
    %v1655 = vsel %vm162, %v1652, 0
    %1657 = vmatprep.subr.mxu0 0.0
    %1658 = vmatpush1.xpose.msra.mxu0 %v1655
    %1659 = vmatprep.subr.mxu0 0.0
    %1660 = vmatpush1.xpose.msra.mxu0 0.0
    %1661 = vmatprep.subr.mxu0 0.0
    %1662 = vmatpush1.xpose.msra.mxu0 0.0
    %1663 = vmatprep.subr.mxu0 0.0
    %1664 = vmatpush1.xpose.msra.mxu0 0.0
    %1665 = vmatprep.subr.mxu0 0.0
    %1666 = vmatpush1.xpose.msra.mxu0 0.0
    %1667 = vmatprep.subr.mxu0 0.0
    %1668 = vmatpush1.xpose.msra.mxu0 0.0
    %1669 = vmatprep.subr.mxu0 0.0
    %1670 = vmatpush1.xpose.msra.mxu0 0.0
    %1671 = vmatprep.subr.mxu0 0.0
    %1672 = vmatpush1.xpose.msra.mxu0 0.0
    %1673 = vmatprep.subr.mxu0 0.0
    %1674 = vmatpush1.xpose.msra.mxu0 0.0
    %1675 = vmatprep.subr.mxu0 0.0
    %1676 = vmatpush1.xpose.msra.mxu0 0.0
    %1677 = vmatprep.subr.mxu0 0.0
    %1678 = vmatpush1.xpose.msra.mxu0 0.0
    %1679 = vmatprep.subr.mxu0 0.0
    %1680 = vmatpush1.xpose.msra.mxu0 0.0
    %1681 = vmatprep.subr.mxu0 0.0
    %1682 = vmatpush1.xpose.msra.mxu0 0.0
    %1683 = vmatprep.subr.mxu0 0.0
    %1684 = vmatpush1.xpose.msra.mxu0 0.0
    %1685 = vmatprep.subr.mxu0 0.0
    %1686 = vmatpush1.xpose.msra.mxu0 0.0
    %1687 = vmatprep.subr.mxu0 0.0
    %1688 = vmatpush1.xpose.msra.mxu0 0.0
    %1689 = vmatprep.subr.mxu0 0.0
    %1690 = vmatpush1.xpose.msra.mxu0 0.0
    %1691 = vmatprep.subr.mxu0 0.0
    %1692 = vmatpush1.xpose.msra.mxu0 0.0
    %1693 = vmatprep.subr.mxu0 0.0
    %1694 = vmatpush1.xpose.msra.mxu0 0.0
    %1695 = vmatprep.subr.mxu0 0.0
    %1696 = vmatpush1.xpose.msra.mxu0 0.0
    %1697 = vmatprep.subr.mxu0 0.0
    %1698 = vmatpush1.xpose.msra.mxu0 0.0
    %1699 = vmatprep.subr.mxu0 0.0
    %1700 = vmatpush1.xpose.msra.mxu0 0.0
    %1701 = vmatprep.subr.mxu0 0.0
    %1702 = vmatpush1.xpose.msra.mxu0 0.0
    %1703 = vmatprep.subr.mxu0 0.0
    %1704 = vmatpush1.xpose.msra.mxu0 0.0
    %1705 = vmatprep.subr.mxu0 0.0
    %1706 = vmatpush1.xpose.msra.mxu0 0.0
    %1707 = vmatprep.subr.mxu0 0.0
    %1708 = vmatpush1.xpose.msra.mxu0 0.0
    %1709 = vmatprep.subr.mxu0 0.0
    %1710 = vmatpush1.xpose.msra.mxu0 0.0
    %1711 = vmatprep.subr.mxu0 0.0
    %1712 = vmatpush1.xpose.msra.mxu0 0.0
    %1713 = vmatprep.subr.mxu0 0.0
    %1714 = vmatpush1.xpose.msra.mxu0 0.0
    %1715 = vmatprep.subr.mxu0 0.0
    %1716 = vmatpush1.xpose.msra.mxu0 0.0
    %1717 = vmatprep.subr.mxu0 0.0
    %1718 = vmatpush1.xpose.msra.mxu0 0.0
    %1719 = vmatprep.subr.mxu0 0.0
    %1720 = vmatpush1.xpose.msra.mxu0 0.0
    %1721 = vmatprep.mubr.f32.mxu0 0.0
    %1722 = vmatmul.mubr.f32.gmra.mrb[0].mxu0 %v1653
    %v1723 = vpop.f32.mrb[0].mxu0
    %v1724 = vadd.f32 0.0, %v1723
    %v1725 = vpop.f32.mrb[0].mxu0
    %1726 = vdwg.mxu0
    %v1727 = vmul.f32 %v1724, 0.25
    %v1728 = vadd.f32 %v1727, %v584
    %v1729 = vsel %vm243, %v1728, -inf
    %1730 = vmax.xlane.f32.xlu0 %v1729
    %v1731 = vpop.xlane.xlu0 %1730
    %v1732 = vsub.f32 %v1728, %v1731
    %v1733 = vmul.f32 %v1732, 1.442695
    %v1734 = vpow.pop %v1733
    %v1735 = vsel %vm243, %v1734, 0.0
    %1736 = vadd.xlane.f32.xlu0 %v1735
    %v1737 = vpop.xlane.xlu0 %1736
    %v1738 = vrcp.pop %v1737
    %v1739 = vmul.f32 %v1734, %v1738
    %1740 = vrot.lane.b32.xlu0 %v1309, 64
    %v1741 = vpop.permute.xlu0 %1740
    %v1744 = vsel %vm243, %v1739, 0
    %1746 = vmatprep.subr.mxu0 0.0
    %1747 = vmatpush1.msra.mxu0 %v1741
    %1748 = vmatprep.subr.mxu0 0.0
    %1749 = vmatpush1.msra.mxu0 0.0
    %1750 = vmatprep.subr.mxu0 0.0
    %1751 = vmatpush1.msra.mxu0 0.0
    %1752 = vmatprep.subr.mxu0 0.0
    %1753 = vmatpush1.msra.mxu0 0.0
    %1754 = vmatprep.subr.mxu0 0.0
    %1755 = vmatpush1.msra.mxu0 0.0
    %1756 = vmatprep.subr.mxu0 0.0
    %1757 = vmatpush1.msra.mxu0 0.0
    %1758 = vmatprep.subr.mxu0 0.0
    %1759 = vmatpush1.msra.mxu0 0.0
    %1760 = vmatprep.subr.mxu0 0.0
    %1761 = vmatpush1.msra.mxu0 0.0
    %1762 = vmatprep.subr.mxu0 0.0
    %1763 = vmatpush1.msra.mxu0 0.0
    %1764 = vmatprep.subr.mxu0 0.0
    %1765 = vmatpush1.msra.mxu0 0.0
    %1766 = vmatprep.subr.mxu0 0.0
    %1767 = vmatpush1.msra.mxu0 0.0
    %1768 = vmatprep.subr.mxu0 0.0
    %1769 = vmatpush1.msra.mxu0 0.0
    %1770 = vmatprep.subr.mxu0 0.0
    %1771 = vmatpush1.msra.mxu0 0.0
    %1772 = vmatprep.subr.mxu0 0.0
    %1773 = vmatpush1.msra.mxu0 0.0
    %1774 = vmatprep.subr.mxu0 0.0
    %1775 = vmatpush1.msra.mxu0 0.0
    %1776 = vmatprep.subr.mxu0 0.0
    %1777 = vmatpush1.msra.mxu0 0.0
    %1778 = vmatprep.subr.mxu0 0.0
    %1779 = vmatpush1.msra.mxu0 0.0
    %1780 = vmatprep.subr.mxu0 0.0
    %1781 = vmatpush1.msra.mxu0 0.0
    %1782 = vmatprep.subr.mxu0 0.0
    %1783 = vmatpush1.msra.mxu0 0.0
    %1784 = vmatprep.subr.mxu0 0.0
    %1785 = vmatpush1.msra.mxu0 0.0
    %1786 = vmatprep.subr.mxu0 0.0
    %1787 = vmatpush1.msra.mxu0 0.0
    %1788 = vmatprep.subr.mxu0 0.0
    %1789 = vmatpush1.msra.mxu0 0.0
    %1790 = vmatprep.subr.mxu0 0.0
    %1791 = vmatpush1.msra.mxu0 0.0
    %1792 = vmatprep.subr.mxu0 0.0
    %1793 = vmatpush1.msra.mxu0 0.0
    %1794 = vmatprep.subr.mxu0 0.0
    %1795 = vmatpush1.msra.mxu0 0.0
    %1796 = vmatprep.subr.mxu0 0.0
    %1797 = vmatpush1.msra.mxu0 0.0
    %1798 = vmatprep.subr.mxu0 0.0
    %1799 = vmatpush1.msra.mxu0 0.0
    %1800 = vmatprep.subr.mxu0 0.0
    %1801 = vmatpush1.msra.mxu0 0.0
    %1802 = vmatprep.subr.mxu0 0.0
    %1803 = vmatpush1.msra.mxu0 0.0
    %1804 = vmatprep.subr.mxu0 0.0
    %1805 = vmatpush1.msra.mxu0 0.0
    %1806 = vmatprep.subr.mxu0 0.0
    %1807 = vmatpush1.msra.mxu0 0.0
    %1808 = vmatprep.subr.mxu0 0.0
    %1809 = vmatpush1.msra.mxu0 0.0
    %1810 = vmatprep.mubr.f32.mxu0 0.0
    %1811 = vmatmul.mubr.f32.gmra.mrb[0].mxu0 %v1744
    %v1812 = vpop.f32.mrb[0].mxu0
    %v1813 = vadd.f32 0.0, %v1812
    %v1814 = vpop.f32.mrb[0].mxu0
    %1815 = vdwg.mxu0
    %1816 = vrot.lane.b32.xlu0 %v1309, 112
    %v1817 = vpop.permute.xlu0 %1816
    %1818 = vrot.lane.b32.xlu0 %v1309, 80
    %v1819 = vpop.permute.xlu0 %1818
    %v1820 = vsel %vm162, %v1817, 0
    %v1822 = vsel %vm162, %v1819, 0
    %1824 = vmatprep.subr.mxu0 0.0
    %1825 = vmatpush1.xpose.msra.mxu0 %v1822
    %1826 = vmatprep.subr.mxu0 0.0
    %1827 = vmatpush1.xpose.msra.mxu0 0.0
    %1828 = vmatprep.subr.mxu0 0.0
    %1829 = vmatpush1.xpose.msra.mxu0 0.0
    %1830 = vmatprep.subr.mxu0 0.0
    %1831 = vmatpush1.xpose.msra.mxu0 0.0
    %1832 = vmatprep.subr.mxu0 0.0
    %1833 = vmatpush1.xpose.msra.mxu0 0.0
    %1834 = vmatprep.subr.mxu0 0.0
    %1835 = vmatpush1.xpose.msra.mxu0 0.0
    %1836 = vmatprep.subr.mxu0 0.0
    %1837 = vmatpush1.xpose.msra.mxu0 0.0
    %1838 = vmatprep.subr.mxu0 0.0
    %1839 = vmatpush1.xpose.msra.mxu0 0.0
    %1840 = vmatprep.subr.mxu0 0.0
    %1841 = vmatpush1.xpose.msra.mxu0 0.0
    %1842 = vmatprep.subr.mxu0 0.0
    %1843 = vmatpush1.xpose.msra.mxu0 0.0
    %1844 = vmatprep.subr.mxu0 0.0
    %1845 = vmatpush1.xpose.msra.mxu0 0.0
    %1846 = vmatprep.subr.mxu0 0.0
    %1847 = vmatpush1.xpose.msra.mxu0 0.0
    %1848 = vmatprep.subr.mxu0 0.0
    %1849 = vmatpush1.xpose.msra.mxu0 0.0
    %1850 = vmatprep.subr.mxu0 0.0
    %1851 = vmatpush1.xpose.msra.mxu0 0.0
    %1852 = vmatprep.subr.mxu0 0.0
    %1853 = vmatpush1.xpose.msra.mxu0 0.0
    %1854 = vmatprep.subr.mxu0 0.0
    %1855 = vmatpush1.xpose.msra.mxu0 0.0
    %1856 = vmatprep.subr.mxu0 0.0
    %1857 = vmatpush1.xpose.msra.mxu0 0.0
    %1858 = vmatprep.subr.mxu0 0.0
    %1859 = vmatpush1.xpose.msra.mxu0 0.0
    %1860 = vmatprep.subr.mxu0 0.0
    %1861 = vmatpush1.xpose.msra.mxu0 0.0
    %1862 = vmatprep.subr.mxu0 0.0
    %1863 = vmatpush1.xpose.msra.mxu0 0.0
    %1864 = vmatprep.subr.mxu0 0.0
    %1865 = vmatpush1.xpose.msra.mxu0 0.0
    %1866 = vmatprep.subr.mxu0 0.0
    %1867 = vmatpush1.xpose.msra.mxu0 0.0
    %1868 = vmatprep.subr.mxu0 0.0
    %1869 = vmatpush1.xpose.msra.mxu0 0.0
    %1870 = vmatprep.subr.mxu0 0.0
    %1871 = vmatpush1.xpose.msra.mxu0 0.0
    %1872 = vmatprep.subr.mxu0 0.0
    %1873 = vmatpush1.xpose.msra.mxu0 0.0
    %1874 = vmatprep.subr.mxu0 0.0
    %1875 = vmatpush1.xpose.msra.mxu0 0.0
    %1876 = vmatprep.subr.mxu0 0.0
    %1877 = vmatpush1.xpose.msra.mxu0 0.0
    %1878 = vmatprep.subr.mxu0 0.0
    %1879 = vmatpush1.xpose.msra.mxu0 0.0
    %1880 = vmatprep.subr.mxu0 0.0
    %1881 = vmatpush1.xpose.msra.mxu0 0.0
    %1882 = vmatprep.subr.mxu0 0.0
    %1883 = vmatpush1.xpose.msra.mxu0 0.0
    %1884 = vmatprep.subr.mxu0 0.0
    %1885 = vmatpush1.xpose.msra.mxu0 0.0
    %1886 = vmatprep.subr.mxu0 0.0
    %1887 = vmatpush1.xpose.msra.mxu0 0.0
    %1888 = vmatprep.mubr.f32.mxu0 0.0
    %1889 = vmatmul.mubr.f32.gmra.mrb[0].mxu0 %v1820
    %v1890 = vpop.f32.mrb[0].mxu0
    %v1891 = vadd.f32 0.0, %v1890
    %v1892 = vpop.f32.mrb[0].mxu0
    %1893 = vdwg.mxu0
    %v1894 = vmul.f32 %v1891, 0.25
    %v1895 = vadd.f32 %v1894, %v584
    %v1896 = vsel %vm243, %v1895, -inf
    %1897 = vmax.xlane.f32.xlu0 %v1896
    %v1898 = vpop.xlane.xlu0 %1897
    %v1899 = vsub.f32 %v1895, %v1898
    %v1900 = vmul.f32 %v1899, 1.442695
    %v1901 = vpow.pop %v1900
    %v1902 = vsel %vm243, %v1901, 0.0
    %1903 = vadd.xlane.f32.xlu0 %v1902
    %v1904 = vpop.xlane.xlu0 %1903
    %v1905 = vrcp.pop %v1904
    %v1906 = vmul.f32 %v1901, %v1905
    %1907 = vrot.lane.b32.xlu0 %v1309, 48
    %v1908 = vpop.permute.xlu0 %1907
    %v1911 = vsel %vm243, %v1906, 0
    %1913 = vmatprep.subr.mxu0 0.0
    %1914 = vmatpush1.msra.mxu0 %v1908
    %1915 = vmatprep.subr.mxu0 0.0
    %1916 = vmatpush1.msra.mxu0 0.0
    %1917 = vmatprep.subr.mxu0 0.0
    %1918 = vmatpush1.msra.mxu0 0.0
    %1919 = vmatprep.subr.mxu0 0.0
    %1920 = vmatpush1.msra.mxu0 0.0
    %1921 = vmatprep.subr.mxu0 0.0
    %1922 = vmatpush1.msra.mxu0 0.0
    %1923 = vmatprep.subr.mxu0 0.0
    %1924 = vmatpush1.msra.mxu0 0.0
    %1925 = vmatprep.subr.mxu0 0.0
    %1926 = vmatpush1.msra.mxu0 0.0
    %1927 = vmatprep.subr.mxu0 0.0
    %1928 = vmatpush1.msra.mxu0 0.0
    %1929 = vmatprep.subr.mxu0 0.0
    %1930 = vmatpush1.msra.mxu0 0.0
    %1931 = vmatprep.subr.mxu0 0.0
    %1932 = vmatpush1.msra.mxu0 0.0
    %1933 = vmatprep.subr.mxu0 0.0
    %1934 = vmatpush1.msra.mxu0 0.0
    %1935 = vmatprep.subr.mxu0 0.0
    %1936 = vmatpush1.msra.mxu0 0.0
    %1937 = vmatprep.subr.mxu0 0.0
    %1938 = vmatpush1.msra.mxu0 0.0
    %1939 = vmatprep.subr.mxu0 0.0
    %1940 = vmatpush1.msra.mxu0 0.0
    %1941 = vmatprep.subr.mxu0 0.0
    %1942 = vmatpush1.msra.mxu0 0.0
    %1943 = vmatprep.subr.mxu0 0.0
    %1944 = vmatpush1.msra.mxu0 0.0
    %1945 = vmatprep.subr.mxu0 0.0
    %1946 = vmatpush1.msra.mxu0 0.0
    %1947 = vmatprep.subr.mxu0 0.0
    %1948 = vmatpush1.msra.mxu0 0.0
    %1949 = vmatprep.subr.mxu0 0.0
    %1950 = vmatpush1.msra.mxu0 0.0
    %1951 = vmatprep.subr.mxu0 0.0
    %1952 = vmatpush1.msra.mxu0 0.0
    %1953 = vmatprep.subr.mxu0 0.0
    %1954 = vmatpush1.msra.mxu0 0.0
    %1955 = vmatprep.subr.mxu0 0.0
    %1956 = vmatpush1.msra.mxu0 0.0
    %1957 = vmatprep.subr.mxu0 0.0
    %1958 = vmatpush1.msra.mxu0 0.0
    %1959 = vmatprep.subr.mxu0 0.0
    %1960 = vmatpush1.msra.mxu0 0.0
    %1961 = vmatprep.subr.mxu0 0.0
    %1962 = vmatpush1.msra.mxu0 0.0
    %1963 = vmatprep.subr.mxu0 0.0
    %1964 = vmatpush1.msra.mxu0 0.0
    %1965 = vmatprep.subr.mxu0 0.0
    %1966 = vmatpush1.msra.mxu0 0.0
    %1967 = vmatprep.subr.mxu0 0.0
    %1968 = vmatpush1.msra.mxu0 0.0
    %1969 = vmatprep.subr.mxu0 0.0
    %1970 = vmatpush1.msra.mxu0 0.0
    %1971 = vmatprep.subr.mxu0 0.0
    %1972 = vmatpush1.msra.mxu0 0.0
    %1973 = vmatprep.subr.mxu0 0.0
    %1974 = vmatpush1.msra.mxu0 0.0
    %1975 = vmatprep.subr.mxu0 0.0
    %1976 = vmatpush1.msra.mxu0 0.0
    %1977 = vmatprep.mubr.f32.mxu0 0.0
    %1978 = vmatmul.mubr.f32.gmra.mrb[0].mxu0 %v1911
    %v1979 = vpop.f32.mrb[0].mxu0
    %v1980 = vadd.f32 0.0, %v1979
    %v1981 = vpop.f32.mrb[0].mxu0
    %1982 = vdwg.mxu0
    %1984 = vrot.lane.b32.xlu0 %v1980, 16
    %v1985 = vpop.permute.xlu0 %1984
    %v1987 = vsel %vm162, %v1813, %v1985
    %v1988 = vld [vmem:[%s3 + $0x70] sm:$0xff]
    %v1989 = vld [vmem:[%s3 + $0x78] sm:$0xff]
    %v1990 = vld [vmem:[%s3 + $0x80] sm:$0xff]
    %v1991 = vld [vmem:[%s3 + $0x88] sm:$0xff]
    %v1992 = vld [vmem:[%s3 + $0xd0] sm:$0x1]
    %v1993 = vlaneseq
    %v1994 = vshrl.u32 %v1993, 7
    %v1995 = vsub.s32 0, %v1994
    %v1996 = vrot.slane %v1992, %v1995
    %v1998 = vsel %vm29, %v1649, 0
    %v2001 = vsel %vm29, %v1987, 0
    %2003 = vmatprep.subr.mxu0 0.0
    %2004 = vmatpush1.msra.mxu0 %v1988
    %2005 = vmatprep.subr.mxu0 0.0
    %2006 = vmatpush1.msra.mxu0 %v1989
    %2007 = vmatprep.subr.mxu0 0.0
    %2008 = vmatpush1.msra.mxu0 %v1990
    %2009 = vmatprep.subr.mxu0 0.0
    %2010 = vmatpush1.msra.mxu0 %v1991
    %2011 = vmatprep.subr.mxu0 0.0
    %2012 = vmatpush1.msra.mxu0 0.0
    %2013 = vmatprep.subr.mxu0 0.0
    %2014 = vmatpush1.msra.mxu0 0.0
    %2015 = vmatprep.subr.mxu0 0.0
    %2016 = vmatpush1.msra.mxu0 0.0
    %2017 = vmatprep.subr.mxu0 0.0
    %2018 = vmatpush1.msra.mxu0 0.0
    %2019 = vmatprep.subr.mxu0 0.0
    %2020 = vmatpush1.msra.mxu0 0.0
    %2021 = vmatprep.subr.mxu0 0.0
    %2022 = vmatpush1.msra.mxu0 0.0
    %2023 = vmatprep.subr.mxu0 0.0
    %2024 = vmatpush1.msra.mxu0 0.0
    %2025 = vmatprep.subr.mxu0 0.0
    %2026 = vmatpush1.msra.mxu0 0.0
    %2027 = vmatprep.subr.mxu0 0.0
    %2028 = vmatpush1.msra.mxu0 0.0
    %2029 = vmatprep.subr.mxu0 0.0
    %2030 = vmatpush1.msra.mxu0 0.0
    %2031 = vmatprep.subr.mxu0 0.0
    %2032 = vmatpush1.msra.mxu0 0.0
    %2033 = vmatprep.subr.mxu0 0.0
    %2034 = vmatpush1.msra.mxu0 0.0
    %2035 = vmatprep.subr.mxu0 0.0
    %2036 = vmatpush1.msra.mxu0 0.0
    %2037 = vmatprep.subr.mxu0 0.0
    %2038 = vmatpush1.msra.mxu0 0.0
    %2039 = vmatprep.subr.mxu0 0.0
    %2040 = vmatpush1.msra.mxu0 0.0
    %2041 = vmatprep.subr.mxu0 0.0
    %2042 = vmatpush1.msra.mxu0 0.0
    %2043 = vmatprep.subr.mxu0 0.0
    %2044 = vmatpush1.msra.mxu0 0.0
    %2045 = vmatprep.subr.mxu0 0.0
    %2046 = vmatpush1.msra.mxu0 0.0
    %2047 = vmatprep.subr.mxu0 0.0
    %2048 = vmatpush1.msra.mxu0 0.0
    %2049 = vmatprep.subr.mxu0 0.0
    %2050 = vmatpush1.msra.mxu0 0.0
    %2051 = vmatprep.subr.mxu0 0.0
    %2052 = vmatpush1.msra.mxu0 0.0
    %2053 = vmatprep.subr.mxu0 0.0
    %2054 = vmatpush1.msra.mxu0 0.0
    %2055 = vmatprep.subr.mxu0 0.0
    %2056 = vmatpush1.msra.mxu0 0.0
    %2057 = vmatprep.subr.mxu0 0.0
    %2058 = vmatpush1.msra.mxu0 0.0
    %2059 = vmatprep.subr.mxu0 0.0
    %2060 = vmatpush1.msra.mxu0 0.0
    %2061 = vmatprep.subr.mxu0 0.0
    %2062 = vmatpush1.msra.mxu0 0.0
    %2063 = vmatprep.subr.mxu0 0.0
    %2064 = vmatpush1.msra.mxu0 0.0
    %2065 = vmatprep.subr.mxu0 0.0
    %2066 = vmatpush1.msra.mxu0 0.0
    %2067 = vmatprep.mubr.f32.mxu0 0.0
    %2068 = vmatmul.mubr.f32.gmra.mrb[0].mxu0 %v1998
    %v2069 = vpop.f32.mrb[0].mxu0
    %v2070 = vadd.f32 %v1996, %v2069
    %v2071 = vpop.f32.mrb[0].mxu0
    %2072 = vmatprep.mubr.f32.mxu0 0.0
    %2073 = vmatmul.mubr.f32.gmra.mrb[0].mxu0 %v2001
    %v2074 = vpop.f32.mrb[0].mxu0
    %v2075 = vadd.f32 %v1996, %v2074
    %v2076 = vpop.f32.mrb[0].mxu0
    %2077 = vdwg.mxu0
    %v2078 = vadd.f32 %v2070, %v1220
    %v2079 = vadd.f32 %v2075, %v1221
    %v2080 = vld [vmem:[%s3 + $0xd1] sm:$0x1]
    %v2081 = vld [vmem:[%s3 + $0xd2] sm:$0x1]
    %v2082 = vsel %vm29, %v2078, 0.0
    %2083 = vadd.xlane.f32.xlu0 %v2082
    %v2084 = vpop.xlane.xlu0 %2083
    %v2085 = vsel %vm29, %v2079, 0.0
    %2086 = vadd.xlane.f32.xlu0 %v2085
    %v2087 = vpop.xlane.xlu0 %2086
    %v2088 = vmul.f32 %v2084, %v36
    %v2089 = vmul.f32 %v2087, %v36
    %v2090 = vsub.f32 %v2078, %v2088
    %v2091 = vsub.f32 %v2079, %v2089
    %v2092 = vmul.f32 %v2090, %v2090
    %v2093 = vmul.f32 %v2091, %v2091
    %v2094 = vsel %vm29, %v2092, 0.0
    %2095 = vadd.xlane.f32.xlu0 %v2094
    %v2096 = vpop.xlane.xlu0 %2095
    %v2097 = vsel %vm29, %v2093, 0.0
    %2098 = vadd.xlane.f32.xlu0 %v2097
    %v2099 = vpop.xlane.xlu0 %2098
    %v2100 = vmul.f32 %v2096, %v36
    %v2101 = vmul.f32 %v2099, %v36
    %v2102 = vadd.f32 %v2100, 1e-12
    %v2103 = vadd.f32 %v2101, 1e-12
    %v2104 = vrsqrt.pop %v2102
    %v2105 = vrsqrt.pop %v2103
    %v2106 = vmul.f32 %v2090, %v2104
    %v2107 = vmul.f32 %v2091, %v2105
    %v2108 = vlaneseq
    %v2109 = vshrl.u32 %v2108, 7
    %v2110 = vsub.s32 0, %v2109
    %v2111 = vrot.slane %v2080, %v2110
    %v2112 = vmul.f32 %v2106, %v2111
    %v2113 = vmul.f32 %v2107, %v2111
    %v2114 = vlaneseq
    %v2115 = vshrl.u32 %v2114, 7
    %v2116 = vsub.s32 0, %v2115
    %v2117 = vrot.slane %v2081, %v2116
    %v2118 = vadd.f32 %v2112, %v2117
    %v2119 = vadd.f32 %v2113, %v2117
    %v2120 = vld [vmem:[%s4 + $0x28] sm:$0xff]
    %v2121 = vld [vmem:[%s4 + $0x30] sm:$0xff]
    %v2122 = vld [vmem:[%s4 + $0x38] sm:$0xff]
    %v2123 = vld [vmem:[%s4 + $0x40] sm:$0xff]
    %v2124 = vld [vmem:[%s4 + $0x48] sm:$0x1]
    %v2125 = vlaneseq
    %v2126 = vshrl.u32 %v2125, 7
    %v2127 = vsub.s32 0, %v2126
    %v2128 = vrot.slane %v2124, %v2127
    %v2130 = vsel %vm29, %v2118, 0
    %v2133 = vsel %vm29, %v2119, 0
    %2135 = vmatprep.subr.mxu0 0.0
    %2136 = vmatpush1.msra.mxu0 %v2120
    %2137 = vmatprep.subr.mxu0 0.0
    %2138 = vmatpush1.msra.mxu0 %v2121
    %2139 = vmatprep.subr.mxu0 0.0
    %2140 = vmatpush1.msra.mxu0 %v2122
    %2141 = vmatprep.subr.mxu0 0.0
    %2142 = vmatpush1.msra.mxu0 %v2123
    %2143 = vmatprep.subr.mxu0 0.0
    %2144 = vmatpush1.msra.mxu0 0.0
    %2145 = vmatprep.subr.mxu0 0.0
    %2146 = vmatpush1.msra.mxu0 0.0
    %2147 = vmatprep.subr.mxu0 0.0
    %2148 = vmatpush1.msra.mxu0 0.0
    %2149 = vmatprep.subr.mxu0 0.0
    %2150 = vmatpush1.msra.mxu0 0.0
    %2151 = vmatprep.subr.mxu0 0.0
    %2152 = vmatpush1.msra.mxu0 0.0
    %2153 = vmatprep.subr.mxu0 0.0
    %2154 = vmatpush1.msra.mxu0 0.0
    %2155 = vmatprep.subr.mxu0 0.0
    %2156 = vmatpush1.msra.mxu0 0.0
    %2157 = vmatprep.subr.mxu0 0.0
    %2158 = vmatpush1.msra.mxu0 0.0
    %2159 = vmatprep.subr.mxu0 0.0
    %2160 = vmatpush1.msra.mxu0 0.0
    %2161 = vmatprep.subr.mxu0 0.0
    %2162 = vmatpush1.msra.mxu0 0.0
    %2163 = vmatprep.subr.mxu0 0.0
    %2164 = vmatpush1.msra.mxu0 0.0
    %2165 = vmatprep.subr.mxu0 0.0
    %2166 = vmatpush1.msra.mxu0 0.0
    %2167 = vmatprep.subr.mxu0 0.0
    %2168 = vmatpush1.msra.mxu0 0.0
    %2169 = vmatprep.subr.mxu0 0.0
    %2170 = vmatpush1.msra.mxu0 0.0
    %2171 = vmatprep.subr.mxu0 0.0
    %2172 = vmatpush1.msra.mxu0 0.0
    %2173 = vmatprep.subr.mxu0 0.0
    %2174 = vmatpush1.msra.mxu0 0.0
    %2175 = vmatprep.subr.mxu0 0.0
    %2176 = vmatpush1.msra.mxu0 0.0
    %2177 = vmatprep.subr.mxu0 0.0
    %2178 = vmatpush1.msra.mxu0 0.0
    %2179 = vmatprep.subr.mxu0 0.0
    %2180 = vmatpush1.msra.mxu0 0.0
    %2181 = vmatprep.subr.mxu0 0.0
    %2182 = vmatpush1.msra.mxu0 0.0
    %2183 = vmatprep.subr.mxu0 0.0
    %2184 = vmatpush1.msra.mxu0 0.0
    %2185 = vmatprep.subr.mxu0 0.0
    %2186 = vmatpush1.msra.mxu0 0.0
    %2187 = vmatprep.subr.mxu0 0.0
    %2188 = vmatpush1.msra.mxu0 0.0
    %2189 = vmatprep.subr.mxu0 0.0
    %2190 = vmatpush1.msra.mxu0 0.0
    %2191 = vmatprep.subr.mxu0 0.0
    %2192 = vmatpush1.msra.mxu0 0.0
    %2193 = vmatprep.subr.mxu0 0.0
    %2194 = vmatpush1.msra.mxu0 0.0
    %2195 = vmatprep.subr.mxu0 0.0
    %2196 = vmatpush1.msra.mxu0 0.0
    %2197 = vmatprep.subr.mxu0 0.0
    %2198 = vmatpush1.msra.mxu0 0.0
    %2199 = vmatprep.mubr.f32.mxu0 0.0
    %2200 = vmatmul.mubr.f32.gmra.mrb[0].mxu0 %v2130
    %v2201 = vpop.f32.mrb[0].mxu0
    %v2202 = vadd.f32 %v2128, %v2201
    %v2203 = vpop.f32.mrb[0].mxu0
    %2204 = vmatprep.mubr.f32.mxu0 0.0
    %2205 = vmatmul.mubr.f32.gmra.mrb[0].mxu0 %v2133
    %v2206 = vpop.f32.mrb[0].mxu0
    %v2207 = vadd.f32 %v2128, %v2206
    %v2208 = vpop.f32.mrb[0].mxu0
    %2209 = vdwg.mxu0
    %v2210 = vmul.f32 %v2202, %v2202
    %v2211 = vmul.f32 %v2207, %v2207
    %v2212 = vmul.f32 %v2202, %v2210
    %v2213 = vmul.f32 %v2207, %v2211
    %v2214 = vmul.f32 %v2212, 0.044715
    %v2215 = vmul.f32 %v2213, 0.044715
    %v2216 = vadd.f32 %v2202, %v2214
    %v2217 = vadd.f32 %v2207, %v2215
    %v2218 = vmul.f32 %v2216, 0.7978846
    %v2219 = vmul.f32 %v2217, 0.7978846
    %v2220 = vtanh.pop %v2218
    %v2221 = vtanh.pop %v2219
    %v2222 = vadd.f32 %v2220, 1.0
    %v2223 = vadd.f32 %v2221, 1.0
    %v2224 = vmul.f32 %v2222, 0.5
    %v2225 = vmul.f32 %v2223, 0.5
    %v2226 = vmul.f32 %v2202, %v2224
    %v2227 = vmul.f32 %v2207, %v2225
    %v2228 = vld [vmem:[%s3 + $0x90] sm:$0xff]
    %v2229 = vld [vmem:[%s3 + $0x98] sm:$0xff]
    %v2230 = vld [vmem:[%s3 + $0xa0] sm:$0xff]
    %v2231 = vld [vmem:[%s3 + $0xa8] sm:$0xff]
    %v2232 = vld [vmem:[%s3 + $0xb0] sm:$0xff]
    %v2233 = vld [vmem:[%s3 + $0xb8] sm:$0xff]
    %v2234 = vld [vmem:[%s3 + $0xc0] sm:$0xff]
    %v2235 = vld [vmem:[%s3 + $0xc8] sm:$0xff]
    %v2236 = vld [vmem:[%s3 + $0xd3] sm:$0x1]
    %v2237 = vlaneseq
    %v2238 = vshrl.u32 %v2237, 7
    %v2239 = vsub.s32 0, %v2238
    %v2240 = vrot.slane %v2236, %v2239
    %v2242 = vsel %vm1098, %v2226, 0
    %v2245 = vsel %vm1098, %v2227, 0
    %2247 = vmatprep.subr.mxu0 0.0
    %2248 = vmatpush1.msra.mxu0 %v2228
    %2249 = vmatprep.subr.mxu0 0.0
    %2250 = vmatpush1.msra.mxu0 %v2229
    %2251 = vmatprep.subr.mxu0 0.0
    %2252 = vmatpush1.msra.mxu0 %v2230
    %2253 = vmatprep.subr.mxu0 0.0
    %2254 = vmatpush1.msra.mxu0 %v2231
    %2255 = vmatprep.subr.mxu0 0.0
    %2256 = vmatpush1.msra.mxu0 %v2232
    %2257 = vmatprep.subr.mxu0 0.0
    %2258 = vmatpush1.msra.mxu0 %v2233
    %2259 = vmatprep.subr.mxu0 0.0
    %2260 = vmatpush1.msra.mxu0 %v2234
    %2261 = vmatprep.subr.mxu0 0.0
    %2262 = vmatpush1.msra.mxu0 %v2235
    %2263 = vmatprep.subr.mxu0 0.0
    %2264 = vmatpush1.msra.mxu0 0.0
    %2265 = vmatprep.subr.mxu0 0.0
    %2266 = vmatpush1.msra.mxu0 0.0
    %2267 = vmatprep.subr.mxu0 0.0
    %2268 = vmatpush1.msra.mxu0 0.0
    %2269 = vmatprep.subr.mxu0 0.0
    %2270 = vmatpush1.msra.mxu0 0.0
    %2271 = vmatprep.subr.mxu0 0.0
    %2272 = vmatpush1.msra.mxu0 0.0
    %2273 = vmatprep.subr.mxu0 0.0
    %2274 = vmatpush1.msra.mxu0 0.0
    %2275 = vmatprep.subr.mxu0 0.0
    %2276 = vmatpush1.msra.mxu0 0.0
    %2277 = vmatprep.subr.mxu0 0.0
    %2278 = vmatpush1.msra.mxu0 0.0
    %2279 = vmatprep.subr.mxu0 0.0
    %2280 = vmatpush1.msra.mxu0 0.0
    %2281 = vmatprep.subr.mxu0 0.0
    %2282 = vmatpush1.msra.mxu0 0.0
    %2283 = vmatprep.subr.mxu0 0.0
    %2284 = vmatpush1.msra.mxu0 0.0
    %2285 = vmatprep.subr.mxu0 0.0
    %2286 = vmatpush1.msra.mxu0 0.0
    %2287 = vmatprep.subr.mxu0 0.0
    %2288 = vmatpush1.msra.mxu0 0.0
    %2289 = vmatprep.subr.mxu0 0.0
    %2290 = vmatpush1.msra.mxu0 0.0
    %2291 = vmatprep.subr.mxu0 0.0
    %2292 = vmatpush1.msra.mxu0 0.0
    %2293 = vmatprep.subr.mxu0 0.0
    %2294 = vmatpush1.msra.mxu0 0.0
    %2295 = vmatprep.subr.mxu0 0.0
    %2296 = vmatpush1.msra.mxu0 0.0
    %2297 = vmatprep.subr.mxu0 0.0
    %2298 = vmatpush1.msra.mxu0 0.0
    %2299 = vmatprep.subr.mxu0 0.0
    %2300 = vmatpush1.msra.mxu0 0.0
    %2301 = vmatprep.subr.mxu0 0.0
    %2302 = vmatpush1.msra.mxu0 0.0
    %2303 = vmatprep.subr.mxu0 0.0
    %2304 = vmatpush1.msra.mxu0 0.0
    %2305 = vmatprep.subr.mxu0 0.0
    %2306 = vmatpush1.msra.mxu0 0.0
    %2307 = vmatprep.subr.mxu0 0.0
    %2308 = vmatpush1.msra.mxu0 0.0
    %2309 = vmatprep.subr.mxu0 0.0
    %2310 = vmatpush1.msra.mxu0 0.0
    %2311 = vmatprep.mubr.f32.mxu0 0.0
    %2312 = vmatmul.mubr.f32.gmra.mrb[0].mxu0 %v2242
    %v2313 = vpop.f32.mrb[0].mxu0
    %v2314 = vadd.f32 %v2240, %v2313
    %v2315 = vpop.f32.mrb[0].mxu0
    %2316 = vmatprep.mubr.f32.mxu0 0.0
    %2317 = vmatmul.mubr.f32.gmra.mrb[0].mxu0 %v2245
    %v2318 = vpop.f32.mrb[0].mxu0
    %v2319 = vadd.f32 %v2240, %v2318
    %v2320 = vpop.f32.mrb[0].mxu0
    %2321 = vdwg.mxu0
    %v2322 = vadd.f32 %v2314, %v2118
    %v2323 = vadd.f32 %v2319, %v2119
    %v2324 = vld [vmem:[%s3 + $0xd4] sm:$0x1]
    %v2325 = vld [vmem:[%s3 + $0xd5] sm:$0x1]
    %v2326 = vsel %vm29, %v2322, 0.0
    %2327 = vadd.xlane.f32.xlu0 %v2326
    %v2328 = vpop.xlane.xlu0 %2327
    %v2329 = vsel %vm29, %v2323, 0.0
    %2330 = vadd.xlane.f32.xlu0 %v2329
    %v2331 = vpop.xlane.xlu0 %2330
    %v2332 = vmul.f32 %v2328, %v36
    %v2333 = vmul.f32 %v2331, %v36
    %v2334 = vsub.f32 %v2322, %v2332
    %v2335 = vsub.f32 %v2323, %v2333
    %v2336 = vmul.f32 %v2334, %v2334
    %v2337 = vmul.f32 %v2335, %v2335
    %v2338 = vsel %vm29, %v2336, 0.0
    %2339 = vadd.xlane.f32.xlu0 %v2338
    %v2340 = vpop.xlane.xlu0 %2339
    %v2341 = vsel %vm29, %v2337, 0.0
    %2342 = vadd.xlane.f32.xlu0 %v2341
    %v2343 = vpop.xlane.xlu0 %2342
    %v2344 = vmul.f32 %v2340, %v36
    %v2345 = vmul.f32 %v2343, %v36
    %v2346 = vadd.f32 %v2344, 1e-12
    %v2347 = vadd.f32 %v2345, 1e-12
    %v2348 = vrsqrt.pop %v2346
    %v2349 = vrsqrt.pop %v2347
    %v2350 = vmul.f32 %v2334, %v2348
    %v2351 = vmul.f32 %v2335, %v2349
    %v2352 = vlaneseq
    %v2353 = vshrl.u32 %v2352, 7
    %v2354 = vsub.s32 0, %v2353
    %v2355 = vrot.slane %v2324, %v2354
    %v2356 = vmul.f32 %v2350, %v2355
    %v2357 = vmul.f32 %v2351, %v2355
    %v2358 = vlaneseq
    %v2359 = vshrl.u32 %v2358, 7
    %v2360 = vsub.s32 0, %v2359
    %v2361 = vrot.slane %v2325, %v2360
    %v2362 = vadd.f32 %v2356, %v2361
    %v2363 = vadd.f32 %v2357, %v2361
    %v2365 = vrot.slane %v2363, 7
    %vm2367 = vcmask 1040384
    %v2368 = vsel %vm2367, %v2362, %v2365
    %v2369 = vadd.f32 %v2368, 0.0
    %v2370 = vld [vmem:[%s1 + $0x2] sm:$0x3]
    %v2371 = vld [vmem:[%s0 + $0x10] sm:$0xff]
    %v2372 = vld [vmem:[%s0 + $0x18] sm:$0xff]
    %v2373 = vld [vmem:[%s3 + $0xd8] sm:$0x1]
    %v2374 = vld [vmem:[%s3 + $0xd9] sm:$0x1]
    %v2375 = vsel %vm29, %v2371, 0.0
    %2376 = vadd.xlane.f32.xlu0 %v2375
    %v2377 = vpop.xlane.xlu0 %2376
    %v2378 = vsel %vm29, %v2372, 0.0
    %2379 = vadd.xlane.f32.xlu0 %v2378
    %v2380 = vpop.xlane.xlu0 %2379
    %v2381 = vmul.f32 %v2377, %v36
    %v2382 = vmul.f32 %v2380, %v36
    %v2383 = vsub.f32 %v2371, %v2381
    %v2384 = vsub.f32 %v2372, %v2382
    %v2385 = vmul.f32 %v2383, %v2383
    %v2386 = vmul.f32 %v2384, %v2384
    %v2387 = vsel %vm29, %v2385, 0.0
    %2388 = vadd.xlane.f32.xlu0 %v2387
    %v2389 = vpop.xlane.xlu0 %2388
    %v2390 = vsel %vm29, %v2386, 0.0
    %2391 = vadd.xlane.f32.xlu0 %v2390
    %v2392 = vpop.xlane.xlu0 %2391
    %v2393 = vmul.f32 %v2389, %v36
    %v2394 = vmul.f32 %v2392, %v36
    %v2395 = vadd.f32 %v2393, 1e-12
    %v2396 = vadd.f32 %v2394, 1e-12
    %v2397 = vrsqrt.pop %v2395
    %v2398 = vrsqrt.pop %v2396
    %v2399 = vmul.f32 %v2383, %v2397
    %v2400 = vmul.f32 %v2384, %v2398
    %v2401 = vlaneseq
    %v2402 = vshrl.u32 %v2401, 7
    %v2403 = vsub.s32 0, %v2402
    %v2404 = vrot.slane %v2373, %v2403
    %v2405 = vmul.f32 %v2399, %v2404
    %v2406 = vmul.f32 %v2400, %v2404
    %v2407 = vlaneseq
    %v2408 = vshrl.u32 %v2407, 7
    %v2409 = vsub.s32 0, %v2408
    %v2410 = vrot.slane %v2374, %v2409
    %v2411 = vadd.f32 %v2405, %v2410
    %v2412 = vadd.f32 %v2406, %v2410
    %v2413 = vld [vmem:[%s2 + $0x50] sm:$0xff]
    %v2414 = vld [vmem:[%s2 + $0x58] sm:$0xff]
    %v2415 = vld [vmem:[%s2 + $0x60] sm:$0xff]
    %v2416 = vld [vmem:[%s2 + $0x68] sm:$0xff]
    %v2417 = vld [vmem:[%s2 + $0x70] sm:$0x1]
    %v2418 = vlaneseq
    %v2419 = vshrl.u32 %v2418, 7
    %v2420 = vsub.s32 0, %v2419
    %v2421 = vrot.slane %v2417, %v2420
    %v2423 = vsel %vm29, %v2411, 0
    %v2426 = vsel %vm29, %v2412, 0
    %2428 = vmatprep.subr.mxu0 0.0
    %2429 = vmatpush1.msra.mxu0 %v2413
    %2430 = vmatprep.subr.mxu0 0.0
    %2431 = vmatpush1.msra.mxu0 %v2414
    %2432 = vmatprep.subr.mxu0 0.0
    %2433 = vmatpush1.msra.mxu0 %v2415
    %2434 = vmatprep.subr.mxu0 0.0
    %2435 = vmatpush1.msra.mxu0 %v2416
    %2436 = vmatprep.subr.mxu0 0.0
    %2437 = vmatpush1.msra.mxu0 0.0
    %2438 = vmatprep.subr.mxu0 0.0
    %2439 = vmatpush1.msra.mxu0 0.0
    %2440 = vmatprep.subr.mxu0 0.0
    %2441 = vmatpush1.msra.mxu0 0.0
    %2442 = vmatprep.subr.mxu0 0.0
    %2443 = vmatpush1.msra.mxu0 0.0
    %2444 = vmatprep.subr.mxu0 0.0
    %2445 = vmatpush1.msra.mxu0 0.0
    %2446 = vmatprep.subr.mxu0 0.0
    %2447 = vmatpush1.msra.mxu0 0.0
    %2448 = vmatprep.subr.mxu0 0.0
    %2449 = vmatpush1.msra.mxu0 0.0
    %2450 = vmatprep.subr.mxu0 0.0
    %2451 = vmatpush1.msra.mxu0 0.0
    %2452 = vmatprep.subr.mxu0 0.0
    %2453 = vmatpush1.msra.mxu0 0.0
    %2454 = vmatprep.subr.mxu0 0.0
    %2455 = vmatpush1.msra.mxu0 0.0
    %2456 = vmatprep.subr.mxu0 0.0
    %2457 = vmatpush1.msra.mxu0 0.0
    %2458 = vmatprep.subr.mxu0 0.0
    %2459 = vmatpush1.msra.mxu0 0.0
    %2460 = vmatprep.subr.mxu0 0.0
    %2461 = vmatpush1.msra.mxu0 0.0
    %2462 = vmatprep.subr.mxu0 0.0
    %2463 = vmatpush1.msra.mxu0 0.0
    %2464 = vmatprep.subr.mxu0 0.0
    %2465 = vmatpush1.msra.mxu0 0.0
    %2466 = vmatprep.subr.mxu0 0.0
    %2467 = vmatpush1.msra.mxu0 0.0
    %2468 = vmatprep.subr.mxu0 0.0
    %2469 = vmatpush1.msra.mxu0 0.0
    %2470 = vmatprep.subr.mxu0 0.0
    %2471 = vmatpush1.msra.mxu0 0.0
    %2472 = vmatprep.subr.mxu0 0.0
    %2473 = vmatpush1.msra.mxu0 0.0
    %2474 = vmatprep.subr.mxu0 0.0
    %2475 = vmatpush1.msra.mxu0 0.0
    %2476 = vmatprep.subr.mxu0 0.0
    %2477 = vmatpush1.msra.mxu0 0.0
    %2478 = vmatprep.subr.mxu0 0.0
    %2479 = vmatpush1.msra.mxu0 0.0
    %2480 = vmatprep.subr.mxu0 0.0
    %2481 = vmatpush1.msra.mxu0 0.0
    %2482 = vmatprep.subr.mxu0 0.0
    %2483 = vmatpush1.msra.mxu0 0.0
    %2484 = vmatprep.subr.mxu0 0.0
    %2485 = vmatpush1.msra.mxu0 0.0
    %2486 = vmatprep.subr.mxu0 0.0
    %2487 = vmatpush1.msra.mxu0 0.0
    %2488 = vmatprep.subr.mxu0 0.0
    %2489 = vmatpush1.msra.mxu0 0.0
    %2490 = vmatprep.subr.mxu0 0.0
    %2491 = vmatpush1.msra.mxu0 0.0
    %2492 = vmatprep.mubr.f32.mxu0 0.0
    %2493 = vmatmul.mubr.f32.gmra.mrb[0].mxu0 %v2423
    %v2494 = vpop.f32.mrb[0].mxu0
    %v2495 = vadd.f32 %v2421, %v2494
    %v2496 = vpop.f32.mrb[0].mxu0
    %2497 = vmatprep.mubr.f32.mxu0 0.0
    %2498 = vmatmul.mubr.f32.gmra.mrb[0].mxu0 %v2426
    %v2499 = vpop.f32.mrb[0].mxu0
    %v2500 = vadd.f32 %v2421, %v2499
    %v2501 = vpop.f32.mrb[0].mxu0
    %2502 = vdwg.mxu0
    %2504 = vrot.lane.b32.xlu0 %v2495, 96
    %v2505 = vpop.permute.xlu0 %2504
    %v2506 = vsel %vm162, %v2495, 0
    %v2508 = vsel %vm162, %v2505, 0
    %2510 = vmatprep.subr.mxu0 0.0
    %2511 = vmatpush1.xpose.msra.mxu0 %v2508
    %2512 = vmatprep.subr.mxu0 0.0
    %2513 = vmatpush1.xpose.msra.mxu0 0.0
    %2514 = vmatprep.subr.mxu0 0.0
    %2515 = vmatpush1.xpose.msra.mxu0 0.0
    %2516 = vmatprep.subr.mxu0 0.0
    %2517 = vmatpush1.xpose.msra.mxu0 0.0
    %2518 = vmatprep.subr.mxu0 0.0
    %2519 = vmatpush1.xpose.msra.mxu0 0.0
    %2520 = vmatprep.subr.mxu0 0.0
    %2521 = vmatpush1.xpose.msra.mxu0 0.0
    %2522 = vmatprep.subr.mxu0 0.0
    %2523 = vmatpush1.xpose.msra.mxu0 0.0
    %2524 = vmatprep.subr.mxu0 0.0
    %2525 = vmatpush1.xpose.msra.mxu0 0.0
    %2526 = vmatprep.subr.mxu0 0.0
    %2527 = vmatpush1.xpose.msra.mxu0 0.0
    %2528 = vmatprep.subr.mxu0 0.0
    %2529 = vmatpush1.xpose.msra.mxu0 0.0
    %2530 = vmatprep.subr.mxu0 0.0
    %2531 = vmatpush1.xpose.msra.mxu0 0.0
    %2532 = vmatprep.subr.mxu0 0.0
    %2533 = vmatpush1.xpose.msra.mxu0 0.0
    %2534 = vmatprep.subr.mxu0 0.0
    %2535 = vmatpush1.xpose.msra.mxu0 0.0
    %2536 = vmatprep.subr.mxu0 0.0
    %2537 = vmatpush1.xpose.msra.mxu0 0.0
    %2538 = vmatprep.subr.mxu0 0.0
    %2539 = vmatpush1.xpose.msra.mxu0 0.0
    %2540 = vmatprep.subr.mxu0 0.0
    %2541 = vmatpush1.xpose.msra.mxu0 0.0
    %2542 = vmatprep.subr.mxu0 0.0
    %2543 = vmatpush1.xpose.msra.mxu0 0.0
    %2544 = vmatprep.subr.mxu0 0.0
    %2545 = vmatpush1.xpose.msra.mxu0 0.0
    %2546 = vmatprep.subr.mxu0 0.0
    %2547 = vmatpush1.xpose.msra.mxu0 0.0
    %2548 = vmatprep.subr.mxu0 0.0
    %2549 = vmatpush1.xpose.msra.mxu0 0.0
    %2550 = vmatprep.subr.mxu0 0.0
    %2551 = vmatpush1.xpose.msra.mxu0 0.0
    %2552 = vmatprep.subr.mxu0 0.0
    %2553 = vmatpush1.xpose.msra.mxu0 0.0
    %2554 = vmatprep.subr.mxu0 0.0
    %2555 = vmatpush1.xpose.msra.mxu0 0.0
    %2556 = vmatprep.subr.mxu0 0.0
    %2557 = vmatpush1.xpose.msra.mxu0 0.0
    %2558 = vmatprep.subr.mxu0 0.0
    %2559 = vmatpush1.xpose.msra.mxu0 0.0
    %2560 = vmatprep.subr.mxu0 0.0
    %2561 = vmatpush1.xpose.msra.mxu0 0.0
    %2562 = vmatprep.subr.mxu0 0.0
    %2563 = vmatpush1.xpose.msra.mxu0 0.0
    %2564 = vmatprep.subr.mxu0 0.0
    %2565 = vmatpush1.xpose.msra.mxu0 0.0
    %2566 = vmatprep.subr.mxu0 0.0
    %2567 = vmatpush1.xpose.msra.mxu0 0.0
    %2568 = vmatprep.subr.mxu0 0.0
    %2569 = vmatpush1.xpose.msra.mxu0 0.0
    %2570 = vmatprep.subr.mxu0 0.0
    %2571 = vmatpush1.xpose.msra.mxu0 0.0
    %2572 = vmatprep.subr.mxu0 0.0
    %2573 = vmatpush1.xpose.msra.mxu0 0.0
    %2574 = vmatprep.mubr.f32.mxu0 0.0
    %2575 = vmatmul.mubr.f32.gmra.mrb[0].mxu0 %v2506
    %v2576 = vpop.f32.mrb[0].mxu0
    %v2577 = vadd.f32 0.0, %v2576
    %v2578 = vpop.f32.mrb[0].mxu0
    %2579 = vdwg.mxu0
    %v2580 = vmul.f32 %v2577, 0.25
    %v2581 = vlaneseq
    %v2582 = vshrl.u32 %v2581, 7
    %v2583 = vsub.s32 0, %v2582
    %v2584 = vrot.slane %v2370, %v2583
    %v2585 = vadd.f32 %v2580, %v2584
    %v2586 = vsel %vm243, %v2585, -inf
    %2587 = vmax.xlane.f32.xlu0 %v2586
    %v2588 = vpop.xlane.xlu0 %2587
    %v2589 = vsub.f32 %v2585, %v2588
    %v2590 = vmul.f32 %v2589, 1.442695
    %v2591 = vpow.pop %v2590
    %v2592 = vsel %vm243, %v2591, 0.0
    %2593 = vadd.xlane.f32.xlu0 %v2592
    %v2594 = vpop.xlane.xlu0 %2593
    %v2595 = vrcp.pop %v2594
    %v2596 = vmul.f32 %v2591, %v2595
    %2597 = vrot.lane.b32.xlu0 %v2495, 64
    %v2598 = vpop.permute.xlu0 %2597
    %v2601 = vsel %vm243, %v2596, 0
    %2603 = vmatprep.subr.mxu0 0.0
    %2604 = vmatpush1.msra.mxu0 %v2598
    %2605 = vmatprep.subr.mxu0 0.0
    %2606 = vmatpush1.msra.mxu0 0.0
    %2607 = vmatprep.subr.mxu0 0.0
    %2608 = vmatpush1.msra.mxu0 0.0
    %2609 = vmatprep.subr.mxu0 0.0
    %2610 = vmatpush1.msra.mxu0 0.0
    %2611 = vmatprep.subr.mxu0 0.0
    %2612 = vmatpush1.msra.mxu0 0.0
    %2613 = vmatprep.subr.mxu0 0.0
    %2614 = vmatpush1.msra.mxu0 0.0
    %2615 = vmatprep.subr.mxu0 0.0
    %2616 = vmatpush1.msra.mxu0 0.0
    %2617 = vmatprep.subr.mxu0 0.0
    %2618 = vmatpush1.msra.mxu0 0.0
    %2619 = vmatprep.subr.mxu0 0.0
    %2620 = vmatpush1.msra.mxu0 0.0
    %2621 = vmatprep.subr.mxu0 0.0
    %2622 = vmatpush1.msra.mxu0 0.0
    %2623 = vmatprep.subr.mxu0 0.0
    %2624 = vmatpush1.msra.mxu0 0.0
    %2625 = vmatprep.subr.mxu0 0.0
    %2626 = vmatpush1.msra.mxu0 0.0
    %2627 = vmatprep.subr.mxu0 0.0
    %2628 = vmatpush1.msra.mxu0 0.0
    %2629 = vmatprep.subr.mxu0 0.0
    %2630 = vmatpush1.msra.mxu0 0.0
    %2631 = vmatprep.subr.mxu0 0.0
    %2632 = vmatpush1.msra.mxu0 0.0
    %2633 = vmatprep.subr.mxu0 0.0
    %2634 = vmatpush1.msra.mxu0 0.0
    %2635 = vmatprep.subr.mxu0 0.0
    %2636 = vmatpush1.msra.mxu0 0.0
    %2637 = vmatprep.subr.mxu0 0.0
    %2638 = vmatpush1.msra.mxu0 0.0
    %2639 = vmatprep.subr.mxu0 0.0
    %2640 = vmatpush1.msra.mxu0 0.0
    %2641 = vmatprep.subr.mxu0 0.0
    %2642 = vmatpush1.msra.mxu0 0.0
    %2643 = vmatprep.subr.mxu0 0.0
    %2644 = vmatpush1.msra.mxu0 0.0
    %2645 = vmatprep.subr.mxu0 0.0
    %2646 = vmatpush1.msra.mxu0 0.0
    %2647 = vmatprep.subr.mxu0 0.0
    %2648 = vmatpush1.msra.mxu0 0.0
    %2649 = vmatprep.subr.mxu0 0.0
    %2650 = vmatpush1.msra.mxu0 0.0
    %2651 = vmatprep.subr.mxu0 0.0
    %2652 = vmatpush1.msra.mxu0 0.0
    %2653 = vmatprep.subr.mxu0 0.0
    %2654 = vmatpush1.msra.mxu0 0.0
    %2655 = vmatprep.subr.mxu0 0.0
    %2656 = vmatpush1.msra.mxu0 0.0
    %2657 = vmatprep.subr.mxu0 0.0
    %2658 = vmatpush1.msra.mxu0 0.0
    %2659 = vmatprep.subr.mxu0 0.0
    %2660 = vmatpush1.msra.mxu0 0.0
    %2661 = vmatprep.subr.mxu0 0.0
    %2662 = vmatpush1.msra.mxu0 0.0
    %2663 = vmatprep.subr.mxu0 0.0
    %2664 = vmatpush1.msra.mxu0 0.0
    %2665 = vmatprep.subr.mxu0 0.0
    %2666 = vmatpush1.msra.mxu0 0.0
    %2667 = vmatprep.mubr.f32.mxu0 0.0
    %2668 = vmatmul.mubr.f32.gmra.mrb[0].mxu0 %v2601
    %v2669 = vpop.f32.mrb[0].mxu0
    %v2670 = vadd.f32 0.0, %v2669
    %v2671 = vpop.f32.mrb[0].mxu0
    %2672 = vdwg.mxu0
    %2673 = vrot.lane.b32.xlu0 %v2495, 112
    %v2674 = vpop.permute.xlu0 %2673
    %2675 = vrot.lane.b32.xlu0 %v2495, 80
    %v2676 = vpop.permute.xlu0 %2675
    %v2677 = vsel %vm162, %v2674, 0
    %v2679 = vsel %vm162, %v2676, 0
    %2681 = vmatprep.subr.mxu0 0.0
    %2682 = vmatpush1.xpose.msra.mxu0 %v2679
    %2683 = vmatprep.subr.mxu0 0.0
    %2684 = vmatpush1.xpose.msra.mxu0 0.0
    %2685 = vmatprep.subr.mxu0 0.0
    %2686 = vmatpush1.xpose.msra.mxu0 0.0
    %2687 = vmatprep.subr.mxu0 0.0
    %2688 = vmatpush1.xpose.msra.mxu0 0.0
    %2689 = vmatprep.subr.mxu0 0.0
    %2690 = vmatpush1.xpose.msra.mxu0 0.0
    %2691 = vmatprep.subr.mxu0 0.0
    %2692 = vmatpush1.xpose.msra.mxu0 0.0
    %2693 = vmatprep.subr.mxu0 0.0
    %2694 = vmatpush1.xpose.msra.mxu0 0.0
    %2695 = vmatprep.subr.mxu0 0.0
    %2696 = vmatpush1.xpose.msra.mxu0 0.0
    %2697 = vmatprep.subr.mxu0 0.0
    %2698 = vmatpush1.xpose.msra.mxu0 0.0
    %2699 = vmatprep.subr.mxu0 0.0
    %2700 = vmatpush1.xpose.msra.mxu0 0.0
    %2701 = vmatprep.subr.mxu0 0.0
    %2702 = vmatpush1.xpose.msra.mxu0 0.0
    %2703 = vmatprep.subr.mxu0 0.0
    %2704 = vmatpush1.xpose.msra.mxu0 0.0
    %2705 = vmatprep.subr.mxu0 0.0
    %2706 = vmatpush1.xpose.msra.mxu0 0.0
    %2707 = vmatprep.subr.mxu0 0.0
    %2708 = vmatpush1.xpose.msra.mxu0 0.0
    %2709 = vmatprep.subr.mxu0 0.0
    %2710 = vmatpush1.xpose.msra.mxu0 0.0
    %2711 = vmatprep.subr.mxu0 0.0
    %2712 = vmatpush1.xpose.msra.mxu0 0.0
    %2713 = vmatprep.subr.mxu0 0.0
    %2714 = vmatpush1.xpose.msra.mxu0 0.0
    %2715 = vmatprep.subr.mxu0 0.0
    %2716 = vmatpush1.xpose.msra.mxu0 0.0
    %2717 = vmatprep.subr.mxu0 0.0
    %2718 = vmatpush1.xpose.msra.mxu0 0.0
    %2719 = vmatprep.subr.mxu0 0.0
    %2720 = vmatpush1.xpose.msra.mxu0 0.0
    %2721 = vmatprep.subr.mxu0 0.0
    %2722 = vmatpush1.xpose.msra.mxu0 0.0
    %2723 = vmatprep.subr.mxu0 0.0
    %2724 = vmatpush1.xpose.msra.mxu0 0.0
    %2725 = vmatprep.subr.mxu0 0.0
    %2726 = vmatpush1.xpose.msra.mxu0 0.0
    %2727 = vmatprep.subr.mxu0 0.0
    %2728 = vmatpush1.xpose.msra.mxu0 0.0
    %2729 = vmatprep.subr.mxu0 0.0
    %2730 = vmatpush1.xpose.msra.mxu0 0.0
    %2731 = vmatprep.subr.mxu0 0.0
    %2732 = vmatpush1.xpose.msra.mxu0 0.0
    %2733 = vmatprep.subr.mxu0 0.0
    %2734 = vmatpush1.xpose.msra.mxu0 0.0
    %2735 = vmatprep.subr.mxu0 0.0
    %2736 = vmatpush1.xpose.msra.mxu0 0.0
    %2737 = vmatprep.subr.mxu0 0.0
    %2738 = vmatpush1.xpose.msra.mxu0 0.0
    %2739 = vmatprep.subr.mxu0 0.0
    %2740 = vmatpush1.xpose.msra.mxu0 0.0
    %2741 = vmatprep.subr.mxu0 0.0
    %2742 = vmatpush1.xpose.msra.mxu0 0.0
    %2743 = vmatprep.subr.mxu0 0.0
    %2744 = vmatpush1.xpose.msra.mxu0 0.0
    %2745 = vmatprep.mubr.f32.mxu0 0.0
    %2746 = vmatmul.mubr.f32.gmra.mrb[0].mxu0 %v2677
    %v2747 = vpop.f32.mrb[0].mxu0
    %v2748 = vadd.f32 0.0, %v2747
    %v2749 = vpop.f32.mrb[0].mxu0
    %2750 = vdwg.mxu0
    %v2751 = vmul.f32 %v2748, 0.25
    %v2752 = vadd.f32 %v2751, %v2584
    %v2753 = vsel %vm243, %v2752, -inf
    %2754 = vmax.xlane.f32.xlu0 %v2753
    %v2755 = vpop.xlane.xlu0 %2754
    %v2756 = vsub.f32 %v2752, %v2755
    %v2757 = vmul.f32 %v2756, 1.442695
    %v2758 = vpow.pop %v2757
    %v2759 = vsel %vm243, %v2758, 0.0
    %2760 = vadd.xlane.f32.xlu0 %v2759
    %v2761 = vpop.xlane.xlu0 %2760
    %v2762 = vrcp.pop %v2761
    %v2763 = vmul.f32 %v2758, %v2762
    %2764 = vrot.lane.b32.xlu0 %v2495, 48
    %v2765 = vpop.permute.xlu0 %2764
    %v2768 = vsel %vm243, %v2763, 0
    %2770 = vmatprep.subr.mxu0 0.0
    %2771 = vmatpush1.msra.mxu0 %v2765
    %2772 = vmatprep.subr.mxu0 0.0
    %2773 = vmatpush1.msra.mxu0 0.0
    %2774 = vmatprep.subr.mxu0 0.0
    %2775 = vmatpush1.msra.mxu0 0.0
    %2776 = vmatprep.subr.mxu0 0.0
    %2777 = vmatpush1.msra.mxu0 0.0
    %2778 = vmatprep.subr.mxu0 0.0
    %2779 = vmatpush1.msra.mxu0 0.0
    %2780 = vmatprep.subr.mxu0 0.0
    %2781 = vmatpush1.msra.mxu0 0.0
    %2782 = vmatprep.subr.mxu0 0.0
    %2783 = vmatpush1.msra.mxu0 0.0
    %2784 = vmatprep.subr.mxu0 0.0
    %2785 = vmatpush1.msra.mxu0 0.0
    %2786 = vmatprep.subr.mxu0 0.0
    %2787 = vmatpush1.msra.mxu0 0.0
    %2788 = vmatprep.subr.mxu0 0.0
    %2789 = vmatpush1.msra.mxu0 0.0
    %2790 = vmatprep.subr.mxu0 0.0
    %2791 = vmatpush1.msra.mxu0 0.0
    %2792 = vmatprep.subr.mxu0 0.0
    %2793 = vmatpush1.msra.mxu0 0.0
    %2794 = vmatprep.subr.mxu0 0.0
    %2795 = vmatpush1.msra.mxu0 0.0
    %2796 = vmatprep.subr.mxu0 0.0
    %2797 = vmatpush1.msra.mxu0 0.0
    %2798 = vmatprep.subr.mxu0 0.0
    %2799 = vmatpush1.msra.mxu0 0.0
    %2800 = vmatprep.subr.mxu0 0.0
    %2801 = vmatpush1.msra.mxu0 0.0
    %2802 = vmatprep.subr.mxu0 0.0
    %2803 = vmatpush1.msra.mxu0 0.0
    %2804 = vmatprep.subr.mxu0 0.0
    %2805 = vmatpush1.msra.mxu0 0.0
    %2806 = vmatprep.subr.mxu0 0.0
    %2807 = vmatpush1.msra.mxu0 0.0
    %2808 = vmatprep.subr.mxu0 0.0
    %2809 = vmatpush1.msra.mxu0 0.0
    %2810 = vmatprep.subr.mxu0 0.0
    %2811 = vmatpush1.msra.mxu0 0.0
    %2812 = vmatprep.subr.mxu0 0.0
    %2813 = vmatpush1.msra.mxu0 0.0
    %2814 = vmatprep.subr.mxu0 0.0
    %2815 = vmatpush1.msra.mxu0 0.0
    %2816 = vmatprep.subr.mxu0 0.0
    %2817 = vmatpush1.msra.mxu0 0.0
    %2818 = vmatprep.subr.mxu0 0.0
    %2819 = vmatpush1.msra.mxu0 0.0
    %2820 = vmatprep.subr.mxu0 0.0
    %2821 = vmatpush1.msra.mxu0 0.0
    %2822 = vmatprep.subr.mxu0 0.0
    %2823 = vmatpush1.msra.mxu0 0.0
    %2824 = vmatprep.subr.mxu0 0.0
    %2825 = vmatpush1.msra.mxu0 0.0
    %2826 = vmatprep.subr.mxu0 0.0
    %2827 = vmatpush1.msra.mxu0 0.0
    %2828 = vmatprep.subr.mxu0 0.0
    %2829 = vmatpush1.msra.mxu0 0.0
    %2830 = vmatprep.subr.mxu0 0.0
    %2831 = vmatpush1.msra.mxu0 0.0
    %2832 = vmatprep.subr.mxu0 0.0
    %2833 = vmatpush1.msra.mxu0 0.0
    %2834 = vmatprep.mubr.f32.mxu0 0.0
    %2835 = vmatmul.mubr.f32.gmra.mrb[0].mxu0 %v2768
    %v2836 = vpop.f32.mrb[0].mxu0
    %v2837 = vadd.f32 0.0, %v2836
    %v2838 = vpop.f32.mrb[0].mxu0
    %2839 = vdwg.mxu0
    %2841 = vrot.lane.b32.xlu0 %v2837, 16
    %v2842 = vpop.permute.xlu0 %2841
    %v2844 = vsel %vm162, %v2670, %v2842
    %2846 = vrot.lane.b32.xlu0 %v2500, 96
    %v2847 = vpop.permute.xlu0 %2846
    %v2848 = vsel %vm162, %v2500, 0
    %v2850 = vsel %vm162, %v2847, 0
    %2852 = vmatprep.subr.mxu0 0.0
    %2853 = vmatpush1.xpose.msra.mxu0 %v2850
    %2854 = vmatprep.subr.mxu0 0.0
    %2855 = vmatpush1.xpose.msra.mxu0 0.0
    %2856 = vmatprep.subr.mxu0 0.0
    %2857 = vmatpush1.xpose.msra.mxu0 0.0
    %2858 = vmatprep.subr.mxu0 0.0
    %2859 = vmatpush1.xpose.msra.mxu0 0.0
    %2860 = vmatprep.subr.mxu0 0.0
    %2861 = vmatpush1.xpose.msra.mxu0 0.0
    %2862 = vmatprep.subr.mxu0 0.0
    %2863 = vmatpush1.xpose.msra.mxu0 0.0
    %2864 = vmatprep.subr.mxu0 0.0
    %2865 = vmatpush1.xpose.msra.mxu0 0.0
    %2866 = vmatprep.subr.mxu0 0.0
    %2867 = vmatpush1.xpose.msra.mxu0 0.0
    %2868 = vmatprep.subr.mxu0 0.0
    %2869 = vmatpush1.xpose.msra.mxu0 0.0
    %2870 = vmatprep.subr.mxu0 0.0
    %2871 = vmatpush1.xpose.msra.mxu0 0.0
    %2872 = vmatprep.subr.mxu0 0.0
    %2873 = vmatpush1.xpose.msra.mxu0 0.0
    %2874 = vmatprep.subr.mxu0 0.0
    %2875 = vmatpush1.xpose.msra.mxu0 0.0
    %2876 = vmatprep.subr.mxu0 0.0
    %2877 = vmatpush1.xpose.msra.mxu0 0.0
    %2878 = vmatprep.subr.mxu0 0.0
    %2879 = vmatpush1.xpose.msra.mxu0 0.0
    %2880 = vmatprep.subr.mxu0 0.0
    %2881 = vmatpush1.xpose.msra.mxu0 0.0
    %2882 = vmatprep.subr.mxu0 0.0
    %2883 = vmatpush1.xpose.msra.mxu0 0.0
    %2884 = vmatprep.subr.mxu0 0.0
    %2885 = vmatpush1.xpose.msra.mxu0 0.0
    %2886 = vmatprep.subr.mxu0 0.0
    %2887 = vmatpush1.xpose.msra.mxu0 0.0
    %2888 = vmatprep.subr.mxu0 0.0
    %2889 = vmatpush1.xpose.msra.mxu0 0.0
    %2890 = vmatprep.subr.mxu0 0.0
    %2891 = vmatpush1.xpose.msra.mxu0 0.0
    %2892 = vmatprep.subr.mxu0 0.0
    %2893 = vmatpush1.xpose.msra.mxu0 0.0
    %2894 = vmatprep.subr.mxu0 0.0
    %2895 = vmatpush1.xpose.msra.mxu0 0.0
    %2896 = vmatprep.subr.mxu0 0.0
    %2897 = vmatpush1.xpose.msra.mxu0 0.0
    %2898 = vmatprep.subr.mxu0 0.0
    %2899 = vmatpush1.xpose.msra.mxu0 0.0
    %2900 = vmatprep.subr.mxu0 0.0
    %2901 = vmatpush1.xpose.msra.mxu0 0.0
    %2902 = vmatprep.subr.mxu0 0.0
    %2903 = vmatpush1.xpose.msra.mxu0 0.0
    %2904 = vmatprep.subr.mxu0 0.0
    %2905 = vmatpush1.xpose.msra.mxu0 0.0
    %2906 = vmatprep.subr.mxu0 0.0
    %2907 = vmatpush1.xpose.msra.mxu0 0.0
    %2908 = vmatprep.subr.mxu0 0.0
    %2909 = vmatpush1.xpose.msra.mxu0 0.0
    %2910 = vmatprep.subr.mxu0 0.0
    %2911 = vmatpush1.xpose.msra.mxu0 0.0
    %2912 = vmatprep.subr.mxu0 0.0
    %2913 = vmatpush1.xpose.msra.mxu0 0.0
    %2914 = vmatprep.subr.mxu0 0.0
    %2915 = vmatpush1.xpose.msra.mxu0 0.0
    %2916 = vmatprep.mubr.f32.mxu0 0.0
    %2917 = vmatmul.mubr.f32.gmra.mrb[0].mxu0 %v2848
    %v2918 = vpop.f32.mrb[0].mxu0
    %v2919 = vadd.f32 0.0, %v2918
    %v2920 = vpop.f32.mrb[0].mxu0
    %2921 = vdwg.mxu0
    %v2922 = vmul.f32 %v2919, 0.25
    %v2923 = vlaneseq
    %v2924 = vshrl.u32 %v2923, 7
    %v2925 = vsub.s32 1, %v2924
    %v2926 = vrot.slane %v2370, %v2925
    %v2927 = vadd.f32 %v2922, %v2926
    %v2928 = vsel %vm243, %v2927, -inf
    %2929 = vmax.xlane.f32.xlu0 %v2928
    %v2930 = vpop.xlane.xlu0 %2929
    %v2931 = vsub.f32 %v2927, %v2930
    %v2932 = vmul.f32 %v2931, 1.442695
    %v2933 = vpow.pop %v2932
    %v2934 = vsel %vm243, %v2933, 0.0
    %2935 = vadd.xlane.f32.xlu0 %v2934
    %v2936 = vpop.xlane.xlu0 %2935
    %v2937 = vrcp.pop %v2936
    %v2938 = vmul.f32 %v2933, %v2937
    %2939 = vrot.lane.b32.xlu0 %v2500, 64
    %v2940 = vpop.permute.xlu0 %2939
    %v2943 = vsel %vm243, %v2938, 0
    %2945 = vmatprep.subr.mxu0 0.0
    %2946 = vmatpush1.msra.mxu0 %v2940
    %2947 = vmatprep.subr.mxu0 0.0
    %2948 = vmatpush1.msra.mxu0 0.0
    %2949 = vmatprep.subr.mxu0 0.0
    %2950 = vmatpush1.msra.mxu0 0.0
    %2951 = vmatprep.subr.mxu0 0.0
    %2952 = vmatpush1.msra.mxu0 0.0
    %2953 = vmatprep.subr.mxu0 0.0
    %2954 = vmatpush1.msra.mxu0 0.0
    %2955 = vmatprep.subr.mxu0 0.0
    %2956 = vmatpush1.msra.mxu0 0.0
    %2957 = vmatprep.subr.mxu0 0.0
    %2958 = vmatpush1.msra.mxu0 0.0
    %2959 = vmatprep.subr.mxu0 0.0
    %2960 = vmatpush1.msra.mxu0 0.0
    %2961 = vmatprep.subr.mxu0 0.0
    %2962 = vmatpush1.msra.mxu0 0.0
    %2963 = vmatprep.subr.mxu0 0.0
    %2964 = vmatpush1.msra.mxu0 0.0
    %2965 = vmatprep.subr.mxu0 0.0
    %2966 = vmatpush1.msra.mxu0 0.0
    %2967 = vmatprep.subr.mxu0 0.0
    %2968 = vmatpush1.msra.mxu0 0.0
    %2969 = vmatprep.subr.mxu0 0.0
    %2970 = vmatpush1.msra.mxu0 0.0
    %2971 = vmatprep.subr.mxu0 0.0
    %2972 = vmatpush1.msra.mxu0 0.0
    %2973 = vmatprep.subr.mxu0 0.0
    %2974 = vmatpush1.msra.mxu0 0.0
    %2975 = vmatprep.subr.mxu0 0.0
    %2976 = vmatpush1.msra.mxu0 0.0
    %2977 = vmatprep.subr.mxu0 0.0
    %2978 = vmatpush1.msra.mxu0 0.0
    %2979 = vmatprep.subr.mxu0 0.0
    %2980 = vmatpush1.msra.mxu0 0.0
    %2981 = vmatprep.subr.mxu0 0.0
    %2982 = vmatpush1.msra.mxu0 0.0
    %2983 = vmatprep.subr.mxu0 0.0
    %2984 = vmatpush1.msra.mxu0 0.0
    %2985 = vmatprep.subr.mxu0 0.0
    %2986 = vmatpush1.msra.mxu0 0.0
    %2987 = vmatprep.subr.mxu0 0.0
    %2988 = vmatpush1.msra.mxu0 0.0
    %2989 = vmatprep.subr.mxu0 0.0
    %2990 = vmatpush1.msra.mxu0 0.0
    %2991 = vmatprep.subr.mxu0 0.0
    %2992 = vmatpush1.msra.mxu0 0.0
    %2993 = vmatprep.subr.mxu0 0.0
    %2994 = vmatpush1.msra.mxu0 0.0
    %2995 = vmatprep.subr.mxu0 0.0
    %2996 = vmatpush1.msra.mxu0 0.0
    %2997 = vmatprep.subr.mxu0 0.0
    %2998 = vmatpush1.msra.mxu0 0.0
    %2999 = vmatprep.subr.mxu0 0.0
    %3000 = vmatpush1.msra.mxu0 0.0
    %3001 = vmatprep.subr.mxu0 0.0
    %3002 = vmatpush1.msra.mxu0 0.0
    %3003 = vmatprep.subr.mxu0 0.0
    %3004 = vmatpush1.msra.mxu0 0.0
    %3005 = vmatprep.subr.mxu0 0.0
    %3006 = vmatpush1.msra.mxu0 0.0
    %3007 = vmatprep.subr.mxu0 0.0
    %3008 = vmatpush1.msra.mxu0 0.0
    %3009 = vmatprep.mubr.f32.mxu0 0.0
    %3010 = vmatmul.mubr.f32.gmra.mrb[0].mxu0 %v2943
    %v3011 = vpop.f32.mrb[0].mxu0
    %v3012 = vadd.f32 0.0, %v3011
    %v3013 = vpop.f32.mrb[0].mxu0
    %3014 = vdwg.mxu0
    %3015 = vrot.lane.b32.xlu0 %v2500, 112
    %v3016 = vpop.permute.xlu0 %3015
    %3017 = vrot.lane.b32.xlu0 %v2500, 80
    %v3018 = vpop.permute.xlu0 %3017
    %v3019 = vsel %vm162, %v3016, 0
    %v3021 = vsel %vm162, %v3018, 0
    %3023 = vmatprep.subr.mxu0 0.0
    %3024 = vmatpush1.xpose.msra.mxu0 %v3021
    %3025 = vmatprep.subr.mxu0 0.0
    %3026 = vmatpush1.xpose.msra.mxu0 0.0
    %3027 = vmatprep.subr.mxu0 0.0
    %3028 = vmatpush1.xpose.msra.mxu0 0.0
    %3029 = vmatprep.subr.mxu0 0.0
    %3030 = vmatpush1.xpose.msra.mxu0 0.0
    %3031 = vmatprep.subr.mxu0 0.0
    %3032 = vmatpush1.xpose.msra.mxu0 0.0
    %3033 = vmatprep.subr.mxu0 0.0
    %3034 = vmatpush1.xpose.msra.mxu0 0.0
    %3035 = vmatprep.subr.mxu0 0.0
    %3036 = vmatpush1.xpose.msra.mxu0 0.0
    %3037 = vmatprep.subr.mxu0 0.0
    %3038 = vmatpush1.xpose.msra.mxu0 0.0
    %3039 = vmatprep.subr.mxu0 0.0
    %3040 = vmatpush1.xpose.msra.mxu0 0.0
    %3041 = vmatprep.subr.mxu0 0.0
    %3042 = vmatpush1.xpose.msra.mxu0 0.0
    %3043 = vmatprep.subr.mxu0 0.0
    %3044 = vmatpush1.xpose.msra.mxu0 0.0
    %3045 = vmatprep.subr.mxu0 0.0
    %3046 = vmatpush1.xpose.msra.mxu0 0.0
    %3047 = vmatprep.subr.mxu0 0.0
    %3048 = vmatpush1.xpose.msra.mxu0 0.0
    %3049 = vmatprep.subr.mxu0 0.0
    %3050 = vmatpush1.xpose.msra.mxu0 0.0
    %3051 = vmatprep.subr.mxu0 0.0
    %3052 = vmatpush1.xpose.msra.mxu0 0.0
    %3053 = vmatprep.subr.mxu0 0.0
    %3054 = vmatpush1.xpose.msra.mxu0 0.0
    %3055 = vmatprep.subr.mxu0 0.0
    %3056 = vmatpush1.xpose.msra.mxu0 0.0
    %3057 = vmatprep.subr.mxu0 0.0
    %3058 = vmatpush1.xpose.msra.mxu0 0.0
    %3059 = vmatprep.subr.mxu0 0.0
    %3060 = vmatpush1.xpose.msra.mxu0 0.0
    %3061 = vmatprep.subr.mxu0 0.0
    %3062 = vmatpush1.xpose.msra.mxu0 0.0
    %3063 = vmatprep.subr.mxu0 0.0
    %3064 = vmatpush1.xpose.msra.mxu0 0.0
    %3065 = vmatprep.subr.mxu0 0.0
    %3066 = vmatpush1.xpose.msra.mxu0 0.0
    %3067 = vmatprep.subr.mxu0 0.0
    %3068 = vmatpush1.xpose.msra.mxu0 0.0
    %3069 = vmatprep.subr.mxu0 0.0
    %3070 = vmatpush1.xpose.msra.mxu0 0.0
    %3071 = vmatprep.subr.mxu0 0.0
    %3072 = vmatpush1.xpose.msra.mxu0 0.0
    %3073 = vmatprep.subr.mxu0 0.0
    %3074 = vmatpush1.xpose.msra.mxu0 0.0
    %3075 = vmatprep.subr.mxu0 0.0
    %3076 = vmatpush1.xpose.msra.mxu0 0.0
    %3077 = vmatprep.subr.mxu0 0.0
    %3078 = vmatpush1.xpose.msra.mxu0 0.0
    %3079 = vmatprep.subr.mxu0 0.0
    %3080 = vmatpush1.xpose.msra.mxu0 0.0
    %3081 = vmatprep.subr.mxu0 0.0
    %3082 = vmatpush1.xpose.msra.mxu0 0.0
    %3083 = vmatprep.subr.mxu0 0.0
    %3084 = vmatpush1.xpose.msra.mxu0 0.0
    %3085 = vmatprep.subr.mxu0 0.0
    %3086 = vmatpush1.xpose.msra.mxu0 0.0
    %3087 = vmatprep.mubr.f32.mxu0 0.0
    %3088 = vmatmul.mubr.f32.gmra.mrb[0].mxu0 %v3019
    %v3089 = vpop.f32.mrb[0].mxu0
    %v3090 = vadd.f32 0.0, %v3089
    %v3091 = vpop.f32.mrb[0].mxu0
    %3092 = vdwg.mxu0
    %v3093 = vmul.f32 %v3090, 0.25
    %v3094 = vadd.f32 %v3093, %v2926
    %v3095 = vsel %vm243, %v3094, -inf
    %3096 = vmax.xlane.f32.xlu0 %v3095
    %v3097 = vpop.xlane.xlu0 %3096
    %v3098 = vsub.f32 %v3094, %v3097
    %v3099 = vmul.f32 %v3098, 1.442695
    %v3100 = vpow.pop %v3099
    %v3101 = vsel %vm243, %v3100, 0.0
    %3102 = vadd.xlane.f32.xlu0 %v3101
    %v3103 = vpop.xlane.xlu0 %3102
    %v3104 = vrcp.pop %v3103
    %v3105 = vmul.f32 %v3100, %v3104
    %3106 = vrot.lane.b32.xlu0 %v2500, 48
    %v3107 = vpop.permute.xlu0 %3106
    %v3110 = vsel %vm243, %v3105, 0
    %3112 = vmatprep.subr.mxu0 0.0
    %3113 = vmatpush1.msra.mxu0 %v3107
    %3114 = vmatprep.subr.mxu0 0.0
    %3115 = vmatpush1.msra.mxu0 0.0
    %3116 = vmatprep.subr.mxu0 0.0
    %3117 = vmatpush1.msra.mxu0 0.0
    %3118 = vmatprep.subr.mxu0 0.0
    %3119 = vmatpush1.msra.mxu0 0.0
    %3120 = vmatprep.subr.mxu0 0.0
    %3121 = vmatpush1.msra.mxu0 0.0
    %3122 = vmatprep.subr.mxu0 0.0
    %3123 = vmatpush1.msra.mxu0 0.0
    %3124 = vmatprep.subr.mxu0 0.0
    %3125 = vmatpush1.msra.mxu0 0.0
    %3126 = vmatprep.subr.mxu0 0.0
    %3127 = vmatpush1.msra.mxu0 0.0
    %3128 = vmatprep.subr.mxu0 0.0
    %3129 = vmatpush1.msra.mxu0 0.0
    %3130 = vmatprep.subr.mxu0 0.0
    %3131 = vmatpush1.msra.mxu0 0.0
    %3132 = vmatprep.subr.mxu0 0.0
    %3133 = vmatpush1.msra.mxu0 0.0
    %3134 = vmatprep.subr.mxu0 0.0
    %3135 = vmatpush1.msra.mxu0 0.0
    %3136 = vmatprep.subr.mxu0 0.0
    %3137 = vmatpush1.msra.mxu0 0.0
    %3138 = vmatprep.subr.mxu0 0.0
    %3139 = vmatpush1.msra.mxu0 0.0
    %3140 = vmatprep.subr.mxu0 0.0
    %3141 = vmatpush1.msra.mxu0 0.0
    %3142 = vmatprep.subr.mxu0 0.0
    %3143 = vmatpush1.msra.mxu0 0.0
    %3144 = vmatprep.subr.mxu0 0.0
    %3145 = vmatpush1.msra.mxu0 0.0
    %3146 = vmatprep.subr.mxu0 0.0
    %3147 = vmatpush1.msra.mxu0 0.0
    %3148 = vmatprep.subr.mxu0 0.0
    %3149 = vmatpush1.msra.mxu0 0.0
    %3150 = vmatprep.subr.mxu0 0.0
    %3151 = vmatpush1.msra.mxu0 0.0
    %3152 = vmatprep.subr.mxu0 0.0
    %3153 = vmatpush1.msra.mxu0 0.0
    %3154 = vmatprep.subr.mxu0 0.0
    %3155 = vmatpush1.msra.mxu0 0.0
    %3156 = vmatprep.subr.mxu0 0.0
    %3157 = vmatpush1.msra.mxu0 0.0
    %3158 = vmatprep.subr.mxu0 0.0
    %3159 = vmatpush1.msra.mxu0 0.0
    %3160 = vmatprep.subr.mxu0 0.0
    %3161 = vmatpush1.msra.mxu0 0.0
    %3162 = vmatprep.subr.mxu0 0.0
    %3163 = vmatpush1.msra.mxu0 0.0
    %3164 = vmatprep.subr.mxu0 0.0
    %3165 = vmatpush1.msra.mxu0 0.0
    %3166 = vmatprep.subr.mxu0 0.0
    %3167 = vmatpush1.msra.mxu0 0.0
    %3168 = vmatprep.subr.mxu0 0.0
    %3169 = vmatpush1.msra.mxu0 0.0
    %3170 = vmatprep.subr.mxu0 0.0
    %3171 = vmatpush1.msra.mxu0 0.0
    %3172 = vmatprep.subr.mxu0 0.0
    %3173 = vmatpush1.msra.mxu0 0.0
    %3174 = vmatprep.subr.mxu0 0.0
    %3175 = vmatpush1.msra.mxu0 0.0
    %3176 = vmatprep.mubr.f32.mxu0 0.0
    %3177 = vmatmul.mubr.f32.gmra.mrb[0].mxu0 %v3110
    %v3178 = vpop.f32.mrb[0].mxu0
    %v3179 = vadd.f32 0.0, %v3178
    %v3180 = vpop.f32.mrb[0].mxu0
    %3181 = vdwg.mxu0
    %3183 = vrot.lane.b32.xlu0 %v3179, 16
    %v3184 = vpop.permute.xlu0 %3183
    %v3186 = vsel %vm162, %v3012, %v3184
    %v3187 = vld [vmem:[%s3 + $0xe0] sm:$0xff]
    %v3188 = vld [vmem:[%s3 + $0xe8] sm:$0xff]
    %v3189 = vld [vmem:[%s3 + $0xf0] sm:$0xff]
    %v3190 = vld [vmem:[%s3 + $0xf8] sm:$0xff]
    %v3191 = vld [vmem:[%s3 + $0x140] sm:$0x1]
    %v3192 = vlaneseq
    %v3193 = vshrl.u32 %v3192, 7
    %v3194 = vsub.s32 0, %v3193
    %v3195 = vrot.slane %v3191, %v3194
    %v3197 = vsel %vm29, %v2844, 0
    %v3200 = vsel %vm29, %v3186, 0
    %3202 = vmatprep.subr.mxu0 0.0
    %3203 = vmatpush1.msra.mxu0 %v3187
    %3204 = vmatprep.subr.mxu0 0.0
    %3205 = vmatpush1.msra.mxu0 %v3188
    %3206 = vmatprep.subr.mxu0 0.0
    %3207 = vmatpush1.msra.mxu0 %v3189
    %3208 = vmatprep.subr.mxu0 0.0
    %3209 = vmatpush1.msra.mxu0 %v3190
    %3210 = vmatprep.subr.mxu0 0.0
    %3211 = vmatpush1.msra.mxu0 0.0
    %3212 = vmatprep.subr.mxu0 0.0
    %3213 = vmatpush1.msra.mxu0 0.0
    %3214 = vmatprep.subr.mxu0 0.0
    %3215 = vmatpush1.msra.mxu0 0.0
    %3216 = vmatprep.subr.mxu0 0.0
    %3217 = vmatpush1.msra.mxu0 0.0
    %3218 = vmatprep.subr.mxu0 0.0
    %3219 = vmatpush1.msra.mxu0 0.0
    %3220 = vmatprep.subr.mxu0 0.0
    %3221 = vmatpush1.msra.mxu0 0.0
    %3222 = vmatprep.subr.mxu0 0.0
    %3223 = vmatpush1.msra.mxu0 0.0
    %3224 = vmatprep.subr.mxu0 0.0
    %3225 = vmatpush1.msra.mxu0 0.0
    %3226 = vmatprep.subr.mxu0 0.0
    %3227 = vmatpush1.msra.mxu0 0.0
    %3228 = vmatprep.subr.mxu0 0.0
    %3229 = vmatpush1.msra.mxu0 0.0
    %3230 = vmatprep.subr.mxu0 0.0
    %3231 = vmatpush1.msra.mxu0 0.0
    %3232 = vmatprep.subr.mxu0 0.0
    %3233 = vmatpush1.msra.mxu0 0.0
    %3234 = vmatprep.subr.mxu0 0.0
    %3235 = vmatpush1.msra.mxu0 0.0
    %3236 = vmatprep.subr.mxu0 0.0
    %3237 = vmatpush1.msra.mxu0 0.0
    %3238 = vmatprep.subr.mxu0 0.0
    %3239 = vmatpush1.msra.mxu0 0.0
    %3240 = vmatprep.subr.mxu0 0.0
    %3241 = vmatpush1.msra.mxu0 0.0
    %3242 = vmatprep.subr.mxu0 0.0
    %3243 = vmatpush1.msra.mxu0 0.0
    %3244 = vmatprep.subr.mxu0 0.0
    %3245 = vmatpush1.msra.mxu0 0.0
    %3246 = vmatprep.subr.mxu0 0.0
    %3247 = vmatpush1.msra.mxu0 0.0
    %3248 = vmatprep.subr.mxu0 0.0
    %3249 = vmatpush1.msra.mxu0 0.0
    %3250 = vmatprep.subr.mxu0 0.0
    %3251 = vmatpush1.msra.mxu0 0.0
    %3252 = vmatprep.subr.mxu0 0.0
    %3253 = vmatpush1.msra.mxu0 0.0
    %3254 = vmatprep.subr.mxu0 0.0
    %3255 = vmatpush1.msra.mxu0 0.0
    %3256 = vmatprep.subr.mxu0 0.0
    %3257 = vmatpush1.msra.mxu0 0.0
    %3258 = vmatprep.subr.mxu0 0.0
    %3259 = vmatpush1.msra.mxu0 0.0
    %3260 = vmatprep.subr.mxu0 0.0
    %3261 = vmatpush1.msra.mxu0 0.0
    %3262 = vmatprep.subr.mxu0 0.0
    %3263 = vmatpush1.msra.mxu0 0.0
    %3264 = vmatprep.subr.mxu0 0.0
    %3265 = vmatpush1.msra.mxu0 0.0
    %3266 = vmatprep.mubr.f32.mxu0 0.0
    %3267 = vmatmul.mubr.f32.gmra.mrb[0].mxu0 %v3197
    %v3268 = vpop.f32.mrb[0].mxu0
    %v3269 = vadd.f32 %v3195, %v3268
    %v3270 = vpop.f32.mrb[0].mxu0
    %3271 = vmatprep.mubr.f32.mxu0 0.0
    %3272 = vmatmul.mubr.f32.gmra.mrb[0].mxu0 %v3200
    %v3273 = vpop.f32.mrb[0].mxu0
    %v3274 = vadd.f32 %v3195, %v3273
    %v3275 = vpop.f32.mrb[0].mxu0
    %3276 = vdwg.mxu0
    %v3277 = vadd.f32 %v3269, %v2411
    %v3278 = vadd.f32 %v3274, %v2412
    %v3279 = vld [vmem:[%s3 + $0x141] sm:$0x1]
    %v3280 = vld [vmem:[%s3 + $0x142] sm:$0x1]
    %v3281 = vsel %vm29, %v3277, 0.0
    %3282 = vadd.xlane.f32.xlu0 %v3281
    %v3283 = vpop.xlane.xlu0 %3282
    %v3284 = vsel %vm29, %v3278, 0.0
    %3285 = vadd.xlane.f32.xlu0 %v3284
    %v3286 = vpop.xlane.xlu0 %3285
    %v3287 = vmul.f32 %v3283, %v36
    %v3288 = vmul.f32 %v3286, %v36
    %v3289 = vsub.f32 %v3277, %v3287
    %v3290 = vsub.f32 %v3278, %v3288
    %v3291 = vmul.f32 %v3289, %v3289
    %v3292 = vmul.f32 %v3290, %v3290
    %v3293 = vsel %vm29, %v3291, 0.0
    %3294 = vadd.xlane.f32.xlu0 %v3293
    %v3295 = vpop.xlane.xlu0 %3294
    %v3296 = vsel %vm29, %v3292, 0.0
    %3297 = vadd.xlane.f32.xlu0 %v3296
    %v3298 = vpop.xlane.xlu0 %3297
    %v3299 = vmul.f32 %v3295, %v36
    %v3300 = vmul.f32 %v3298, %v36
    %v3301 = vadd.f32 %v3299, 1e-12
    %v3302 = vadd.f32 %v3300, 1e-12
    %v3303 = vrsqrt.pop %v3301
    %v3304 = vrsqrt.pop %v3302
    %v3305 = vmul.f32 %v3289, %v3303
    %v3306 = vmul.f32 %v3290, %v3304
    %v3307 = vlaneseq
    %v3308 = vshrl.u32 %v3307, 7
    %v3309 = vsub.s32 0, %v3308
    %v3310 = vrot.slane %v3279, %v3309
    %v3311 = vmul.f32 %v3305, %v3310
    %v3312 = vmul.f32 %v3306, %v3310
    %v3313 = vlaneseq
    %v3314 = vshrl.u32 %v3313, 7
    %v3315 = vsub.s32 0, %v3314
    %v3316 = vrot.slane %v3280, %v3315
    %v3317 = vadd.f32 %v3311, %v3316
    %v3318 = vadd.f32 %v3312, %v3316
    %v3319 = vld [vmem:[%s4 + $0x50] sm:$0xff]
    %v3320 = vld [vmem:[%s4 + $0x58] sm:$0xff]
    %v3321 = vld [vmem:[%s4 + $0x60] sm:$0xff]
    %v3322 = vld [vmem:[%s4 + $0x68] sm:$0xff]
    %v3323 = vld [vmem:[%s4 + $0x70] sm:$0x1]
    %v3324 = vlaneseq
    %v3325 = vshrl.u32 %v3324, 7
    %v3326 = vsub.s32 0, %v3325
    %v3327 = vrot.slane %v3323, %v3326
    %v3329 = vsel %vm29, %v3317, 0
    %v3332 = vsel %vm29, %v3318, 0
    %3334 = vmatprep.subr.mxu0 0.0
    %3335 = vmatpush1.msra.mxu0 %v3319
    %3336 = vmatprep.subr.mxu0 0.0
    %3337 = vmatpush1.msra.mxu0 %v3320
    %3338 = vmatprep.subr.mxu0 0.0
    %3339 = vmatpush1.msra.mxu0 %v3321
    %3340 = vmatprep.subr.mxu0 0.0
    %3341 = vmatpush1.msra.mxu0 %v3322
    %3342 = vmatprep.subr.mxu0 0.0
    %3343 = vmatpush1.msra.mxu0 0.0
    %3344 = vmatprep.subr.mxu0 0.0
    %3345 = vmatpush1.msra.mxu0 0.0
    %3346 = vmatprep.subr.mxu0 0.0
    %3347 = vmatpush1.msra.mxu0 0.0
    %3348 = vmatprep.subr.mxu0 0.0
    %3349 = vmatpush1.msra.mxu0 0.0
    %3350 = vmatprep.subr.mxu0 0.0
    %3351 = vmatpush1.msra.mxu0 0.0
    %3352 = vmatprep.subr.mxu0 0.0
    %3353 = vmatpush1.msra.mxu0 0.0
    %3354 = vmatprep.subr.mxu0 0.0
    %3355 = vmatpush1.msra.mxu0 0.0
    %3356 = vmatprep.subr.mxu0 0.0
    %3357 = vmatpush1.msra.mxu0 0.0
    %3358 = vmatprep.subr.mxu0 0.0
    %3359 = vmatpush1.msra.mxu0 0.0
    %3360 = vmatprep.subr.mxu0 0.0
    %3361 = vmatpush1.msra.mxu0 0.0
    %3362 = vmatprep.subr.mxu0 0.0
    %3363 = vmatpush1.msra.mxu0 0.0
    %3364 = vmatprep.subr.mxu0 0.0
    %3365 = vmatpush1.msra.mxu0 0.0
    %3366 = vmatprep.subr.mxu0 0.0
    %3367 = vmatpush1.msra.mxu0 0.0
    %3368 = vmatprep.subr.mxu0 0.0
    %3369 = vmatpush1.msra.mxu0 0.0
    %3370 = vmatprep.subr.mxu0 0.0
    %3371 = vmatpush1.msra.mxu0 0.0
    %3372 = vmatprep.subr.mxu0 0.0
    %3373 = vmatpush1.msra.mxu0 0.0
    %3374 = vmatprep.subr.mxu0 0.0
    %3375 = vmatpush1.msra.mxu0 0.0
    %3376 = vmatprep.subr.mxu0 0.0
    %3377 = vmatpush1.msra.mxu0 0.0
    %3378 = vmatprep.subr.mxu0 0.0
    %3379 = vmatpush1.msra.mxu0 0.0
    %3380 = vmatprep.subr.mxu0 0.0
    %3381 = vmatpush1.msra.mxu0 0.0
    %3382 = vmatprep.subr.mxu0 0.0
    %3383 = vmatpush1.msra.mxu0 0.0
    %3384 = vmatprep.subr.mxu0 0.0
    %3385 = vmatpush1.msra.mxu0 0.0
    %3386 = vmatprep.subr.mxu0 0.0
    %3387 = vmatpush1.msra.mxu0 0.0
    %3388 = vmatprep.subr.mxu0 0.0
    %3389 = vmatpush1.msra.mxu0 0.0
    %3390 = vmatprep.subr.mxu0 0.0
    %3391 = vmatpush1.msra.mxu0 0.0
    %3392 = vmatprep.subr.mxu0 0.0
    %3393 = vmatpush1.msra.mxu0 0.0
    %3394 = vmatprep.subr.mxu0 0.0
    %3395 = vmatpush1.msra.mxu0 0.0
    %3396 = vmatprep.subr.mxu0 0.0
    %3397 = vmatpush1.msra.mxu0 0.0
    %3398 = vmatprep.mubr.f32.mxu0 0.0
    %3399 = vmatmul.mubr.f32.gmra.mrb[0].mxu0 %v3329
    %v3400 = vpop.f32.mrb[0].mxu0
    %v3401 = vadd.f32 %v3327, %v3400
    %v3402 = vpop.f32.mrb[0].mxu0
    %3403 = vmatprep.mubr.f32.mxu0 0.0
    %3404 = vmatmul.mubr.f32.gmra.mrb[0].mxu0 %v3332
    %v3405 = vpop.f32.mrb[0].mxu0
    %v3406 = vadd.f32 %v3327, %v3405
    %v3407 = vpop.f32.mrb[0].mxu0
    %3408 = vdwg.mxu0
    %v3409 = vmul.f32 %v3401, %v3401
    %v3410 = vmul.f32 %v3406, %v3406
    %v3411 = vmul.f32 %v3401, %v3409
    %v3412 = vmul.f32 %v3406, %v3410
    %v3413 = vmul.f32 %v3411, 0.044715
    %v3414 = vmul.f32 %v3412, 0.044715
    %v3415 = vadd.f32 %v3401, %v3413
    %v3416 = vadd.f32 %v3406, %v3414
    %v3417 = vmul.f32 %v3415, 0.7978846
    %v3418 = vmul.f32 %v3416, 0.7978846
    %v3419 = vtanh.pop %v3417
    %v3420 = vtanh.pop %v3418
    %v3421 = vadd.f32 %v3419, 1.0
    %v3422 = vadd.f32 %v3420, 1.0
    %v3423 = vmul.f32 %v3421, 0.5
    %v3424 = vmul.f32 %v3422, 0.5
    %v3425 = vmul.f32 %v3401, %v3423
    %v3426 = vmul.f32 %v3406, %v3424
    %v3427 = vld [vmem:[%s3 + $0x100] sm:$0xff]
    %v3428 = vld [vmem:[%s3 + $0x108] sm:$0xff]
    %v3429 = vld [vmem:[%s3 + $0x110] sm:$0xff]
    %v3430 = vld [vmem:[%s3 + $0x118] sm:$0xff]
    %v3431 = vld [vmem:[%s3 + $0x120] sm:$0xff]
    %v3432 = vld [vmem:[%s3 + $0x128] sm:$0xff]
    %v3433 = vld [vmem:[%s3 + $0x130] sm:$0xff]
    %v3434 = vld [vmem:[%s3 + $0x138] sm:$0xff]
    %v3435 = vld [vmem:[%s3 + $0x143] sm:$0x1]
    %v3436 = vlaneseq
    %v3437 = vshrl.u32 %v3436, 7
    %v3438 = vsub.s32 0, %v3437
    %v3439 = vrot.slane %v3435, %v3438
    %v3441 = vsel %vm1098, %v3425, 0
    %v3444 = vsel %vm1098, %v3426, 0
    %3446 = vmatprep.subr.mxu0 0.0
    %3447 = vmatpush1.msra.mxu0 %v3427
    %3448 = vmatprep.subr.mxu0 0.0
    %3449 = vmatpush1.msra.mxu0 %v3428
    %3450 = vmatprep.subr.mxu0 0.0
    %3451 = vmatpush1.msra.mxu0 %v3429
    %3452 = vmatprep.subr.mxu0 0.0
    %3453 = vmatpush1.msra.mxu0 %v3430
    %3454 = vmatprep.subr.mxu0 0.0
    %3455 = vmatpush1.msra.mxu0 %v3431
    %3456 = vmatprep.subr.mxu0 0.0
    %3457 = vmatpush1.msra.mxu0 %v3432
    %3458 = vmatprep.subr.mxu0 0.0
    %3459 = vmatpush1.msra.mxu0 %v3433
    %3460 = vmatprep.subr.mxu0 0.0
    %3461 = vmatpush1.msra.mxu0 %v3434
    %3462 = vmatprep.subr.mxu0 0.0
    %3463 = vmatpush1.msra.mxu0 0.0
    %3464 = vmatprep.subr.mxu0 0.0
    %3465 = vmatpush1.msra.mxu0 0.0
    %3466 = vmatprep.subr.mxu0 0.0
    %3467 = vmatpush1.msra.mxu0 0.0
    %3468 = vmatprep.subr.mxu0 0.0
    %3469 = vmatpush1.msra.mxu0 0.0
    %3470 = vmatprep.subr.mxu0 0.0
    %3471 = vmatpush1.msra.mxu0 0.0
    %3472 = vmatprep.subr.mxu0 0.0
    %3473 = vmatpush1.msra.mxu0 0.0
    %3474 = vmatprep.subr.mxu0 0.0
    %3475 = vmatpush1.msra.mxu0 0.0
    %3476 = vmatprep.subr.mxu0 0.0
    %3477 = vmatpush1.msra.mxu0 0.0
    %3478 = vmatprep.subr.mxu0 0.0
    %3479 = vmatpush1.msra.mxu0 0.0
    %3480 = vmatprep.subr.mxu0 0.0
    %3481 = vmatpush1.msra.mxu0 0.0
    %3482 = vmatprep.subr.mxu0 0.0
    %3483 = vmatpush1.msra.mxu0 0.0
    %3484 = vmatprep.subr.mxu0 0.0
    %3485 = vmatpush1.msra.mxu0 0.0
    %3486 = vmatprep.subr.mxu0 0.0
    %3487 = vmatpush1.msra.mxu0 0.0
    %3488 = vmatprep.subr.mxu0 0.0
    %3489 = vmatpush1.msra.mxu0 0.0
    %3490 = vmatprep.subr.mxu0 0.0
    %3491 = vmatpush1.msra.mxu0 0.0
    %3492 = vmatprep.subr.mxu0 0.0
    %3493 = vmatpush1.msra.mxu0 0.0
    %3494 = vmatprep.subr.mxu0 0.0
    %3495 = vmatpush1.msra.mxu0 0.0
    %3496 = vmatprep.subr.mxu0 0.0
    %3497 = vmatpush1.msra.mxu0 0.0
    %3498 = vmatprep.subr.mxu0 0.0
    %3499 = vmatpush1.msra.mxu0 0.0
    %3500 = vmatprep.subr.mxu0 0.0
    %3501 = vmatpush1.msra.mxu0 0.0
    %3502 = vmatprep.subr.mxu0 0.0
    %3503 = vmatpush1.msra.mxu0 0.0
    %3504 = vmatprep.subr.mxu0 0.0
    %3505 = vmatpush1.msra.mxu0 0.0
    %3506 = vmatprep.subr.mxu0 0.0
    %3507 = vmatpush1.msra.mxu0 0.0
    %3508 = vmatprep.subr.mxu0 0.0
    %3509 = vmatpush1.msra.mxu0 0.0
    %3510 = vmatprep.mubr.f32.mxu0 0.0
    %3511 = vmatmul.mubr.f32.gmra.mrb[0].mxu0 %v3441
    %v3512 = vpop.f32.mrb[0].mxu0
    %v3513 = vadd.f32 %v3439, %v3512
    %v3514 = vpop.f32.mrb[0].mxu0
    %3515 = vmatprep.mubr.f32.mxu0 0.0
    %3516 = vmatmul.mubr.f32.gmra.mrb[0].mxu0 %v3444
    %v3517 = vpop.f32.mrb[0].mxu0
    %v3518 = vadd.f32 %v3439, %v3517
    %v3519 = vpop.f32.mrb[0].mxu0
    %3520 = vdwg.mxu0
    %v3521 = vadd.f32 %v3513, %v3317
    %v3522 = vadd.f32 %v3518, %v3318
    %v3523 = vld [vmem:[%s3 + $0x144] sm:$0x1]
    %v3524 = vld [vmem:[%s3 + $0x145] sm:$0x1]
    %v3525 = vsel %vm29, %v3521, 0.0
    %3526 = vadd.xlane.f32.xlu0 %v3525
    %v3527 = vpop.xlane.xlu0 %3526
    %v3528 = vsel %vm29, %v3522, 0.0
    %3529 = vadd.xlane.f32.xlu0 %v3528
    %v3530 = vpop.xlane.xlu0 %3529
    %v3531 = vmul.f32 %v3527, %v36
    %v3532 = vmul.f32 %v3530, %v36
    %v3533 = vsub.f32 %v3521, %v3531
    %v3534 = vsub.f32 %v3522, %v3532
    %v3535 = vmul.f32 %v3533, %v3533
    %v3536 = vmul.f32 %v3534, %v3534
    %v3537 = vsel %vm29, %v3535, 0.0
    %3538 = vadd.xlane.f32.xlu0 %v3537
    %v3539 = vpop.xlane.xlu0 %3538
    %v3540 = vsel %vm29, %v3536, 0.0
    %3541 = vadd.xlane.f32.xlu0 %v3540
    %v3542 = vpop.xlane.xlu0 %3541
    %v3543 = vmul.f32 %v3539, %v36
    %v3544 = vmul.f32 %v3542, %v36
    %v3545 = vadd.f32 %v3543, 1e-12
    %v3546 = vadd.f32 %v3544, 1e-12
    %v3547 = vrsqrt.pop %v3545
    %v3548 = vrsqrt.pop %v3546
    %v3549 = vmul.f32 %v3533, %v3547
    %v3550 = vmul.f32 %v3534, %v3548
    %v3551 = vlaneseq
    %v3552 = vshrl.u32 %v3551, 7
    %v3553 = vsub.s32 0, %v3552
    %v3554 = vrot.slane %v3523, %v3553
    %v3555 = vmul.f32 %v3549, %v3554
    %v3556 = vmul.f32 %v3550, %v3554
    %v3557 = vlaneseq
    %v3558 = vshrl.u32 %v3557, 7
    %v3559 = vsub.s32 0, %v3558
    %v3560 = vrot.slane %v3524, %v3559
    %v3561 = vadd.f32 %v3555, %v3560
    %v3562 = vadd.f32 %v3556, %v3560
    %v3563 = vld [vmem:[%s2 + $0x78] sm:$0xff]
    %v3564 = vld [vmem:[%s2 + $0x80] sm:$0xff]
    %v3565 = vld [vmem:[%s2 + $0x88] sm:$0xff]
    %v3566 = vld [vmem:[%s2 + $0x90] sm:$0xff]
    %v3567 = vld [vmem:[%s2 + $0x98] sm:$0x1]
    %v3568 = vlaneseq
    %v3569 = vshrl.u32 %v3568, 7
    %v3570 = vsub.s32 0, %v3569
    %v3571 = vrot.slane %v3567, %v3570
    %v3573 = vsel %vm29, %v3561, 0
    %v3576 = vsel %vm29, %v3562, 0
    %3578 = vmatprep.subr.mxu0 0.0
    %3579 = vmatpush1.msra.mxu0 %v3563
    %3580 = vmatprep.subr.mxu0 0.0
    %3581 = vmatpush1.msra.mxu0 %v3564
    %3582 = vmatprep.subr.mxu0 0.0
    %3583 = vmatpush1.msra.mxu0 %v3565
    %3584 = vmatprep.subr.mxu0 0.0
    %3585 = vmatpush1.msra.mxu0 %v3566
    %3586 = vmatprep.subr.mxu0 0.0
    %3587 = vmatpush1.msra.mxu0 0.0
    %3588 = vmatprep.subr.mxu0 0.0
    %3589 = vmatpush1.msra.mxu0 0.0
    %3590 = vmatprep.subr.mxu0 0.0
    %3591 = vmatpush1.msra.mxu0 0.0
    %3592 = vmatprep.subr.mxu0 0.0
    %3593 = vmatpush1.msra.mxu0 0.0
    %3594 = vmatprep.subr.mxu0 0.0
    %3595 = vmatpush1.msra.mxu0 0.0
    %3596 = vmatprep.subr.mxu0 0.0
    %3597 = vmatpush1.msra.mxu0 0.0
    %3598 = vmatprep.subr.mxu0 0.0
    %3599 = vmatpush1.msra.mxu0 0.0
    %3600 = vmatprep.subr.mxu0 0.0
    %3601 = vmatpush1.msra.mxu0 0.0
    %3602 = vmatprep.subr.mxu0 0.0
    %3603 = vmatpush1.msra.mxu0 0.0
    %3604 = vmatprep.subr.mxu0 0.0
    %3605 = vmatpush1.msra.mxu0 0.0
    %3606 = vmatprep.subr.mxu0 0.0
    %3607 = vmatpush1.msra.mxu0 0.0
    %3608 = vmatprep.subr.mxu0 0.0
    %3609 = vmatpush1.msra.mxu0 0.0
    %3610 = vmatprep.subr.mxu0 0.0
    %3611 = vmatpush1.msra.mxu0 0.0
    %3612 = vmatprep.subr.mxu0 0.0
    %3613 = vmatpush1.msra.mxu0 0.0
    %3614 = vmatprep.subr.mxu0 0.0
    %3615 = vmatpush1.msra.mxu0 0.0
    %3616 = vmatprep.subr.mxu0 0.0
    %3617 = vmatpush1.msra.mxu0 0.0
    %3618 = vmatprep.subr.mxu0 0.0
    %3619 = vmatpush1.msra.mxu0 0.0
    %3620 = vmatprep.subr.mxu0 0.0
    %3621 = vmatpush1.msra.mxu0 0.0
    %3622 = vmatprep.subr.mxu0 0.0
    %3623 = vmatpush1.msra.mxu0 0.0
    %3624 = vmatprep.subr.mxu0 0.0
    %3625 = vmatpush1.msra.mxu0 0.0
    %3626 = vmatprep.subr.mxu0 0.0
    %3627 = vmatpush1.msra.mxu0 0.0
    %3628 = vmatprep.subr.mxu0 0.0
    %3629 = vmatpush1.msra.mxu0 0.0
    %3630 = vmatprep.subr.mxu0 0.0
    %3631 = vmatpush1.msra.mxu0 0.0
    %3632 = vmatprep.subr.mxu0 0.0
    %3633 = vmatpush1.msra.mxu0 0.0
    %3634 = vmatprep.subr.mxu0 0.0
    %3635 = vmatpush1.msra.mxu0 0.0
    %3636 = vmatprep.subr.mxu0 0.0
    %3637 = vmatpush1.msra.mxu0 0.0
    %3638 = vmatprep.subr.mxu0 0.0
    %3639 = vmatpush1.msra.mxu0 0.0
    %3640 = vmatprep.subr.mxu0 0.0
    %3641 = vmatpush1.msra.mxu0 0.0
    %3642 = vmatprep.mubr.f32.mxu0 0.0
    %3643 = vmatmul.mubr.f32.gmra.mrb[0].mxu0 %v3573
    %v3644 = vpop.f32.mrb[0].mxu0
    %v3645 = vadd.f32 %v3571, %v3644
    %v3646 = vpop.f32.mrb[0].mxu0
    %3647 = vmatprep.mubr.f32.mxu0 0.0
    %3648 = vmatmul.mubr.f32.gmra.mrb[0].mxu0 %v3576
    %v3649 = vpop.f32.mrb[0].mxu0
    %v3650 = vadd.f32 %v3571, %v3649
    %v3651 = vpop.f32.mrb[0].mxu0
    %3652 = vdwg.mxu0
    %3654 = vrot.lane.b32.xlu0 %v3645, 96
    %v3655 = vpop.permute.xlu0 %3654
    %v3656 = vsel %vm162, %v3645, 0
    %v3658 = vsel %vm162, %v3655, 0
    %3660 = vmatprep.subr.mxu0 0.0
    %3661 = vmatpush1.xpose.msra.mxu0 %v3658
    %3662 = vmatprep.subr.mxu0 0.0
    %3663 = vmatpush1.xpose.msra.mxu0 0.0
    %3664 = vmatprep.subr.mxu0 0.0
    %3665 = vmatpush1.xpose.msra.mxu0 0.0
    %3666 = vmatprep.subr.mxu0 0.0
    %3667 = vmatpush1.xpose.msra.mxu0 0.0
    %3668 = vmatprep.subr.mxu0 0.0
    %3669 = vmatpush1.xpose.msra.mxu0 0.0
    %3670 = vmatprep.subr.mxu0 0.0
    %3671 = vmatpush1.xpose.msra.mxu0 0.0
    %3672 = vmatprep.subr.mxu0 0.0
    %3673 = vmatpush1.xpose.msra.mxu0 0.0
    %3674 = vmatprep.subr.mxu0 0.0
    %3675 = vmatpush1.xpose.msra.mxu0 0.0
    %3676 = vmatprep.subr.mxu0 0.0
    %3677 = vmatpush1.xpose.msra.mxu0 0.0
    %3678 = vmatprep.subr.mxu0 0.0
    %3679 = vmatpush1.xpose.msra.mxu0 0.0
    %3680 = vmatprep.subr.mxu0 0.0
    %3681 = vmatpush1.xpose.msra.mxu0 0.0
    %3682 = vmatprep.subr.mxu0 0.0
    %3683 = vmatpush1.xpose.msra.mxu0 0.0
    %3684 = vmatprep.subr.mxu0 0.0
    %3685 = vmatpush1.xpose.msra.mxu0 0.0
    %3686 = vmatprep.subr.mxu0 0.0
    %3687 = vmatpush1.xpose.msra.mxu0 0.0
    %3688 = vmatprep.subr.mxu0 0.0
    %3689 = vmatpush1.xpose.msra.mxu0 0.0
    %3690 = vmatprep.subr.mxu0 0.0
    %3691 = vmatpush1.xpose.msra.mxu0 0.0
    %3692 = vmatprep.subr.mxu0 0.0
    %3693 = vmatpush1.xpose.msra.mxu0 0.0
    %3694 = vmatprep.subr.mxu0 0.0
    %3695 = vmatpush1.xpose.msra.mxu0 0.0
    %3696 = vmatprep.subr.mxu0 0.0
    %3697 = vmatpush1.xpose.msra.mxu0 0.0
    %3698 = vmatprep.subr.mxu0 0.0
    %3699 = vmatpush1.xpose.msra.mxu0 0.0
    %3700 = vmatprep.subr.mxu0 0.0
    %3701 = vmatpush1.xpose.msra.mxu0 0.0
    %3702 = vmatprep.subr.mxu0 0.0
    %3703 = vmatpush1.xpose.msra.mxu0 0.0
    %3704 = vmatprep.subr.mxu0 0.0
    %3705 = vmatpush1.xpose.msra.mxu0 0.0
    %3706 = vmatprep.subr.mxu0 0.0
    %3707 = vmatpush1.xpose.msra.mxu0 0.0
    %3708 = vmatprep.subr.mxu0 0.0
    %3709 = vmatpush1.xpose.msra.mxu0 0.0
    %3710 = vmatprep.subr.mxu0 0.0
    %3711 = vmatpush1.xpose.msra.mxu0 0.0
    %3712 = vmatprep.subr.mxu0 0.0
    %3713 = vmatpush1.xpose.msra.mxu0 0.0
    %3714 = vmatprep.subr.mxu0 0.0
    %3715 = vmatpush1.xpose.msra.mxu0 0.0
    %3716 = vmatprep.subr.mxu0 0.0
    %3717 = vmatpush1.xpose.msra.mxu0 0.0
    %3718 = vmatprep.subr.mxu0 0.0
    %3719 = vmatpush1.xpose.msra.mxu0 0.0
    %3720 = vmatprep.subr.mxu0 0.0
    %3721 = vmatpush1.xpose.msra.mxu0 0.0
    %3722 = vmatprep.subr.mxu0 0.0
    %3723 = vmatpush1.xpose.msra.mxu0 0.0
    %3724 = vmatprep.mubr.f32.mxu0 0.0
    %3725 = vmatmul.mubr.f32.gmra.mrb[0].mxu0 %v3656
    %v3726 = vpop.f32.mrb[0].mxu0
    %v3727 = vadd.f32 0.0, %v3726
    %v3728 = vpop.f32.mrb[0].mxu0
    %3729 = vdwg.mxu0
    %v3730 = vmul.f32 %v3727, 0.25
    %v3731 = vadd.f32 %v3730, %v2584
    %v3732 = vsel %vm243, %v3731, -inf
    %3733 = vmax.xlane.f32.xlu0 %v3732
    %v3734 = vpop.xlane.xlu0 %3733
    %v3735 = vsub.f32 %v3731, %v3734
    %v3736 = vmul.f32 %v3735, 1.442695
    %v3737 = vpow.pop %v3736
    %v3738 = vsel %vm243, %v3737, 0.0
    %3739 = vadd.xlane.f32.xlu0 %v3738
    %v3740 = vpop.xlane.xlu0 %3739
    %v3741 = vrcp.pop %v3740
    %v3742 = vmul.f32 %v3737, %v3741
    %3743 = vrot.lane.b32.xlu0 %v3645, 64
    %v3744 = vpop.permute.xlu0 %3743
    %v3747 = vsel %vm243, %v3742, 0
    %3749 = vmatprep.subr.mxu0 0.0
    %3750 = vmatpush1.msra.mxu0 %v3744
    %3751 = vmatprep.subr.mxu0 0.0
    %3752 = vmatpush1.msra.mxu0 0.0
    %3753 = vmatprep.subr.mxu0 0.0
    %3754 = vmatpush1.msra.mxu0 0.0
    %3755 = vmatprep.subr.mxu0 0.0
    %3756 = vmatpush1.msra.mxu0 0.0
    %3757 = vmatprep.subr.mxu0 0.0
    %3758 = vmatpush1.msra.mxu0 0.0
    %3759 = vmatprep.subr.mxu0 0.0
    %3760 = vmatpush1.msra.mxu0 0.0
    %3761 = vmatprep.subr.mxu0 0.0
    %3762 = vmatpush1.msra.mxu0 0.0
    %3763 = vmatprep.subr.mxu0 0.0
    %3764 = vmatpush1.msra.mxu0 0.0
    %3765 = vmatprep.subr.mxu0 0.0
    %3766 = vmatpush1.msra.mxu0 0.0
    %3767 = vmatprep.subr.mxu0 0.0
    %3768 = vmatpush1.msra.mxu0 0.0
    %3769 = vmatprep.subr.mxu0 0.0
    %3770 = vmatpush1.msra.mxu0 0.0
    %3771 = vmatprep.subr.mxu0 0.0
    %3772 = vmatpush1.msra.mxu0 0.0
    %3773 = vmatprep.subr.mxu0 0.0
    %3774 = vmatpush1.msra.mxu0 0.0
    %3775 = vmatprep.subr.mxu0 0.0
    %3776 = vmatpush1.msra.mxu0 0.0
    %3777 = vmatprep.subr.mxu0 0.0
    %3778 = vmatpush1.msra.mxu0 0.0
    %3779 = vmatprep.subr.mxu0 0.0
    %3780 = vmatpush1.msra.mxu0 0.0
    %3781 = vmatprep.subr.mxu0 0.0
    %3782 = vmatpush1.msra.mxu0 0.0
    %3783 = vmatprep.subr.mxu0 0.0
    %3784 = vmatpush1.msra.mxu0 0.0
    %3785 = vmatprep.subr.mxu0 0.0
    %3786 = vmatpush1.msra.mxu0 0.0
    %3787 = vmatprep.subr.mxu0 0.0
    %3788 = vmatpush1.msra.mxu0 0.0
    %3789 = vmatprep.subr.mxu0 0.0
    %3790 = vmatpush1.msra.mxu0 0.0
    %3791 = vmatprep.subr.mxu0 0.0
    %3792 = vmatpush1.msra.mxu0 0.0
    %3793 = vmatprep.subr.mxu0 0.0
    %3794 = vmatpush1.msra.mxu0 0.0
    %3795 = vmatprep.subr.mxu0 0.0
    %3796 = vmatpush1.msra.mxu0 0.0
    %3797 = vmatprep.subr.mxu0 0.0
    %3798 = vmatpush1.msra.mxu0 0.0
    %3799 = vmatprep.subr.mxu0 0.0
    %3800 = vmatpush1.msra.mxu0 0.0
    %3801 = vmatprep.subr.mxu0 0.0
    %3802 = vmatpush1.msra.mxu0 0.0
    %3803 = vmatprep.subr.mxu0 0.0
    %3804 = vmatpush1.msra.mxu0 0.0
    %3805 = vmatprep.subr.mxu0 0.0
    %3806 = vmatpush1.msra.mxu0 0.0
    %3807 = vmatprep.subr.mxu0 0.0
    %3808 = vmatpush1.msra.mxu0 0.0
    %3809 = vmatprep.subr.mxu0 0.0
    %3810 = vmatpush1.msra.mxu0 0.0
    %3811 = vmatprep.subr.mxu0 0.0
    %3812 = vmatpush1.msra.mxu0 0.0
    %3813 = vmatprep.mubr.f32.mxu0 0.0
    %3814 = vmatmul.mubr.f32.gmra.mrb[0].mxu0 %v3747
    %v3815 = vpop.f32.mrb[0].mxu0
    %v3816 = vadd.f32 0.0, %v3815
    %v3817 = vpop.f32.mrb[0].mxu0
    %3818 = vdwg.mxu0
    %3819 = vrot.lane.b32.xlu0 %v3645, 112
    %v3820 = vpop.permute.xlu0 %3819
    %3821 = vrot.lane.b32.xlu0 %v3645, 80
    %v3822 = vpop.permute.xlu0 %3821
    %v3823 = vsel %vm162, %v3820, 0
    %v3825 = vsel %vm162, %v3822, 0
    %3827 = vmatprep.subr.mxu0 0.0
    %3828 = vmatpush1.xpose.msra.mxu0 %v3825
    %3829 = vmatprep.subr.mxu0 0.0
    %3830 = vmatpush1.xpose.msra.mxu0 0.0
    %3831 = vmatprep.subr.mxu0 0.0
    %3832 = vmatpush1.xpose.msra.mxu0 0.0
    %3833 = vmatprep.subr.mxu0 0.0
    %3834 = vmatpush1.xpose.msra.mxu0 0.0
    %3835 = vmatprep.subr.mxu0 0.0
    %3836 = vmatpush1.xpose.msra.mxu0 0.0
    %3837 = vmatprep.subr.mxu0 0.0
    %3838 = vmatpush1.xpose.msra.mxu0 0.0
    %3839 = vmatprep.subr.mxu0 0.0
    %3840 = vmatpush1.xpose.msra.mxu0 0.0
    %3841 = vmatprep.subr.mxu0 0.0
    %3842 = vmatpush1.xpose.msra.mxu0 0.0
    %3843 = vmatprep.subr.mxu0 0.0
    %3844 = vmatpush1.xpose.msra.mxu0 0.0
    %3845 = vmatprep.subr.mxu0 0.0
    %3846 = vmatpush1.xpose.msra.mxu0 0.0
    %3847 = vmatprep.subr.mxu0 0.0
    %3848 = vmatpush1.xpose.msra.mxu0 0.0
    %3849 = vmatprep.subr.mxu0 0.0
    %3850 = vmatpush1.xpose.msra.mxu0 0.0
    %3851 = vmatprep.subr.mxu0 0.0
    %3852 = vmatpush1.xpose.msra.mxu0 0.0
    %3853 = vmatprep.subr.mxu0 0.0
    %3854 = vmatpush1.xpose.msra.mxu0 0.0
    %3855 = vmatprep.subr.mxu0 0.0
    %3856 = vmatpush1.xpose.msra.mxu0 0.0
    %3857 = vmatprep.subr.mxu0 0.0
    %3858 = vmatpush1.xpose.msra.mxu0 0.0
    %3859 = vmatprep.subr.mxu0 0.0
    %3860 = vmatpush1.xpose.msra.mxu0 0.0
    %3861 = vmatprep.subr.mxu0 0.0
    %3862 = vmatpush1.xpose.msra.mxu0 0.0
    %3863 = vmatprep.subr.mxu0 0.0
    %3864 = vmatpush1.xpose.msra.mxu0 0.0
    %3865 = vmatprep.subr.mxu0 0.0
    %3866 = vmatpush1.xpose.msra.mxu0 0.0
    %3867 = vmatprep.subr.mxu0 0.0
    %3868 = vmatpush1.xpose.msra.mxu0 0.0
    %3869 = vmatprep.subr.mxu0 0.0
    %3870 = vmatpush1.xpose.msra.mxu0 0.0
    %3871 = vmatprep.subr.mxu0 0.0
    %3872 = vmatpush1.xpose.msra.mxu0 0.0
    %3873 = vmatprep.subr.mxu0 0.0
    %3874 = vmatpush1.xpose.msra.mxu0 0.0
    %3875 = vmatprep.subr.mxu0 0.0
    %3876 = vmatpush1.xpose.msra.mxu0 0.0
    %3877 = vmatprep.subr.mxu0 0.0
    %3878 = vmatpush1.xpose.msra.mxu0 0.0
    %3879 = vmatprep.subr.mxu0 0.0
    %3880 = vmatpush1.xpose.msra.mxu0 0.0
    %3881 = vmatprep.subr.mxu0 0.0
    %3882 = vmatpush1.xpose.msra.mxu0 0.0
    %3883 = vmatprep.subr.mxu0 0.0
    %3884 = vmatpush1.xpose.msra.mxu0 0.0
    %3885 = vmatprep.subr.mxu0 0.0
    %3886 = vmatpush1.xpose.msra.mxu0 0.0
    %3887 = vmatprep.subr.mxu0 0.0
    %3888 = vmatpush1.xpose.msra.mxu0 0.0
    %3889 = vmatprep.subr.mxu0 0.0
    %3890 = vmatpush1.xpose.msra.mxu0 0.0
    %3891 = vmatprep.mubr.f32.mxu0 0.0
    %3892 = vmatmul.mubr.f32.gmra.mrb[0].mxu0 %v3823
    %v3893 = vpop.f32.mrb[0].mxu0
    %v3894 = vadd.f32 0.0, %v3893
    %v3895 = vpop.f32.mrb[0].mxu0
    %3896 = vdwg.mxu0
    %v3897 = vmul.f32 %v3894, 0.25
    %v3898 = vadd.f32 %v3897, %v2584
    %v3899 = vsel %vm243, %v3898, -inf
    %3900 = vmax.xlane.f32.xlu0 %v3899
    %v3901 = vpop.xlane.xlu0 %3900
    %v3902 = vsub.f32 %v3898, %v3901
    %v3903 = vmul.f32 %v3902, 1.442695
    %v3904 = vpow.pop %v3903
    %v3905 = vsel %vm243, %v3904, 0.0
    %3906 = vadd.xlane.f32.xlu0 %v3905
    %v3907 = vpop.xlane.xlu0 %3906
    %v3908 = vrcp.pop %v3907
    %v3909 = vmul.f32 %v3904, %v3908
    %3910 = vrot.lane.b32.xlu0 %v3645, 48
    %v3911 = vpop.permute.xlu0 %3910
    %v3914 = vsel %vm243, %v3909, 0
    %3916 = vmatprep.subr.mxu0 0.0
    %3917 = vmatpush1.msra.mxu0 %v3911
    %3918 = vmatprep.subr.mxu0 0.0
    %3919 = vmatpush1.msra.mxu0 0.0
    %3920 = vmatprep.subr.mxu0 0.0
    %3921 = vmatpush1.msra.mxu0 0.0
    %3922 = vmatprep.subr.mxu0 0.0
    %3923 = vmatpush1.msra.mxu0 0.0
    %3924 = vmatprep.subr.mxu0 0.0
    %3925 = vmatpush1.msra.mxu0 0.0
    %3926 = vmatprep.subr.mxu0 0.0
    %3927 = vmatpush1.msra.mxu0 0.0
    %3928 = vmatprep.subr.mxu0 0.0
    %3929 = vmatpush1.msra.mxu0 0.0
    %3930 = vmatprep.subr.mxu0 0.0
    %3931 = vmatpush1.msra.mxu0 0.0
    %3932 = vmatprep.subr.mxu0 0.0
    %3933 = vmatpush1.msra.mxu0 0.0
    %3934 = vmatprep.subr.mxu0 0.0
    %3935 = vmatpush1.msra.mxu0 0.0
    %3936 = vmatprep.subr.mxu0 0.0
    %3937 = vmatpush1.msra.mxu0 0.0
    %3938 = vmatprep.subr.mxu0 0.0
    %3939 = vmatpush1.msra.mxu0 0.0
    %3940 = vmatprep.subr.mxu0 0.0
    %3941 = vmatpush1.msra.mxu0 0.0
    %3942 = vmatprep.subr.mxu0 0.0
    %3943 = vmatpush1.msra.mxu0 0.0
    %3944 = vmatprep.subr.mxu0 0.0
    %3945 = vmatpush1.msra.mxu0 0.0
    %3946 = vmatprep.subr.mxu0 0.0
    %3947 = vmatpush1.msra.mxu0 0.0
    %3948 = vmatprep.subr.mxu0 0.0
    %3949 = vmatpush1.msra.mxu0 0.0
    %3950 = vmatprep.subr.mxu0 0.0
    %3951 = vmatpush1.msra.mxu0 0.0
    %3952 = vmatprep.subr.mxu0 0.0
    %3953 = vmatpush1.msra.mxu0 0.0
    %3954 = vmatprep.subr.mxu0 0.0
    %3955 = vmatpush1.msra.mxu0 0.0
    %3956 = vmatprep.subr.mxu0 0.0
    %3957 = vmatpush1.msra.mxu0 0.0
    %3958 = vmatprep.subr.mxu0 0.0
    %3959 = vmatpush1.msra.mxu0 0.0
    %3960 = vmatprep.subr.mxu0 0.0
    %3961 = vmatpush1.msra.mxu0 0.0
    %3962 = vmatprep.subr.mxu0 0.0
    %3963 = vmatpush1.msra.mxu0 0.0
    %3964 = vmatprep.subr.mxu0 0.0
    %3965 = vmatpush1.msra.mxu0 0.0
    %3966 = vmatprep.subr.mxu0 0.0
    %3967 = vmatpush1.msra.mxu0 0.0
    %3968 = vmatprep.subr.mxu0 0.0
    %3969 = vmatpush1.msra.mxu0 0.0
    %3970 = vmatprep.subr.mxu0 0.0
    %3971 = vmatpush1.msra.mxu0 0.0
    %3972 = vmatprep.subr.mxu0 0.0
    %3973 = vmatpush1.msra.mxu0 0.0
    %3974 = vmatprep.subr.mxu0 0.0
    %3975 = vmatpush1.msra.mxu0 0.0
    %3976 = vmatprep.subr.mxu0 0.0
    %3977 = vmatpush1.msra.mxu0 0.0
    %3978 = vmatprep.subr.mxu0 0.0
    %3979 = vmatpush1.msra.mxu0 0.0
    %3980 = vmatprep.mubr.f32.mxu0 0.0
    %3981 = vmatmul.mubr.f32.gmra.mrb[0].mxu0 %v3914
    %v3982 = vpop.f32.mrb[0].mxu0
    %v3983 = vadd.f32 0.0, %v3982
    %v3984 = vpop.f32.mrb[0].mxu0
    %3985 = vdwg.mxu0
    %3987 = vrot.lane.b32.xlu0 %v3983, 16
    %v3988 = vpop.permute.xlu0 %3987
    %v3990 = vsel %vm162, %v3816, %v3988
    %3992 = vrot.lane.b32.xlu0 %v3650, 96
    %v3993 = vpop.permute.xlu0 %3992
    %v3994 = vsel %vm162, %v3650, 0
    %v3996 = vsel %vm162, %v3993, 0
    %3998 = vmatprep.subr.mxu0 0.0
    %3999 = vmatpush1.xpose.msra.mxu0 %v3996
    %4000 = vmatprep.subr.mxu0 0.0
    %4001 = vmatpush1.xpose.msra.mxu0 0.0
    %4002 = vmatprep.subr.mxu0 0.0
    %4003 = vmatpush1.xpose.msra.mxu0 0.0
    %4004 = vmatprep.subr.mxu0 0.0
    %4005 = vmatpush1.xpose.msra.mxu0 0.0
    %4006 = vmatprep.subr.mxu0 0.0
    %4007 = vmatpush1.xpose.msra.mxu0 0.0
    %4008 = vmatprep.subr.mxu0 0.0
    %4009 = vmatpush1.xpose.msra.mxu0 0.0
    %4010 = vmatprep.subr.mxu0 0.0
    %4011 = vmatpush1.xpose.msra.mxu0 0.0
    %4012 = vmatprep.subr.mxu0 0.0
    %4013 = vmatpush1.xpose.msra.mxu0 0.0
    %4014 = vmatprep.subr.mxu0 0.0
    %4015 = vmatpush1.xpose.msra.mxu0 0.0
    %4016 = vmatprep.subr.mxu0 0.0
    %4017 = vmatpush1.xpose.msra.mxu0 0.0
    %4018 = vmatprep.subr.mxu0 0.0
    %4019 = vmatpush1.xpose.msra.mxu0 0.0
    %4020 = vmatprep.subr.mxu0 0.0
    %4021 = vmatpush1.xpose.msra.mxu0 0.0
    %4022 = vmatprep.subr.mxu0 0.0
    %4023 = vmatpush1.xpose.msra.mxu0 0.0
    %4024 = vmatprep.subr.mxu0 0.0
    %4025 = vmatpush1.xpose.msra.mxu0 0.0
    %4026 = vmatprep.subr.mxu0 0.0
    %4027 = vmatpush1.xpose.msra.mxu0 0.0
    %4028 = vmatprep.subr.mxu0 0.0
    %4029 = vmatpush1.xpose.msra.mxu0 0.0
    %4030 = vmatprep.subr.mxu0 0.0
    %4031 = vmatpush1.xpose.msra.mxu0 0.0
    %4032 = vmatprep.subr.mxu0 0.0
    %4033 = vmatpush1.xpose.msra.mxu0 0.0
    %4034 = vmatprep.subr.mxu0 0.0
    %4035 = vmatpush1.xpose.msra.mxu0 0.0
    %4036 = vmatprep.subr.mxu0 0.0
    %4037 = vmatpush1.xpose.msra.mxu0 0.0
    %4038 = vmatprep.subr.mxu0 0.0
    %4039 = vmatpush1.xpose.msra.mxu0 0.0
    %4040 = vmatprep.subr.mxu0 0.0
    %4041 = vmatpush1.xpose.msra.mxu0 0.0
    %4042 = vmatprep.subr.mxu0 0.0
    %4043 = vmatpush1.xpose.msra.mxu0 0.0
    %4044 = vmatprep.subr.mxu0 0.0
    %4045 = vmatpush1.xpose.msra.mxu0 0.0
    %4046 = vmatprep.subr.mxu0 0.0
    %4047 = vmatpush1.xpose.msra.mxu0 0.0
    %4048 = vmatprep.subr.mxu0 0.0
    %4049 = vmatpush1.xpose.msra.mxu0 0.0
    %4050 = vmatprep.subr.mxu0 0.0
    %4051 = vmatpush1.xpose.msra.mxu0 0.0
    %4052 = vmatprep.subr.mxu0 0.0
    %4053 = vmatpush1.xpose.msra.mxu0 0.0
    %4054 = vmatprep.subr.mxu0 0.0
    %4055 = vmatpush1.xpose.msra.mxu0 0.0
    %4056 = vmatprep.subr.mxu0 0.0
    %4057 = vmatpush1.xpose.msra.mxu0 0.0
    %4058 = vmatprep.subr.mxu0 0.0
    %4059 = vmatpush1.xpose.msra.mxu0 0.0
    %4060 = vmatprep.subr.mxu0 0.0
    %4061 = vmatpush1.xpose.msra.mxu0 0.0
    %4062 = vmatprep.mubr.f32.mxu0 0.0
    %4063 = vmatmul.mubr.f32.gmra.mrb[0].mxu0 %v3994
    %v4064 = vpop.f32.mrb[0].mxu0
    %v4065 = vadd.f32 0.0, %v4064
    %v4066 = vpop.f32.mrb[0].mxu0
    %4067 = vdwg.mxu0
    %v4068 = vmul.f32 %v4065, 0.25
    %v4069 = vadd.f32 %v4068, %v2926
    %v4070 = vsel %vm243, %v4069, -inf
    %4071 = vmax.xlane.f32.xlu0 %v4070
    %v4072 = vpop.xlane.xlu0 %4071
    %v4073 = vsub.f32 %v4069, %v4072
    %v4074 = vmul.f32 %v4073, 1.442695
    %v4075 = vpow.pop %v4074
    %v4076 = vsel %vm243, %v4075, 0.0
    %4077 = vadd.xlane.f32.xlu0 %v4076
    %v4078 = vpop.xlane.xlu0 %4077
    %v4079 = vrcp.pop %v4078
    %v4080 = vmul.f32 %v4075, %v4079
    %4081 = vrot.lane.b32.xlu0 %v3650, 64
    %v4082 = vpop.permute.xlu0 %4081
    %v4085 = vsel %vm243, %v4080, 0
    %4087 = vmatprep.subr.mxu0 0.0
    %4088 = vmatpush1.msra.mxu0 %v4082
    %4089 = vmatprep.subr.mxu0 0.0
    %4090 = vmatpush1.msra.mxu0 0.0
    %4091 = vmatprep.subr.mxu0 0.0
    %4092 = vmatpush1.msra.mxu0 0.0
    %4093 = vmatprep.subr.mxu0 0.0
    %4094 = vmatpush1.msra.mxu0 0.0
    %4095 = vmatprep.subr.mxu0 0.0
    %4096 = vmatpush1.msra.mxu0 0.0
    %4097 = vmatprep.subr.mxu0 0.0
    %4098 = vmatpush1.msra.mxu0 0.0
    %4099 = vmatprep.subr.mxu0 0.0
    %4100 = vmatpush1.msra.mxu0 0.0
    %4101 = vmatprep.subr.mxu0 0.0
    %4102 = vmatpush1.msra.mxu0 0.0
    %4103 = vmatprep.subr.mxu0 0.0
    %4104 = vmatpush1.msra.mxu0 0.0
    %4105 = vmatprep.subr.mxu0 0.0
    %4106 = vmatpush1.msra.mxu0 0.0
    %4107 = vmatprep.subr.mxu0 0.0
    %4108 = vmatpush1.msra.mxu0 0.0
    %4109 = vmatprep.subr.mxu0 0.0
    %4110 = vmatpush1.msra.mxu0 0.0
    %4111 = vmatprep.subr.mxu0 0.0
    %4112 = vmatpush1.msra.mxu0 0.0
    %4113 = vmatprep.subr.mxu0 0.0
    %4114 = vmatpush1.msra.mxu0 0.0
    %4115 = vmatprep.subr.mxu0 0.0
    %4116 = vmatpush1.msra.mxu0 0.0
    %4117 = vmatprep.subr.mxu0 0.0
    %4118 = vmatpush1.msra.mxu0 0.0
    %4119 = vmatprep.subr.mxu0 0.0
    %4120 = vmatpush1.msra.mxu0 0.0
    %4121 = vmatprep.subr.mxu0 0.0
    %4122 = vmatpush1.msra.mxu0 0.0
    %4123 = vmatprep.subr.mxu0 0.0
    %4124 = vmatpush1.msra.mxu0 0.0
    %4125 = vmatprep.subr.mxu0 0.0
    %4126 = vmatpush1.msra.mxu0 0.0
    %4127 = vmatprep.subr.mxu0 0.0
    %4128 = vmatpush1.msra.mxu0 0.0
    %4129 = vmatprep.subr.mxu0 0.0
    %4130 = vmatpush1.msra.mxu0 0.0
    %4131 = vmatprep.subr.mxu0 0.0
    %4132 = vmatpush1.msra.mxu0 0.0
    %4133 = vmatprep.subr.mxu0 0.0
    %4134 = vmatpush1.msra.mxu0 0.0
    %4135 = vmatprep.subr.mxu0 0.0
    %4136 = vmatpush1.msra.mxu0 0.0
    %4137 = vmatprep.subr.mxu0 0.0
    %4138 = vmatpush1.msra.mxu0 0.0
    %4139 = vmatprep.subr.mxu0 0.0
    %4140 = vmatpush1.msra.mxu0 0.0
    %4141 = vmatprep.subr.mxu0 0.0
    %4142 = vmatpush1.msra.mxu0 0.0
    %4143 = vmatprep.subr.mxu0 0.0
    %4144 = vmatpush1.msra.mxu0 0.0
    %4145 = vmatprep.subr.mxu0 0.0
    %4146 = vmatpush1.msra.mxu0 0.0
    %4147 = vmatprep.subr.mxu0 0.0
    %4148 = vmatpush1.msra.mxu0 0.0
    %4149 = vmatprep.subr.mxu0 0.0
    %4150 = vmatpush1.msra.mxu0 0.0
    %4151 = vmatprep.mubr.f32.mxu0 0.0
    %4152 = vmatmul.mubr.f32.gmra.mrb[0].mxu0 %v4085
    %v4153 = vpop.f32.mrb[0].mxu0
    %v4154 = vadd.f32 0.0, %v4153
    %v4155 = vpop.f32.mrb[0].mxu0
    %4156 = vdwg.mxu0
    %4157 = vrot.lane.b32.xlu0 %v3650, 112
    %v4158 = vpop.permute.xlu0 %4157
    %4159 = vrot.lane.b32.xlu0 %v3650, 80
    %v4160 = vpop.permute.xlu0 %4159
    %v4161 = vsel %vm162, %v4158, 0
    %v4163 = vsel %vm162, %v4160, 0
    %4165 = vmatprep.subr.mxu0 0.0
    %4166 = vmatpush1.xpose.msra.mxu0 %v4163
    %4167 = vmatprep.subr.mxu0 0.0
    %4168 = vmatpush1.xpose.msra.mxu0 0.0
    %4169 = vmatprep.subr.mxu0 0.0
    %4170 = vmatpush1.xpose.msra.mxu0 0.0
    %4171 = vmatprep.subr.mxu0 0.0
    %4172 = vmatpush1.xpose.msra.mxu0 0.0
    %4173 = vmatprep.subr.mxu0 0.0
    %4174 = vmatpush1.xpose.msra.mxu0 0.0
    %4175 = vmatprep.subr.mxu0 0.0
    %4176 = vmatpush1.xpose.msra.mxu0 0.0
    %4177 = vmatprep.subr.mxu0 0.0
    %4178 = vmatpush1.xpose.msra.mxu0 0.0
    %4179 = vmatprep.subr.mxu0 0.0
    %4180 = vmatpush1.xpose.msra.mxu0 0.0
    %4181 = vmatprep.subr.mxu0 0.0
    %4182 = vmatpush1.xpose.msra.mxu0 0.0
    %4183 = vmatprep.subr.mxu0 0.0
    %4184 = vmatpush1.xpose.msra.mxu0 0.0
    %4185 = vmatprep.subr.mxu0 0.0
    %4186 = vmatpush1.xpose.msra.mxu0 0.0
    %4187 = vmatprep.subr.mxu0 0.0
    %4188 = vmatpush1.xpose.msra.mxu0 0.0
    %4189 = vmatprep.subr.mxu0 0.0
    %4190 = vmatpush1.xpose.msra.mxu0 0.0
    %4191 = vmatprep.subr.mxu0 0.0
    %4192 = vmatpush1.xpose.msra.mxu0 0.0
    %4193 = vmatprep.subr.mxu0 0.0
    %4194 = vmatpush1.xpose.msra.mxu0 0.0
    %4195 = vmatprep.subr.mxu0 0.0
    %4196 = vmatpush1.xpose.msra.mxu0 0.0
    %4197 = vmatprep.subr.mxu0 0.0
    %4198 = vmatpush1.xpose.msra.mxu0 0.0
    %4199 = vmatprep.subr.mxu0 0.0
    %4200 = vmatpush1.xpose.msra.mxu0 0.0
    %4201 = vmatprep.subr.mxu0 0.0
    %4202 = vmatpush1.xpose.msra.mxu0 0.0
    %4203 = vmatprep.subr.mxu0 0.0
    %4204 = vmatpush1.xpose.msra.mxu0 0.0
    %4205 = vmatprep.subr.mxu0 0.0
    %4206 = vmatpush1.xpose.msra.mxu0 0.0
    %4207 = vmatprep.subr.mxu0 0.0
    %4208 = vmatpush1.xpose.msra.mxu0 0.0
    %4209 = vmatprep.subr.mxu0 0.0
    %4210 = vmatpush1.xpose.msra.mxu0 0.0
    %4211 = vmatprep.subr.mxu0 0.0
    %4212 = vmatpush1.xpose.msra.mxu0 0.0
    %4213 = vmatprep.subr.mxu0 0.0
    %4214 = vmatpush1.xpose.msra.mxu0 0.0
    %4215 = vmatprep.subr.mxu0 0.0
    %4216 = vmatpush1.xpose.msra.mxu0 0.0
    %4217 = vmatprep.subr.mxu0 0.0
    %4218 = vmatpush1.xpose.msra.mxu0 0.0
    %4219 = vmatprep.subr.mxu0 0.0
    %4220 = vmatpush1.xpose.msra.mxu0 0.0
    %4221 = vmatprep.subr.mxu0 0.0
    %4222 = vmatpush1.xpose.msra.mxu0 0.0
    %4223 = vmatprep.subr.mxu0 0.0
    %4224 = vmatpush1.xpose.msra.mxu0 0.0
    %4225 = vmatprep.subr.mxu0 0.0
    %4226 = vmatpush1.xpose.msra.mxu0 0.0
    %4227 = vmatprep.subr.mxu0 0.0
    %4228 = vmatpush1.xpose.msra.mxu0 0.0
    %4229 = vmatprep.mubr.f32.mxu0 0.0
    %4230 = vmatmul.mubr.f32.gmra.mrb[0].mxu0 %v4161
    %v4231 = vpop.f32.mrb[0].mxu0
    %v4232 = vadd.f32 0.0, %v4231
    %v4233 = vpop.f32.mrb[0].mxu0
    %4234 = vdwg.mxu0
    %v4235 = vmul.f32 %v4232, 0.25
    %v4236 = vadd.f32 %v4235, %v2926
    %v4237 = vsel %vm243, %v4236, -inf
    %4238 = vmax.xlane.f32.xlu0 %v4237
    %v4239 = vpop.xlane.xlu0 %4238
    %v4240 = vsub.f32 %v4236, %v4239
    %v4241 = vmul.f32 %v4240, 1.442695
    %v4242 = vpow.pop %v4241
    %v4243 = vsel %vm243, %v4242, 0.0
    %4244 = vadd.xlane.f32.xlu0 %v4243
    %v4245 = vpop.xlane.xlu0 %4244
    %v4246 = vrcp.pop %v4245
    %v4247 = vmul.f32 %v4242, %v4246
    %4248 = vrot.lane.b32.xlu0 %v3650, 48
    %v4249 = vpop.permute.xlu0 %4248
    %v4252 = vsel %vm243, %v4247, 0
    %4254 = vmatprep.subr.mxu0 0.0
    %4255 = vmatpush1.msra.mxu0 %v4249
    %4256 = vmatprep.subr.mxu0 0.0
    %4257 = vmatpush1.msra.mxu0 0.0
    %4258 = vmatprep.subr.mxu0 0.0
    %4259 = vmatpush1.msra.mxu0 0.0
    %4260 = vmatprep.subr.mxu0 0.0
    %4261 = vmatpush1.msra.mxu0 0.0
    %4262 = vmatprep.subr.mxu0 0.0
    %4263 = vmatpush1.msra.mxu0 0.0
    %4264 = vmatprep.subr.mxu0 0.0
    %4265 = vmatpush1.msra.mxu0 0.0
    %4266 = vmatprep.subr.mxu0 0.0
    %4267 = vmatpush1.msra.mxu0 0.0
    %4268 = vmatprep.subr.mxu0 0.0
    %4269 = vmatpush1.msra.mxu0 0.0
    %4270 = vmatprep.subr.mxu0 0.0
    %4271 = vmatpush1.msra.mxu0 0.0
    %4272 = vmatprep.subr.mxu0 0.0
    %4273 = vmatpush1.msra.mxu0 0.0
    %4274 = vmatprep.subr.mxu0 0.0
    %4275 = vmatpush1.msra.mxu0 0.0
    %4276 = vmatprep.subr.mxu0 0.0
    %4277 = vmatpush1.msra.mxu0 0.0
    %4278 = vmatprep.subr.mxu0 0.0
    %4279 = vmatpush1.msra.mxu0 0.0
    %4280 = vmatprep.subr.mxu0 0.0
    %4281 = vmatpush1.msra.mxu0 0.0
    %4282 = vmatprep.subr.mxu0 0.0
    %4283 = vmatpush1.msra.mxu0 0.0
    %4284 = vmatprep.subr.mxu0 0.0
    %4285 = vmatpush1.msra.mxu0 0.0
    %4286 = vmatprep.subr.mxu0 0.0
    %4287 = vmatpush1.msra.mxu0 0.0
    %4288 = vmatprep.subr.mxu0 0.0
    %4289 = vmatpush1.msra.mxu0 0.0
    %4290 = vmatprep.subr.mxu0 0.0
    %4291 = vmatpush1.msra.mxu0 0.0
    %4292 = vmatprep.subr.mxu0 0.0
    %4293 = vmatpush1.msra.mxu0 0.0
    %4294 = vmatprep.subr.mxu0 0.0
    %4295 = vmatpush1.msra.mxu0 0.0
    %4296 = vmatprep.subr.mxu0 0.0
    %4297 = vmatpush1.msra.mxu0 0.0
    %4298 = vmatprep.subr.mxu0 0.0
    %4299 = vmatpush1.msra.mxu0 0.0
    %4300 = vmatprep.subr.mxu0 0.0
    %4301 = vmatpush1.msra.mxu0 0.0
    %4302 = vmatprep.subr.mxu0 0.0
    %4303 = vmatpush1.msra.mxu0 0.0
    %4304 = vmatprep.subr.mxu0 0.0
    %4305 = vmatpush1.msra.mxu0 0.0
    %4306 = vmatprep.subr.mxu0 0.0
    %4307 = vmatpush1.msra.mxu0 0.0
    %4308 = vmatprep.subr.mxu0 0.0
    %4309 = vmatpush1.msra.mxu0 0.0
    %4310 = vmatprep.subr.mxu0 0.0
    %4311 = vmatpush1.msra.mxu0 0.0
    %4312 = vmatprep.subr.mxu0 0.0
    %4313 = vmatpush1.msra.mxu0 0.0
    %4314 = vmatprep.subr.mxu0 0.0
    %4315 = vmatpush1.msra.mxu0 0.0
    %4316 = vmatprep.subr.mxu0 0.0
    %4317 = vmatpush1.msra.mxu0 0.0
    %4318 = vmatprep.mubr.f32.mxu0 0.0
    %4319 = vmatmul.mubr.f32.gmra.mrb[0].mxu0 %v4252
    %v4320 = vpop.f32.mrb[0].mxu0
    %v4321 = vadd.f32 0.0, %v4320
    %v4322 = vpop.f32.mrb[0].mxu0
    %4323 = vdwg.mxu0
    %4325 = vrot.lane.b32.xlu0 %v4321, 16
    %v4326 = vpop.permute.xlu0 %4325
    %v4328 = vsel %vm162, %v4154, %v4326
    %v4329 = vld [vmem:[%s3 + $0x148] sm:$0xff]
    %v4330 = vld [vmem:[%s3 + $0x150] sm:$0xff]
    %v4331 = vld [vmem:[%s3 + $0x158] sm:$0xff]
    %v4332 = vld [vmem:[%s3 + $0x160] sm:$0xff]
    %v4333 = vld [vmem:[%s3 + $0x1a8] sm:$0x1]
    %v4334 = vlaneseq
    %v4335 = vshrl.u32 %v4334, 7
    %v4336 = vsub.s32 0, %v4335
    %v4337 = vrot.slane %v4333, %v4336
    %v4339 = vsel %vm29, %v3990, 0
    %v4342 = vsel %vm29, %v4328, 0
    %4344 = vmatprep.subr.mxu0 0.0
    %4345 = vmatpush1.msra.mxu0 %v4329
    %4346 = vmatprep.subr.mxu0 0.0
    %4347 = vmatpush1.msra.mxu0 %v4330
    %4348 = vmatprep.subr.mxu0 0.0
    %4349 = vmatpush1.msra.mxu0 %v4331
    %4350 = vmatprep.subr.mxu0 0.0
    %4351 = vmatpush1.msra.mxu0 %v4332
    %4352 = vmatprep.subr.mxu0 0.0
    %4353 = vmatpush1.msra.mxu0 0.0
    %4354 = vmatprep.subr.mxu0 0.0
    %4355 = vmatpush1.msra.mxu0 0.0
    %4356 = vmatprep.subr.mxu0 0.0
    %4357 = vmatpush1.msra.mxu0 0.0
    %4358 = vmatprep.subr.mxu0 0.0
    %4359 = vmatpush1.msra.mxu0 0.0
    %4360 = vmatprep.subr.mxu0 0.0
    %4361 = vmatpush1.msra.mxu0 0.0
    %4362 = vmatprep.subr.mxu0 0.0
    %4363 = vmatpush1.msra.mxu0 0.0
    %4364 = vmatprep.subr.mxu0 0.0
    %4365 = vmatpush1.msra.mxu0 0.0
    %4366 = vmatprep.subr.mxu0 0.0
    %4367 = vmatpush1.msra.mxu0 0.0
    %4368 = vmatprep.subr.mxu0 0.0
    %4369 = vmatpush1.msra.mxu0 0.0
    %4370 = vmatprep.subr.mxu0 0.0
    %4371 = vmatpush1.msra.mxu0 0.0
    %4372 = vmatprep.subr.mxu0 0.0
    %4373 = vmatpush1.msra.mxu0 0.0
    %4374 = vmatprep.subr.mxu0 0.0
    %4375 = vmatpush1.msra.mxu0 0.0
    %4376 = vmatprep.subr.mxu0 0.0
    %4377 = vmatpush1.msra.mxu0 0.0
    %4378 = vmatprep.subr.mxu0 0.0
    %4379 = vmatpush1.msra.mxu0 0.0
    %4380 = vmatprep.subr.mxu0 0.0
    %4381 = vmatpush1.msra.mxu0 0.0
    %4382 = vmatprep.subr.mxu0 0.0
    %4383 = vmatpush1.msra.mxu0 0.0
    %4384 = vmatprep.subr.mxu0 0.0
    %4385 = vmatpush1.msra.mxu0 0.0
    %4386 = vmatprep.subr.mxu0 0.0
    %4387 = vmatpush1.msra.mxu0 0.0
    %4388 = vmatprep.subr.mxu0 0.0
    %4389 = vmatpush1.msra.mxu0 0.0
    %4390 = vmatprep.subr.mxu0 0.0
    %4391 = vmatpush1.msra.mxu0 0.0
    %4392 = vmatprep.subr.mxu0 0.0
    %4393 = vmatpush1.msra.mxu0 0.0
    %4394 = vmatprep.subr.mxu0 0.0
    %4395 = vmatpush1.msra.mxu0 0.0
    %4396 = vmatprep.subr.mxu0 0.0
    %4397 = vmatpush1.msra.mxu0 0.0
    %4398 = vmatprep.subr.mxu0 0.0
    %4399 = vmatpush1.msra.mxu0 0.0
    %4400 = vmatprep.subr.mxu0 0.0
    %4401 = vmatpush1.msra.mxu0 0.0
    %4402 = vmatprep.subr.mxu0 0.0
    %4403 = vmatpush1.msra.mxu0 0.0
    %4404 = vmatprep.subr.mxu0 0.0
    %4405 = vmatpush1.msra.mxu0 0.0
    %4406 = vmatprep.subr.mxu0 0.0
    %4407 = vmatpush1.msra.mxu0 0.0
    %4408 = vmatprep.mubr.f32.mxu0 0.0
    %4409 = vmatmul.mubr.f32.gmra.mrb[0].mxu0 %v4339
    %v4410 = vpop.f32.mrb[0].mxu0
    %v4411 = vadd.f32 %v4337, %v4410
    %v4412 = vpop.f32.mrb[0].mxu0
    %4413 = vmatprep.mubr.f32.mxu0 0.0
    %4414 = vmatmul.mubr.f32.gmra.mrb[0].mxu0 %v4342
    %v4415 = vpop.f32.mrb[0].mxu0
    %v4416 = vadd.f32 %v4337, %v4415
    %v4417 = vpop.f32.mrb[0].mxu0
    %4418 = vdwg.mxu0
    %v4419 = vadd.f32 %v4411, %v3561
    %v4420 = vadd.f32 %v4416, %v3562
    %v4421 = vld [vmem:[%s3 + $0x1a9] sm:$0x1]
    %v4422 = vld [vmem:[%s3 + $0x1aa] sm:$0x1]
    %v4423 = vsel %vm29, %v4419, 0.0
    %4424 = vadd.xlane.f32.xlu0 %v4423
    %v4425 = vpop.xlane.xlu0 %4424
    %v4426 = vsel %vm29, %v4420, 0.0
    %4427 = vadd.xlane.f32.xlu0 %v4426
    %v4428 = vpop.xlane.xlu0 %4427
    %v4429 = vmul.f32 %v4425, %v36
    %v4430 = vmul.f32 %v4428, %v36
    %v4431 = vsub.f32 %v4419, %v4429
    %v4432 = vsub.f32 %v4420, %v4430
    %v4433 = vmul.f32 %v4431, %v4431
    %v4434 = vmul.f32 %v4432, %v4432
    %v4435 = vsel %vm29, %v4433, 0.0
    %4436 = vadd.xlane.f32.xlu0 %v4435
    %v4437 = vpop.xlane.xlu0 %4436
    %v4438 = vsel %vm29, %v4434, 0.0
    %4439 = vadd.xlane.f32.xlu0 %v4438
    %v4440 = vpop.xlane.xlu0 %4439
    %v4441 = vmul.f32 %v4437, %v36
    %v4442 = vmul.f32 %v4440, %v36
    %v4443 = vadd.f32 %v4441, 1e-12
    %v4444 = vadd.f32 %v4442, 1e-12
    %v4445 = vrsqrt.pop %v4443
    %v4446 = vrsqrt.pop %v4444
    %v4447 = vmul.f32 %v4431, %v4445
    %v4448 = vmul.f32 %v4432, %v4446
    %v4449 = vlaneseq
    %v4450 = vshrl.u32 %v4449, 7
    %v4451 = vsub.s32 0, %v4450
    %v4452 = vrot.slane %v4421, %v4451
    %v4453 = vmul.f32 %v4447, %v4452
    %v4454 = vmul.f32 %v4448, %v4452
    %v4455 = vlaneseq
    %v4456 = vshrl.u32 %v4455, 7
    %v4457 = vsub.s32 0, %v4456
    %v4458 = vrot.slane %v4422, %v4457
    %v4459 = vadd.f32 %v4453, %v4458
    %v4460 = vadd.f32 %v4454, %v4458
    %v4461 = vld [vmem:[%s4 + $0x78] sm:$0xff]
    %v4462 = vld [vmem:[%s4 + $0x80] sm:$0xff]
    %v4463 = vld [vmem:[%s4 + $0x88] sm:$0xff]
    %v4464 = vld [vmem:[%s4 + $0x90] sm:$0xff]
    %v4465 = vld [vmem:[%s4 + $0x98] sm:$0x1]
    %v4466 = vlaneseq
    %v4467 = vshrl.u32 %v4466, 7
    %v4468 = vsub.s32 0, %v4467
    %v4469 = vrot.slane %v4465, %v4468
    %v4471 = vsel %vm29, %v4459, 0
    %v4474 = vsel %vm29, %v4460, 0
    %4476 = vmatprep.subr.mxu0 0.0
    %4477 = vmatpush1.msra.mxu0 %v4461
    %4478 = vmatprep.subr.mxu0 0.0
    %4479 = vmatpush1.msra.mxu0 %v4462
    %4480 = vmatprep.subr.mxu0 0.0
    %4481 = vmatpush1.msra.mxu0 %v4463
    %4482 = vmatprep.subr.mxu0 0.0
    %4483 = vmatpush1.msra.mxu0 %v4464
    %4484 = vmatprep.subr.mxu0 0.0
    %4485 = vmatpush1.msra.mxu0 0.0
    %4486 = vmatprep.subr.mxu0 0.0
    %4487 = vmatpush1.msra.mxu0 0.0
    %4488 = vmatprep.subr.mxu0 0.0
    %4489 = vmatpush1.msra.mxu0 0.0
    %4490 = vmatprep.subr.mxu0 0.0
    %4491 = vmatpush1.msra.mxu0 0.0
    %4492 = vmatprep.subr.mxu0 0.0
    %4493 = vmatpush1.msra.mxu0 0.0
    %4494 = vmatprep.subr.mxu0 0.0
    %4495 = vmatpush1.msra.mxu0 0.0
    %4496 = vmatprep.subr.mxu0 0.0
    %4497 = vmatpush1.msra.mxu0 0.0
    %4498 = vmatprep.subr.mxu0 0.0
    %4499 = vmatpush1.msra.mxu0 0.0
    %4500 = vmatprep.subr.mxu0 0.0
    %4501 = vmatpush1.msra.mxu0 0.0
    %4502 = vmatprep.subr.mxu0 0.0
    %4503 = vmatpush1.msra.mxu0 0.0
    %4504 = vmatprep.subr.mxu0 0.0
    %4505 = vmatpush1.msra.mxu0 0.0
    %4506 = vmatprep.subr.mxu0 0.0
    %4507 = vmatpush1.msra.mxu0 0.0
    %4508 = vmatprep.subr.mxu0 0.0
    %4509 = vmatpush1.msra.mxu0 0.0
    %4510 = vmatprep.subr.mxu0 0.0
    %4511 = vmatpush1.msra.mxu0 0.0
    %4512 = vmatprep.subr.mxu0 0.0
    %4513 = vmatpush1.msra.mxu0 0.0
    %4514 = vmatprep.subr.mxu0 0.0
    %4515 = vmatpush1.msra.mxu0 0.0
    %4516 = vmatprep.subr.mxu0 0.0
    %4517 = vmatpush1.msra.mxu0 0.0
    %4518 = vmatprep.subr.mxu0 0.0
    %4519 = vmatpush1.msra.mxu0 0.0
    %4520 = vmatprep.subr.mxu0 0.0
    %4521 = vmatpush1.msra.mxu0 0.0
    %4522 = vmatprep.subr.mxu0 0.0
    %4523 = vmatpush1.msra.mxu0 0.0
    %4524 = vmatprep.subr.mxu0 0.0
    %4525 = vmatpush1.msra.mxu0 0.0
    %4526 = vmatprep.subr.mxu0 0.0
    %4527 = vmatpush1.msra.mxu0 0.0
    %4528 = vmatprep.subr.mxu0 0.0
    %4529 = vmatpush1.msra.mxu0 0.0
    %4530 = vmatprep.subr.mxu0 0.0
    %4531 = vmatpush1.msra.mxu0 0.0
    %4532 = vmatprep.subr.mxu0 0.0
    %4533 = vmatpush1.msra.mxu0 0.0
    %4534 = vmatprep.subr.mxu0 0.0
    %4535 = vmatpush1.msra.mxu0 0.0
    %4536 = vmatprep.subr.mxu0 0.0
    %4537 = vmatpush1.msra.mxu0 0.0
    %4538 = vmatprep.subr.mxu0 0.0
    %4539 = vmatpush1.msra.mxu0 0.0
    %4540 = vmatprep.mubr.f32.mxu0 0.0
    %4541 = vmatmul.mubr.f32.gmra.mrb[0].mxu0 %v4471
    %v4542 = vpop.f32.mrb[0].mxu0
    %v4543 = vadd.f32 %v4469, %v4542
    %v4544 = vpop.f32.mrb[0].mxu0
    %4545 = vmatprep.mubr.f32.mxu0 0.0
    %4546 = vmatmul.mubr.f32.gmra.mrb[0].mxu0 %v4474
    %v4547 = vpop.f32.mrb[0].mxu0
    %v4548 = vadd.f32 %v4469, %v4547
    %v4549 = vpop.f32.mrb[0].mxu0
    %4550 = vdwg.mxu0
    %v4551 = vmul.f32 %v4543, %v4543
    %v4552 = vmul.f32 %v4548, %v4548
    %v4553 = vmul.f32 %v4543, %v4551
    %v4554 = vmul.f32 %v4548, %v4552
    %v4555 = vmul.f32 %v4553, 0.044715
    %v4556 = vmul.f32 %v4554, 0.044715
    %v4557 = vadd.f32 %v4543, %v4555
    %v4558 = vadd.f32 %v4548, %v4556
    %v4559 = vmul.f32 %v4557, 0.7978846
    %v4560 = vmul.f32 %v4558, 0.7978846
    %v4561 = vtanh.pop %v4559
    %v4562 = vtanh.pop %v4560
    %v4563 = vadd.f32 %v4561, 1.0
    %v4564 = vadd.f32 %v4562, 1.0
    %v4565 = vmul.f32 %v4563, 0.5
    %v4566 = vmul.f32 %v4564, 0.5
    %v4567 = vmul.f32 %v4543, %v4565
    %v4568 = vmul.f32 %v4548, %v4566
    %v4569 = vld [vmem:[%s3 + $0x168] sm:$0xff]
    %v4570 = vld [vmem:[%s3 + $0x170] sm:$0xff]
    %v4571 = vld [vmem:[%s3 + $0x178] sm:$0xff]
    %v4572 = vld [vmem:[%s3 + $0x180] sm:$0xff]
    %v4573 = vld [vmem:[%s3 + $0x188] sm:$0xff]
    %v4574 = vld [vmem:[%s3 + $0x190] sm:$0xff]
    %v4575 = vld [vmem:[%s3 + $0x198] sm:$0xff]
    %v4576 = vld [vmem:[%s3 + $0x1a0] sm:$0xff]
    %v4577 = vld [vmem:[%s3 + $0x1ab] sm:$0x1]
    %v4578 = vlaneseq
    %v4579 = vshrl.u32 %v4578, 7
    %v4580 = vsub.s32 0, %v4579
    %v4581 = vrot.slane %v4577, %v4580
    %v4583 = vsel %vm1098, %v4567, 0
    %v4586 = vsel %vm1098, %v4568, 0
    %4588 = vmatprep.subr.mxu0 0.0
    %4589 = vmatpush1.msra.mxu0 %v4569
    %4590 = vmatprep.subr.mxu0 0.0
    %4591 = vmatpush1.msra.mxu0 %v4570
    %4592 = vmatprep.subr.mxu0 0.0
    %4593 = vmatpush1.msra.mxu0 %v4571
    %4594 = vmatprep.subr.mxu0 0.0
    %4595 = vmatpush1.msra.mxu0 %v4572
    %4596 = vmatprep.subr.mxu0 0.0
    %4597 = vmatpush1.msra.mxu0 %v4573
    %4598 = vmatprep.subr.mxu0 0.0
    %4599 = vmatpush1.msra.mxu0 %v4574
    %4600 = vmatprep.subr.mxu0 0.0
    %4601 = vmatpush1.msra.mxu0 %v4575
    %4602 = vmatprep.subr.mxu0 0.0
    %4603 = vmatpush1.msra.mxu0 %v4576
    %4604 = vmatprep.subr.mxu0 0.0
    %4605 = vmatpush1.msra.mxu0 0.0
    %4606 = vmatprep.subr.mxu0 0.0
    %4607 = vmatpush1.msra.mxu0 0.0
    %4608 = vmatprep.subr.mxu0 0.0
    %4609 = vmatpush1.msra.mxu0 0.0
    %4610 = vmatprep.subr.mxu0 0.0
    %4611 = vmatpush1.msra.mxu0 0.0
    %4612 = vmatprep.subr.mxu0 0.0
    %4613 = vmatpush1.msra.mxu0 0.0
    %4614 = vmatprep.subr.mxu0 0.0
    %4615 = vmatpush1.msra.mxu0 0.0
    %4616 = vmatprep.subr.mxu0 0.0
    %4617 = vmatpush1.msra.mxu0 0.0
    %4618 = vmatprep.subr.mxu0 0.0
    %4619 = vmatpush1.msra.mxu0 0.0
    %4620 = vmatprep.subr.mxu0 0.0
    %4621 = vmatpush1.msra.mxu0 0.0
    %4622 = vmatprep.subr.mxu0 0.0
    %4623 = vmatpush1.msra.mxu0 0.0
    %4624 = vmatprep.subr.mxu0 0.0
    %4625 = vmatpush1.msra.mxu0 0.0
    %4626 = vmatprep.subr.mxu0 0.0
    %4627 = vmatpush1.msra.mxu0 0.0
    %4628 = vmatprep.subr.mxu0 0.0
    %4629 = vmatpush1.msra.mxu0 0.0
    %4630 = vmatprep.subr.mxu0 0.0
    %4631 = vmatpush1.msra.mxu0 0.0
    %4632 = vmatprep.subr.mxu0 0.0
    %4633 = vmatpush1.msra.mxu0 0.0
    %4634 = vmatprep.subr.mxu0 0.0
    %4635 = vmatpush1.msra.mxu0 0.0
    %4636 = vmatprep.subr.mxu0 0.0
    %4637 = vmatpush1.msra.mxu0 0.0
    %4638 = vmatprep.subr.mxu0 0.0
    %4639 = vmatpush1.msra.mxu0 0.0
    %4640 = vmatprep.subr.mxu0 0.0
    %4641 = vmatpush1.msra.mxu0 0.0
    %4642 = vmatprep.subr.mxu0 0.0
    %4643 = vmatpush1.msra.mxu0 0.0
    %4644 = vmatprep.subr.mxu0 0.0
    %4645 = vmatpush1.msra.mxu0 0.0
    %4646 = vmatprep.subr.mxu0 0.0
    %4647 = vmatpush1.msra.mxu0 0.0
    %4648 = vmatprep.subr.mxu0 0.0
    %4649 = vmatpush1.msra.mxu0 0.0
    %4650 = vmatprep.subr.mxu0 0.0
    %4651 = vmatpush1.msra.mxu0 0.0
    %4652 = vmatprep.mubr.f32.mxu0 0.0
    %4653 = vmatmul.mubr.f32.gmra.mrb[0].mxu0 %v4583
    %v4654 = vpop.f32.mrb[0].mxu0
    %v4655 = vadd.f32 %v4581, %v4654
    %v4656 = vpop.f32.mrb[0].mxu0
    %4657 = vmatprep.mubr.f32.mxu0 0.0
    %4658 = vmatmul.mubr.f32.gmra.mrb[0].mxu0 %v4586
    %v4659 = vpop.f32.mrb[0].mxu0
    %v4660 = vadd.f32 %v4581, %v4659
    %v4661 = vpop.f32.mrb[0].mxu0
    %4662 = vdwg.mxu0
    %v4663 = vadd.f32 %v4655, %v4459
    %v4664 = vadd.f32 %v4660, %v4460
    %v4665 = vld [vmem:[%s3 + $0x1ac] sm:$0x1]
    %v4666 = vld [vmem:[%s3 + $0x1ad] sm:$0x1]
    %v4667 = vsel %vm29, %v4663, 0.0
    %4668 = vadd.xlane.f32.xlu0 %v4667
    %v4669 = vpop.xlane.xlu0 %4668
    %v4670 = vsel %vm29, %v4664, 0.0
    %4671 = vadd.xlane.f32.xlu0 %v4670
    %v4672 = vpop.xlane.xlu0 %4671
    %v4673 = vmul.f32 %v4669, %v36
    %v4674 = vmul.f32 %v4672, %v36
    %v4675 = vsub.f32 %v4663, %v4673
    %v4676 = vsub.f32 %v4664, %v4674
    %v4677 = vmul.f32 %v4675, %v4675
    %v4678 = vmul.f32 %v4676, %v4676
    %v4679 = vsel %vm29, %v4677, 0.0
    %4680 = vadd.xlane.f32.xlu0 %v4679
    %v4681 = vpop.xlane.xlu0 %4680
    %v4682 = vsel %vm29, %v4678, 0.0
    %4683 = vadd.xlane.f32.xlu0 %v4682
    %v4684 = vpop.xlane.xlu0 %4683
    %v4685 = vmul.f32 %v4681, %v36
    %v4686 = vmul.f32 %v4684, %v36
    %v4687 = vadd.f32 %v4685, 1e-12
    %v4688 = vadd.f32 %v4686, 1e-12
    %v4689 = vrsqrt.pop %v4687
    %v4690 = vrsqrt.pop %v4688
    %v4691 = vmul.f32 %v4675, %v4689
    %v4692 = vmul.f32 %v4676, %v4690
    %v4693 = vlaneseq
    %v4694 = vshrl.u32 %v4693, 7
    %v4695 = vsub.s32 0, %v4694
    %v4696 = vrot.slane %v4665, %v4695
    %v4697 = vmul.f32 %v4691, %v4696
    %v4698 = vmul.f32 %v4692, %v4696
    %v4699 = vlaneseq
    %v4700 = vshrl.u32 %v4699, 7
    %v4701 = vsub.s32 0, %v4700
    %v4702 = vrot.slane %v4666, %v4701
    %v4703 = vadd.f32 %v4697, %v4702
    %v4704 = vadd.f32 %v4698, %v4702
    %v4706 = vrot.slane %v4704, 7
    %v4708 = vsel %vm2367, %v4703, %v4706
    %v4709 = vadd.f32 %v2369, %v4708
    %v4710 = vld [vmem:[%s5] sm:$0x3]
    %v4711 = vld [vmem:[%s5 + $0x2] sm:$0x1]
    %v4712 = vlaneseq
    %v4713 = vshrl.u32 %v4712, 7
    %v4714 = vsub.s32 0, %v4713
    %v4715 = vrot.slane %v4711, %v4714
    %v4717 = vsel %vm29, %v4709, 0
    %v4720 = vsel %vm29, %v4710, 0
    %4722 = vmatprep.subr.mxu0 0.0
    %4723 = vmatpush1.xpose.msra.mxu0 %v4720
    %4724 = vmatprep.subr.mxu0 0.0
    %4725 = vmatpush1.xpose.msra.mxu0 0.0
    %4726 = vmatprep.subr.mxu0 0.0
    %4727 = vmatpush1.xpose.msra.mxu0 0.0
    %4728 = vmatprep.subr.mxu0 0.0
    %4729 = vmatpush1.xpose.msra.mxu0 0.0
    %4730 = vmatprep.subr.mxu0 0.0
    %4731 = vmatpush1.xpose.msra.mxu0 0.0
    %4732 = vmatprep.subr.mxu0 0.0
    %4733 = vmatpush1.xpose.msra.mxu0 0.0
    %4734 = vmatprep.subr.mxu0 0.0
    %4735 = vmatpush1.xpose.msra.mxu0 0.0
    %4736 = vmatprep.subr.mxu0 0.0
    %4737 = vmatpush1.xpose.msra.mxu0 0.0
    %4738 = vmatprep.subr.mxu0 0.0
    %4739 = vmatpush1.xpose.msra.mxu0 0.0
    %4740 = vmatprep.subr.mxu0 0.0
    %4741 = vmatpush1.xpose.msra.mxu0 0.0
    %4742 = vmatprep.subr.mxu0 0.0
    %4743 = vmatpush1.xpose.msra.mxu0 0.0
    %4744 = vmatprep.subr.mxu0 0.0
    %4745 = vmatpush1.xpose.msra.mxu0 0.0
    %4746 = vmatprep.subr.mxu0 0.0
    %4747 = vmatpush1.xpose.msra.mxu0 0.0
    %4748 = vmatprep.subr.mxu0 0.0
    %4749 = vmatpush1.xpose.msra.mxu0 0.0
    %4750 = vmatprep.subr.mxu0 0.0
    %4751 = vmatpush1.xpose.msra.mxu0 0.0
    %4752 = vmatprep.subr.mxu0 0.0
    %4753 = vmatpush1.xpose.msra.mxu0 0.0
    %4754 = vmatprep.subr.mxu0 0.0
    %4755 = vmatpush1.xpose.msra.mxu0 0.0
    %4756 = vmatprep.subr.mxu0 0.0
    %4757 = vmatpush1.xpose.msra.mxu0 0.0
    %4758 = vmatprep.subr.mxu0 0.0
    %4759 = vmatpush1.xpose.msra.mxu0 0.0
    %4760 = vmatprep.subr.mxu0 0.0
    %4761 = vmatpush1.xpose.msra.mxu0 0.0
    %4762 = vmatprep.subr.mxu0 0.0
    %4763 = vmatpush1.xpose.msra.mxu0 0.0
    %4764 = vmatprep.subr.mxu0 0.0
    %4765 = vmatpush1.xpose.msra.mxu0 0.0
    %4766 = vmatprep.subr.mxu0 0.0
    %4767 = vmatpush1.xpose.msra.mxu0 0.0
    %4768 = vmatprep.subr.mxu0 0.0
    %4769 = vmatpush1.xpose.msra.mxu0 0.0
    %4770 = vmatprep.subr.mxu0 0.0
    %4771 = vmatpush1.xpose.msra.mxu0 0.0
    %4772 = vmatprep.subr.mxu0 0.0
    %4773 = vmatpush1.xpose.msra.mxu0 0.0
    %4774 = vmatprep.subr.mxu0 0.0
    %4775 = vmatpush1.xpose.msra.mxu0 0.0
    %4776 = vmatprep.subr.mxu0 0.0
    %4777 = vmatpush1.xpose.msra.mxu0 0.0
    %4778 = vmatprep.subr.mxu0 0.0
    %4779 = vmatpush1.xpose.msra.mxu0 0.0
    %4780 = vmatprep.subr.mxu0 0.0
    %4781 = vmatpush1.xpose.msra.mxu0 0.0
    %4782 = vmatprep.subr.mxu0 0.0
    %4783 = vmatpush1.xpose.msra.mxu0 0.0
    %4784 = vmatprep.subr.mxu0 0.0
    %4785 = vmatpush1.xpose.msra.mxu0 0.0
    %4786 = vmatprep.mubr.f32.mxu0 0.0
    %4787 = vmatmul.mubr.f32.gmra.mrb[0].mxu0 %v4717
    %v4788 = vpop.f32.mrb[0].mxu0
    %v4789 = vadd.f32 %v4715, %v4788
    %v4790 = vpop.f32.mrb[0].mxu0
    %4791 = vdwg.mxu0
    %vm4792 = vcmask 9216
    %4793 = vst.msk [vmem:[#allocation2] sm:$0x3] %vm4792, %v4789
    // Predicated region
    $region26: #{auto_biencoder_sum_forward.1} parent=1 // pred_check
      _
    $region27: #{auto_biencoder_sum_forward.1} parent=1 // pred_check_branch
      %4795 = sbr.rel (0) target = $region29
    $region28: #{auto_biencoder_sum_forward.1} parent=1 // pred_region
      %s4797 = ssub.s32 32, 32
      %4798 = vsyncadd [#allocation3], %s4797
      %s4800 = sshll.u32 [#allocation2], 4
      %s4801 = int_to_ptr.vmem [resolvable:$true] %s4800
      %4803 = dma.vmem_to_hbm [thread:$0]  %s4801, 32, %s6, [#allocation3]
    $region29: #{auto_biencoder_sum_forward.1} parent=1 // pred_fallthru
      _
    // Predicated region
    $region30: #{auto_biencoder_sum_forward.1} parent=1 // pred_check
      _
    $region31: #{auto_biencoder_sum_forward.1} parent=1 // pred_check_branch
      %4805 = sbr.rel (0) target = $region33
    $region32: #{auto_biencoder_sum_forward.1} parent=1 // pred_region
      %4806 = dma.done [#allocation3], 32
    $region33: #{auto_biencoder_sum_forward.1} parent=1 // pred_fallthru
      _
    %4807 = vsyncpa [#allocation3], 1

</llo_original>
